<compile_context>
chip_gen: v6e
topology: v6e:2x2x1
jax: 0.10.0
libtpu: 0.0.40
codegen_flags: <defaults>
</compile_context>

<pallas_src>
import jax
import jax.numpy as jnp
from jax.experimental import pallas as pl
from jax.experimental.pallas import tpu as pltpu  # noqa: F401 (TPU backend)

# ---- small synthetic BioGPT config (shapes mirror the module's __init__) ----
VOCAB = 100          # vocab_size
D = 32               # hidden_size
H = 4                # num_attention_heads
DH = D // H          # head dim
L = 2                # num_hidden_layers
FF = 64              # intermediate (ffn) size
MAXPOS = 64          # max_position_embeddings
POS_OFFSET = 2       # BioGptLearnedPositionalEmbedding offset
P = 8                # prefix_attn_bn
MID = 16             # prefix_mid_dim
EPS = 1e-5           # nn.LayerNorm default eps
NEG = -1e9           # additive mask value
SCALE = 1.0 / (DH ** 0.5)   # BioGptAttention query scaling (folded into Wq/bq)

B = 2
S = 8
T = P + S            # key length with the prefix prepended


def _layernorm(x, g, b):
    mu = jnp.mean(x, axis=-1, keepdims=True)
    var = jnp.mean(jnp.square(x - mu), axis=-1, keepdims=True)
    return (x - mu) * jax.lax.rsqrt(var + EPS) * g + b


# --------------------------------------------------------------------------
# Single fused kernel: all decoder layers + final LN + 'avg' pooler
# --------------------------------------------------------------------------
def _fused_kernel(
    x_ref, bias_ref, mask_ref, pkv_ref,
    lng_ref, lnb_ref, wqkv_ref, bqkv_ref, wo_ref, bo_ref,
    wf1_ref, bf1_ref, wf2_ref, bf2_ref, fg_ref, fb_ref,
    lh_ref, pooled_ref,
):
    x = x_ref[...]                               # [B*S, D] f32 residual stream
    bias = bias_ref[...]                         # [B, S, T] additive (0 / NEG)

    for l in range(L):                           # static unroll over layers
        lng = lng_ref[l]                         # [2, D]  (ln1_g, ln2_g)
        lnb = lnb_ref[l]                         # [2, D]  (ln1_b, ln2_b)

        # --- self attention (pre-norm), packed QKV matmul (scale folded) ---
        h = _layernorm(x, lng[0:1], lnb[0:1]).astype(jnp.bfloat16)
        qkv = (jnp.dot(h, wqkv_ref[l], preferred_element_type=jnp.float32)
               + bqkv_ref[l])                    # [B*S, 3D] f32

        # reshapes only split/merge leading (sublane) dims -> layout-preserving
        q3 = qkv[:, 0:D].reshape(B, S, D)        # [B, S, D] f32
        k3 = qkv[:, D:2 * D].reshape(B, S, D)
        v3 = qkv[:, 2 * D:3 * D].reshape(B, S, D)

        # prefix K/V prepended once per layer (tile-aligned sublane concat)
        pk = pkv_ref[2 * l]                      # [B, P, D] f32 (precomputed)
        pv = pkv_ref[2 * l + 1]
        q3b = q3.astype(jnp.bfloat16)
        kfb = jnp.concatenate([pk, k3], axis=1).astype(jnp.bfloat16)  # [B,T,D]
        vfb = jnp.concatenate([pv, v3], axis=1).astype(jnp.bfloat16)  # [B,T,D]

        attn = None
        for hh in range(H):                      # static unroll over heads
            sl = slice(hh * DH, (hh + 1) * DH)
            # batch-dim einsum; contraction on last dims => no explicit .T
            s = jnp.einsum('bsd,btd->bst', q3b[:, :, sl], kfb[:, :, sl],
                           preferred_element_type=jnp.float32) + bias  # [B,S,T]
            m = jnp.max(s, axis=-1, keepdims=True)
            probs = jnp.exp(s - m)
            probs = probs * pl.reciprocal(
                jnp.sum(probs, axis=-1, keepdims=True), approx=True)
            ctx = jnp.einsum('bst,btd->bsd', probs.astype(jnp.bfloat16),
                             vfb[:, :, sl],
                             preferred_element_type=jnp.float32)       # [B,S,DH]
            # fold this head straight into the output projection:
            #   concat_h(ctx_h) @ Wo == sum_h ctx_h @ Wo[h]   (no head concat)
            part = jnp.dot(ctx.reshape(B * S, DH).astype(jnp.bfloat16),
                           wo_ref[l, hh],
                           preferred_element_type=jnp.float32)         # [B*S,D]
            attn = part if attn is None else attn + part
        x = x + attn + bo_ref[l]

        # --- feed forward (pre-norm) ---
        h2 = _layernorm(x, lng[1:2], lnb[1:2]).astype(jnp.bfloat16)
        h2 = (jnp.dot(h2, wf1_ref[l], preferred_element_type=jnp.float32)
              + bf1_ref[l])
        # TODO(synk): BioGPT uses exact erf-GELU; tanh-approximate GELU is used
        # here (erf lowering in Mosaic is not guaranteed) -- numerics ~1e-3 off.
        h2 = jax.nn.gelu(h2, approximate=True)
        h2 = (jnp.dot(h2.astype(jnp.bfloat16), wf2_ref[l],
                      preferred_element_type=jnp.float32) + bf2_ref[l])
        x = x + h2

    # ---- final model LayerNorm (hidden_states[-1]) + 'avg' pooler ----
    y = _layernorm(x, fg_ref[...], fb_ref[...])          # [B*S, D] f32
    lh_ref[...] = y

    mk = mask_ref[...]                                   # [B*S, 1] float
    parts = []
    for b in range(B):                                   # static unroll
        yb = y[b * S:(b + 1) * S]
        mb = mk[b * S:(b + 1) * S]
        num = jnp.sum(yb * mb, axis=0, keepdims=True)    # [1, D]
        # guard against an all-padded row (would be NaN in the reference)
        den = jnp.maximum(jnp.sum(mb, axis=0, keepdims=True), 1.0)   # [1, 1]
        parts.append(num * pl.reciprocal(den, approx=True))
    pooled_ref[...] = jnp.concatenate(parts, axis=1)     # [1, B*D] single store


# --------------------------------------------------------------------------
# Full forward (glue around the single fused kernel)
# --------------------------------------------------------------------------
def biogpt_forward(params, input_ids, attn_masks):
    bsz, seq = input_ids.shape
    assert bsz == B and seq == S, "toy kernel is specialized to (B, S)"
    mask_f = attn_masks.astype(jnp.float32)

    # ---- embeddings (embed_scale = sqrt(D), learned positions, offset 2) ----
    h = params['embed_tokens'][input_ids] * jnp.sqrt(jnp.float32(D))
    positions = (jnp.cumsum(attn_masks, axis=1) * attn_masks) - 1 + POS_OFFSET
    # TODO(synk): if the reference shifts position ids by the prefix length P
    # (past_key_values_length), add P here; fairseq-style prev_key injection
    # at the attention level does not shift positions.
    h = h + params['embed_positions'][positions]
    x_flat = h.astype(jnp.float32).reshape(bsz * seq, D)

    # ---- additive attention bias [B, S, P+S]: prefix always visible,
    #      causal + key-padding for the real tokens ----
    causal = jnp.arange(seq)[:, None] >= jnp.arange(seq)[None, :]    # [S, S]
    key_ok = causal[None, :, :] & (attn_masks[:, None, :] == 1)      # [B, S, S]
    self_bias = jnp.where(key_ok, 0.0, NEG).astype(jnp.float32)
    prefix_bias = jnp.zeros((bsz, seq, P), jnp.float32)
    attn_bias = jnp.concatenate([prefix_bias, self_bias], axis=-1)   # [B, S, T]

    mask_col = mask_f.reshape(bsz * seq, 1)

    # input-independent prefix past-KV (precomputed at init), broadcast over
    # batch once on the XLA side (jit-cached, tiny).
    pkv_b = jnp.broadcast_to(
        params['prefix_kv'].reshape(2 * L, 1, P, D), (2 * L, bsz, P, D))

    p = params
    lh_flat, pooled_flat = pl.pallas_call(
        _fused_kernel,
        out_shape=(
            jax.ShapeDtypeStruct((bsz * seq, D), jnp.float32),
            jax.ShapeDtypeStruct((1, bsz * D), jnp.float32),
        ),
    )(x_flat, attn_bias, mask_col, pkv_b,
      p['ln_g'], p['ln_b'], p['wqkv'], p['bqkv'], p['wo'], p['bo'],
      p['wf1'], p['bf1'], p['wf2'], p['bf2'],
      p['final_ln_g'], p['final_ln_b'])

    last_hidden = lh_flat.reshape(bsz, seq, D)
    pooled = pooled_flat.reshape(bsz, D)
    return last_hidden, pooled


# --------------------------------------------------------------------------
# Deterministic parameter init (shapes from the module's __init__).
# One-time preprocessing: prefix past-KV folded, 1/sqrt(dh) folded into Wq/bq,
# matmul weights cast to bf16, Wo pre-split per head.
# --------------------------------------------------------------------------
def init_params(key):
    keys = jax.random.split(key, 32)
    it = iter(keys)

    def nrm(shape, scale=0.02):
        return (scale * jax.random.normal(next(it), shape)).astype(jnp.float32)

    embed_tokens = nrm((VOCAB, D))
    embed_positions = nrm((MAXPOS + POS_OFFSET, D))

    # ---- BioPrefix: fold the control_trans MLP now (input-independent) ----
    p_wte = nrm((P, D))
    p_w1 = nrm((D, MID))
    p_b1 = nrm((1, MID))
    p_w2 = nrm((MID, 2 * L * D))
    p_b2 = nrm((1, 2 * L * D))
    pkv = jnp.tanh(p_wte @ p_w1 + p_b1) @ p_w2 + p_b2          # [P, 2*L*D]
    # lane ordering of the MLP output is (layer*2, head, head_dim)
    prefix_kv = pkv.reshape(P, L, 2, D).transpose(1, 2, 0, 3)  # [L, 2, P, D]
    # (wte2/control_trans2 and wte_enc/control_trans_enc are computed but
    #  unused by BioPrefix.forward's returned result -> omitted.)

    wqkv = nrm((L, D, 3 * D))                   # packed q|k|v
    bqkv = nrm((L, 1, 3 * D))
    # fold 1/sqrt(head_dim) query scaling into the Q slice
    wqkv = wqkv.at[:, :, 0:D].multiply(SCALE)
    bqkv = bqkv.at[:, :, 0:D].multiply(SCALE)

    wo = nrm((L, D, D)).reshape(L, H, DH, D)    # pre-split per head

    params = {
        'embed_tokens': embed_tokens,
        'embed_positions': embed_positions,
        'prefix_kv': prefix_kv,                              # f32 [L,2,P,D]
        'final_ln_g': jnp.ones((1, D), jnp.float32),
        'final_ln_b': jnp.zeros((1, D), jnp.float32),
        # stacked per-layer params (leading axis = layer)
        'ln_g': jnp.ones((L, 2, D), jnp.float32),   # [:,0]=ln1_g, [:,1]=ln2_g
        'ln_b': jnp.zeros((L, 2, D), jnp.float32),
        'wqkv': wqkv.astype(jnp.bfloat16),
        'bqkv': bqkv,
        'wo': wo.astype(jnp.bfloat16),
        'bo': nrm((L, 1, D)),
        'wf1': nrm((L, D, FF)).astype(jnp.bfloat16),
        'bf1': nrm((L, 1, FF)),
        'wf2': nrm((L, FF, D)).astype(jnp.bfloat16),
        'bf2': nrm((L, 1, D)),
    }
    return params


if __name__ == "__main__":
    root = jax.random.PRNGKey(0)
    pkey, dkey = jax.random.split(root)
    params = init_params(pkey)

    input_ids = jax.random.randint(dkey, (B, S), 0, VOCAB, dtype=jnp.int32)
    # right padding (tokenizer.padding_side == 'right'): row 0 full, row 1 has 6 tokens
    attn_masks = jnp.array([[1, 1, 1, 1, 1, 1, 1, 1],
                            [1, 1, 1, 1, 1, 1, 0, 0]], dtype=jnp.int32)

    fwd = jax.jit(biogpt_forward)
    last_hidden, pooled = fwd(params, input_ids, attn_masks)
    jax.block_until_ready((last_hidden, pooled))
    assert last_hidden.shape == (B, S, D) and pooled.shape == (B, D)
    assert bool(jnp.all(jnp.isfinite(last_hidden))) and bool(jnp.all(jnp.isfinite(pooled)))
    print("KERNEL_OK")
</pallas_src>

<mosaic_0001>
module attributes {stable_mosaic.version = 11 : i64} {
  func.func @_fused_kernel(%arg0: memref<16x32xf32, #tpu.memory_space<vmem>>, %arg1: memref<2x8x16xf32, #tpu.memory_space<vmem>>, %arg2: memref<16x1xf32, #tpu.memory_space<vmem>>, %arg3: memref<4x2x8x32xf32, #tpu.memory_space<vmem>>, %arg4: memref<2x2x32xf32, #tpu.memory_space<vmem>>, %arg5: memref<2x2x32xf32, #tpu.memory_space<vmem>>, %arg6: memref<2x32x96xbf16, #tpu.memory_space<vmem>>, %arg7: memref<2x1x96xf32, #tpu.memory_space<vmem>>, %arg8: memref<2x4x8x32xbf16, #tpu.memory_space<vmem>>, %arg9: memref<2x1x32xf32, #tpu.memory_space<vmem>>, %arg10: memref<2x32x64xbf16, #tpu.memory_space<vmem>>, %arg11: memref<2x1x64xf32, #tpu.memory_space<vmem>>, %arg12: memref<2x64x32xbf16, #tpu.memory_space<vmem>>, %arg13: memref<2x1x32xf32, #tpu.memory_space<vmem>>, %arg14: memref<1x32xf32, #tpu.memory_space<vmem>>, %arg15: memref<1x32xf32, #tpu.memory_space<vmem>>, %arg16: memref<16x32xf32, #tpu.memory_space<vmem>>, %arg17: memref<1x64xf32, #tpu.memory_space<vmem>>) attributes {dimension_semantics = [], scalar_prefetch = 0 : i64, scratch_operands = 0 : i64, tpu.core_type = #tpu.core_type<tc>} {
    %c0 = arith.constant 0 : index
    %c0_0 = arith.constant 0 : index
    %0 = vector.load %arg0[%c0, %c0_0] : memref<16x32xf32, #tpu.memory_space<vmem>>, vector<16x32xf32>
    %c0_1 = arith.constant 0 : index
    %c0_2 = arith.constant 0 : index
    %c0_3 = arith.constant 0 : index
    %1 = vector.load %arg1[%c0_1, %c0_2, %c0_3] : memref<2x8x16xf32, #tpu.memory_space<vmem>>, vector<2x8x16xf32>
    %c0_4 = arith.constant 0 : index
    %c0_5 = arith.constant 0 : index
    %c0_6 = arith.constant 0 : index
    %2 = vector.load %arg4[%c0_4, %c0_5, %c0_6] : memref<2x2x32xf32, #tpu.memory_space<vmem>>, vector<1x2x32xf32>
    %3 = vector.shape_cast %2 : vector<1x2x32xf32> to vector<2x32xf32>
    %c0_7 = arith.constant 0 : index
    %c0_8 = arith.constant 0 : index
    %c0_9 = arith.constant 0 : index
    %4 = vector.load %arg5[%c0_7, %c0_8, %c0_9] : memref<2x2x32xf32, #tpu.memory_space<vmem>>, vector<1x2x32xf32>
    %5 = vector.shape_cast %4 : vector<1x2x32xf32> to vector<2x32xf32>
    %6 = vector.extract_strided_slice %3 {offsets = [0, 0], sizes = [1, 32], strides = [1, 1]} : vector<2x32xf32> to vector<1x32xf32>
    %7 = vector.extract_strided_slice %5 {offsets = [0, 0], sizes = [1, 32], strides = [1, 1]} : vector<2x32xf32> to vector<1x32xf32>
    %cst = arith.constant dense<0.000000e+00> : vector<16xf32>
    %8 = vector.multi_reduction <add>, %0, %cst [1] : vector<16x32xf32> to vector<16xf32>
    %9 = vector.shape_cast %8 : vector<16xf32> to vector<16x1xf32>
    %cst_10 = arith.constant 3.200000e+01 : f32
    %10 = vector.broadcast %cst_10 : f32 to vector<16x1xf32>
    %11 = arith.divf %9, %10 : vector<16x1xf32>
    %12 = vector.broadcast %11 : vector<16x1xf32> to vector<16x32xf32>
    %13 = arith.subf %0, %12 : vector<16x32xf32>
    %14 = arith.mulf %13, %13 : vector<16x32xf32>
    %cst_11 = arith.constant dense<0.000000e+00> : vector<16xf32>
    %15 = vector.multi_reduction <add>, %14, %cst_11 [1] : vector<16x32xf32> to vector<16xf32>
    %16 = vector.shape_cast %15 : vector<16xf32> to vector<16x1xf32>
    %cst_12 = arith.constant 3.200000e+01 : f32
    %17 = vector.broadcast %cst_12 : f32 to vector<16x1xf32>
    %18 = arith.divf %16, %17 : vector<16x1xf32>
    %19 = vector.broadcast %11 : vector<16x1xf32> to vector<16x32xf32>
    %20 = arith.subf %0, %19 : vector<16x32xf32>
    %cst_13 = arith.constant 9.99999974E-6 : f32
    %21 = vector.broadcast %cst_13 : f32 to vector<16x1xf32>
    %22 = arith.addf %18, %21 : vector<16x1xf32>
    %23 = math.rsqrt %22 : vector<16x1xf32>
    %24 = vector.broadcast %23 : vector<16x1xf32> to vector<16x32xf32>
    %25 = arith.mulf %20, %24 : vector<16x32xf32>
    %26 = vector.broadcast %6 : vector<1x32xf32> to vector<16x32xf32>
    %27 = arith.mulf %25, %26 : vector<16x32xf32>
    %28 = vector.broadcast %7 : vector<1x32xf32> to vector<16x32xf32>
    %29 = arith.addf %27, %28 : vector<16x32xf32>
    %30 = arith.truncf %29 : vector<16x32xf32> to vector<16x32xbf16>
    %c0_14 = arith.constant 0 : index
    %c0_15 = arith.constant 0 : index
    %c0_16 = arith.constant 0 : index
    %31 = vector.load %arg6[%c0_14, %c0_15, %c0_16] : memref<2x32x96xbf16, #tpu.memory_space<vmem>>, vector<1x32x96xbf16>
    %32 = vector.shape_cast %31 : vector<1x32x96xbf16> to vector<32x96xbf16>
    %cst_17 = arith.constant dense<0.000000e+00> : vector<16x96xf32>
    %33 = tpu.matmul %30, %32, %cst_17 {dimension_numbers = #tpu.dot_dimension_numbers<[1], [0], [0], [1], [0, 0, 1, 1], [], []>} : vector<16x32xbf16>, vector<32x96xbf16>, vector<16x96xf32> -> vector<16x96xf32>
    %c0_18 = arith.constant 0 : index
    %c0_19 = arith.constant 0 : index
    %c0_20 = arith.constant 0 : index
    %34 = vector.load %arg7[%c0_18, %c0_19, %c0_20] : memref<2x1x96xf32, #tpu.memory_space<vmem>>, vector<1x1x96xf32>
    %35 = vector.shape_cast %34 : vector<1x1x96xf32> to vector<1x96xf32>
    %36 = vector.broadcast %35 : vector<1x96xf32> to vector<16x96xf32>
    %37 = arith.addf %33, %36 : vector<16x96xf32>
    %38 = vector.extract_strided_slice %37 {offsets = [0, 0], sizes = [16, 32], strides = [1, 1]} : vector<16x96xf32> to vector<16x32xf32>
    %39 = vector.shape_cast %38 : vector<16x32xf32> to vector<2x8x32xf32>
    %40 = vector.extract_strided_slice %37 {offsets = [0, 32], sizes = [16, 32], strides = [1, 1]} : vector<16x96xf32> to vector<16x32xf32>
    %41 = vector.shape_cast %40 : vector<16x32xf32> to vector<2x8x32xf32>
    %42 = vector.extract_strided_slice %37 {offsets = [0, 64], sizes = [16, 32], strides = [1, 1]} : vector<16x96xf32> to vector<16x32xf32>
    %43 = vector.shape_cast %42 : vector<16x32xf32> to vector<2x8x32xf32>
    %c0_21 = arith.constant 0 : index
    %c0_22 = arith.constant 0 : index
    %c0_23 = arith.constant 0 : index
    %c0_24 = arith.constant 0 : index
    %44 = vector.load %arg3[%c0_21, %c0_22, %c0_23, %c0_24] : memref<4x2x8x32xf32, #tpu.memory_space<vmem>>, vector<1x2x8x32xf32>
    %45 = vector.shape_cast %44 : vector<1x2x8x32xf32> to vector<2x8x32xf32>
    %c1 = arith.constant 1 : index
    %c0_25 = arith.constant 0 : index
    %c0_26 = arith.constant 0 : index
    %c0_27 = arith.constant 0 : index
    %46 = vector.load %arg3[%c1, %c0_25, %c0_26, %c0_27] : memref<4x2x8x32xf32, #tpu.memory_space<vmem>>, vector<1x2x8x32xf32>
    %47 = vector.shape_cast %46 : vector<1x2x8x32xf32> to vector<2x8x32xf32>
    %48 = arith.truncf %39 : vector<2x8x32xf32> to vector<2x8x32xbf16>
    %49 = tpu.concatenate %45, %41 in 1 : vector<2x8x32xf32>, vector<2x8x32xf32> -> vector<2x16x32xf32>
    %50 = arith.truncf %49 : vector<2x16x32xf32> to vector<2x16x32xbf16>
    %51 = tpu.concatenate %47, %43 in 1 : vector<2x8x32xf32>, vector<2x8x32xf32> -> vector<2x16x32xf32>
    %52 = arith.truncf %51 : vector<2x16x32xf32> to vector<2x16x32xbf16>
    %53 = vector.extract_strided_slice %48 {offsets = [0, 0, 0], sizes = [2, 8, 8], strides = [1, 1, 1]} : vector<2x8x32xbf16> to vector<2x8x8xbf16>
    %54 = vector.extract_strided_slice %50 {offsets = [0, 0, 0], sizes = [2, 16, 8], strides = [1, 1, 1]} : vector<2x16x32xbf16> to vector<2x16x8xbf16>
    "tpu.trace_start"() <{level = 10 : i32, message = "bsd,btd->bst"}> : () -> ()
    %cst_28 = arith.constant dense<0.000000e+00> : vector<2x8x16xf32>
    %55 = tpu.matmul %53, %54, %cst_28 {dimension_numbers = #tpu.dot_dimension_numbers<[2], [2], [1], [1], [0, 0, 0, 1, 1, 1], [0], [0]>} : vector<2x8x8xbf16>, vector<2x16x8xbf16>, vector<2x8x16xf32> -> vector<2x8x16xf32>
    "tpu.trace_stop"() : () -> ()
    %56 = arith.addf %55, %1 : vector<2x8x16xf32>
    %cst_29 = arith.constant dense<0xFF800000> : vector<2x8xf32>
    %57 = vector.multi_reduction <maximumf>, %56, %cst_29 [2] : vector<2x8x16xf32> to vector<2x8xf32>
    %58 = vector.shape_cast %57 : vector<2x8xf32> to vector<2x8x1xf32>
    %59 = vector.broadcast %58 : vector<2x8x1xf32> to vector<2x8x16xf32>
    %60 = arith.subf %56, %59 : vector<2x8x16xf32>
    %61 = math.exp %60 : vector<2x8x16xf32>
    %cst_30 = arith.constant dense<0.000000e+00> : vector<2x8xf32>
    %62 = vector.multi_reduction <add>, %61, %cst_30 [2] : vector<2x8x16xf32> to vector<2x8xf32>
    %63 = vector.shape_cast %62 : vector<2x8xf32> to vector<2x8x1xf32>
    %64 = tpu.reciprocal %63 {approx = true} : vector<2x8x1xf32> -> vector<2x8x1xf32>
    %65 = vector.broadcast %64 : vector<2x8x1xf32> to vector<2x8x16xf32>
    %66 = arith.mulf %61, %65 : vector<2x8x16xf32>
    %67 = arith.truncf %66 : vector<2x8x16xf32> to vector<2x8x16xbf16>
    %68 = vector.extract_strided_slice %52 {offsets = [0, 0, 0], sizes = [2, 16, 8], strides = [1, 1, 1]} : vector<2x16x32xbf16> to vector<2x16x8xbf16>
    "tpu.trace_start"() <{level = 10 : i32, message = "bst,btd->bsd"}> : () -> ()
    %cst_31 = arith.constant dense<0.000000e+00> : vector<2x8x8xf32>
    %69 = tpu.matmul %67, %68, %cst_31 {dimension_numbers = #tpu.dot_dimension_numbers<[2], [1], [1], [2], [0, 0, 0, 1, 1, 2], [0], [0]>} : vector<2x8x16xbf16>, vector<2x16x8xbf16>, vector<2x8x8xf32> -> vector<2x8x8xf32>
    "tpu.trace_stop"() : () -> ()
    %70 = vector.shape_cast %69 : vector<2x8x8xf32> to vector<16x8xf32>
    %71 = arith.truncf %70 : vector<16x8xf32> to vector<16x8xbf16>
    %c0_32 = arith.constant 0 : index
    %c0_33 = arith.constant 0 : index
    %c0_34 = arith.constant 0 : index
    %c0_35 = arith.constant 0 : index
    %72 = vector.load %arg8[%c0_32, %c0_33, %c0_34, %c0_35] : memref<2x4x8x32xbf16, #tpu.memory_space<vmem>>, vector<1x1x8x32xbf16>
    %73 = vector.shape_cast %72 : vector<1x1x8x32xbf16> to vector<8x32xbf16>
    %cst_36 = arith.constant dense<0.000000e+00> : vector<16x32xf32>
    %74 = tpu.matmul %71, %73, %cst_36 {dimension_numbers = #tpu.dot_dimension_numbers<[1], [0], [0], [1], [0, 0, 1, 1], [], []>} : vector<16x8xbf16>, vector<8x32xbf16>, vector<16x32xf32> -> vector<16x32xf32>
    %75 = vector.extract_strided_slice %48 {offsets = [0, 0, 8], sizes = [2, 8, 8], strides = [1, 1, 1]} : vector<2x8x32xbf16> to vector<2x8x8xbf16>
    %76 = vector.extract_strided_slice %50 {offsets = [0, 0, 8], sizes = [2, 16, 8], strides = [1, 1, 1]} : vector<2x16x32xbf16> to vector<2x16x8xbf16>
    "tpu.trace_start"() <{level = 10 : i32, message = "bsd,btd->bst"}> : () -> ()
    %cst_37 = arith.constant dense<0.000000e+00> : vector<2x8x16xf32>
    %77 = tpu.matmul %75, %76, %cst_37 {dimension_numbers = #tpu.dot_dimension_numbers<[2], [2], [1], [1], [0, 0, 0, 1, 1, 1], [0], [0]>} : vector<2x8x8xbf16>, vector<2x16x8xbf16>, vector<2x8x16xf32> -> vector<2x8x16xf32>
    "tpu.trace_stop"() : () -> ()
    %78 = arith.addf %77, %1 : vector<2x8x16xf32>
    %cst_38 = arith.constant dense<0xFF800000> : vector<2x8xf32>
    %79 = vector.multi_reduction <maximumf>, %78, %cst_38 [2] : vector<2x8x16xf32> to vector<2x8xf32>
    %80 = vector.shape_cast %79 : vector<2x8xf32> to vector<2x8x1xf32>
    %81 = vector.broadcast %80 : vector<2x8x1xf32> to vector<2x8x16xf32>
    %82 = arith.subf %78, %81 : vector<2x8x16xf32>
    %83 = math.exp %82 : vector<2x8x16xf32>
    %cst_39 = arith.constant dense<0.000000e+00> : vector<2x8xf32>
    %84 = vector.multi_reduction <add>, %83, %cst_39 [2] : vector<2x8x16xf32> to vector<2x8xf32>
    %85 = vector.shape_cast %84 : vector<2x8xf32> to vector<2x8x1xf32>
    %86 = tpu.reciprocal %85 {approx = true} : vector<2x8x1xf32> -> vector<2x8x1xf32>
    %87 = vector.broadcast %86 : vector<2x8x1xf32> to vector<2x8x16xf32>
    %88 = arith.mulf %83, %87 : vector<2x8x16xf32>
    %89 = arith.truncf %88 : vector<2x8x16xf32> to vector<2x8x16xbf16>
    %90 = vector.extract_strided_slice %52 {offsets = [0, 0, 8], sizes = [2, 16, 8], strides = [1, 1, 1]} : vector<2x16x32xbf16> to vector<2x16x8xbf16>
    "tpu.trace_start"() <{level = 10 : i32, message = "bst,btd->bsd"}> : () -> ()
    %cst_40 = arith.constant dense<0.000000e+00> : vector<2x8x8xf32>
    %91 = tpu.matmul %89, %90, %cst_40 {dimension_numbers = #tpu.dot_dimension_numbers<[2], [1], [1], [2], [0, 0, 0, 1, 1, 2], [0], [0]>} : vector<2x8x16xbf16>, vector<2x16x8xbf16>, vector<2x8x8xf32> -> vector<2x8x8xf32>
    "tpu.trace_stop"() : () -> ()
    %92 = vector.shape_cast %91 : vector<2x8x8xf32> to vector<16x8xf32>
    %93 = arith.truncf %92 : vector<16x8xf32> to vector<16x8xbf16>
    %c0_41 = arith.constant 0 : index
    %c1_42 = arith.constant 1 : index
    %c0_43 = arith.constant 0 : index
    %c0_44 = arith.constant 0 : index
    %94 = vector.load %arg8[%c0_41, %c1_42, %c0_43, %c0_44] : memref<2x4x8x32xbf16, #tpu.memory_space<vmem>>, vector<1x1x8x32xbf16>
    %95 = vector.shape_cast %94 : vector<1x1x8x32xbf16> to vector<8x32xbf16>
    %cst_45 = arith.constant dense<0.000000e+00> : vector<16x32xf32>
    %96 = tpu.matmul %93, %95, %cst_45 {dimension_numbers = #tpu.dot_dimension_numbers<[1], [0], [0], [1], [0, 0, 1, 1], [], []>} : vector<16x8xbf16>, vector<8x32xbf16>, vector<16x32xf32> -> vector<16x32xf32>
    %97 = arith.addf %74, %96 : vector<16x32xf32>
    %98 = vector.extract_strided_slice %48 {offsets = [0, 0, 16], sizes = [2, 8, 8], strides = [1, 1, 1]} : vector<2x8x32xbf16> to vector<2x8x8xbf16>
    %99 = vector.extract_strided_slice %50 {offsets = [0, 0, 16], sizes = [2, 16, 8], strides = [1, 1, 1]} : vector<2x16x32xbf16> to vector<2x16x8xbf16>
    "tpu.trace_start"() <{level = 10 : i32, message = "bsd,btd->bst"}> : () -> ()
    %cst_46 = arith.constant dense<0.000000e+00> : vector<2x8x16xf32>
    %100 = tpu.matmul %98, %99, %cst_46 {dimension_numbers = #tpu.dot_dimension_numbers<[2], [2], [1], [1], [0, 0, 0, 1, 1, 1], [0], [0]>} : vector<2x8x8xbf16>, vector<2x16x8xbf16>, vector<2x8x16xf32> -> vector<2x8x16xf32>
    "tpu.trace_stop"() : () -> ()
    %101 = arith.addf %100, %1 : vector<2x8x16xf32>
    %cst_47 = arith.constant dense<0xFF800000> : vector<2x8xf32>
    %102 = vector.multi_reduction <maximumf>, %101, %cst_47 [2] : vector<2x8x16xf32> to vector<2x8xf32>
    %103 = vector.shape_cast %102 : vector<2x8xf32> to vector<2x8x1xf32>
    %104 = vector.broadcast %103 : vector<2x8x1xf32> to vector<2x8x16xf32>
    %105 = arith.subf %101, %104 : vector<2x8x16xf32>
    %106 = math.exp %105 : vector<2x8x16xf32>
    %cst_48 = arith.constant dense<0.000000e+00> : vector<2x8xf32>
    %107 = vector.multi_reduction <add>, %106, %cst_48 [2] : vector<2x8x16xf32> to vector<2x8xf32>
    %108 = vector.shape_cast %107 : vector<2x8xf32> to vector<2x8x1xf32>
    %109 = tpu.reciprocal %108 {approx = true} : vector<2x8x1xf32> -> vector<2x8x1xf32>
    %110 = vector.broadcast %109 : vector<2x8x1xf32> to vector<2x8x16xf32>
    %111 = arith.mulf %106, %110 : vector<2x8x16xf32>
    %112 = arith.truncf %111 : vector<2x8x16xf32> to vector<2x8x16xbf16>
    %113 = vector.extract_strided_slice %52 {offsets = [0, 0, 16], sizes = [2, 16, 8], strides = [1, 1, 1]} : vector<2x16x32xbf16> to vector<2x16x8xbf16>
    "tpu.trace_start"() <{level = 10 : i32, message = "bst,btd->bsd"}> : () -> ()
    %cst_49 = arith.constant dense<0.000000e+00> : vector<2x8x8xf32>
    %114 = tpu.matmul %112, %113, %cst_49 {dimension_numbers = #tpu.dot_dimension_numbers<[2], [1], [1], [2], [0, 0, 0, 1, 1, 2], [0], [0]>} : vector<2x8x16xbf16>, vector<2x16x8xbf16>, vector<2x8x8xf32> -> vector<2x8x8xf32>
    "tpu.trace_stop"() : () -> ()
    %115 = vector.shape_cast %114 : vector<2x8x8xf32> to vector<16x8xf32>
    %116 = arith.truncf %115 : vector<16x8xf32> to vector<16x8xbf16>
    %c0_50 = arith.constant 0 : index
    %c2 = arith.constant 2 : index
    %c0_51 = arith.constant 0 : index
    %c0_52 = arith.constant 0 : index
    %117 = vector.load %arg8[%c0_50, %c2, %c0_51, %c0_52] : memref<2x4x8x32xbf16, #tpu.memory_space<vmem>>, vector<1x1x8x32xbf16>
    %118 = vector.shape_cast %117 : vector<1x1x8x32xbf16> to vector<8x32xbf16>
    %cst_53 = arith.constant dense<0.000000e+00> : vector<16x32xf32>
    %119 = tpu.matmul %116, %118, %cst_53 {dimension_numbers = #tpu.dot_dimension_numbers<[1], [0], [0], [1], [0, 0, 1, 1], [], []>} : vector<16x8xbf16>, vector<8x32xbf16>, vector<16x32xf32> -> vector<16x32xf32>
    %120 = arith.addf %97, %119 : vector<16x32xf32>
    %121 = vector.extract_strided_slice %48 {offsets = [0, 0, 24], sizes = [2, 8, 8], strides = [1, 1, 1]} : vector<2x8x32xbf16> to vector<2x8x8xbf16>
    %122 = vector.extract_strided_slice %50 {offsets = [0, 0, 24], sizes = [2, 16, 8], strides = [1, 1, 1]} : vector<2x16x32xbf16> to vector<2x16x8xbf16>
    "tpu.trace_start"() <{level = 10 : i32, message = "bsd,btd->bst"}> : () -> ()
    %cst_54 = arith.constant dense<0.000000e+00> : vector<2x8x16xf32>
    %123 = tpu.matmul %121, %122, %cst_54 {dimension_numbers = #tpu.dot_dimension_numbers<[2], [2], [1], [1], [0, 0, 0, 1, 1, 1], [0], [0]>} : vector<2x8x8xbf16>, vector<2x16x8xbf16>, vector<2x8x16xf32> -> vector<2x8x16xf32>
    "tpu.trace_stop"() : () -> ()
    %124 = arith.addf %123, %1 : vector<2x8x16xf32>
    %cst_55 = arith.constant dense<0xFF800000> : vector<2x8xf32>
    %125 = vector.multi_reduction <maximumf>, %124, %cst_55 [2] : vector<2x8x16xf32> to vector<2x8xf32>
    %126 = vector.shape_cast %125 : vector<2x8xf32> to vector<2x8x1xf32>
    %127 = vector.broadcast %126 : vector<2x8x1xf32> to vector<2x8x16xf32>
    %128 = arith.subf %124, %127 : vector<2x8x16xf32>
    %129 = math.exp %128 : vector<2x8x16xf32>
    %cst_56 = arith.constant dense<0.000000e+00> : vector<2x8xf32>
    %130 = vector.multi_reduction <add>, %129, %cst_56 [2] : vector<2x8x16xf32> to vector<2x8xf32>
    %131 = vector.shape_cast %130 : vector<2x8xf32> to vector<2x8x1xf32>
    %132 = tpu.reciprocal %131 {approx = true} : vector<2x8x1xf32> -> vector<2x8x1xf32>
    %133 = vector.broadcast %132 : vector<2x8x1xf32> to vector<2x8x16xf32>
    %134 = arith.mulf %129, %133 : vector<2x8x16xf32>
    %135 = arith.truncf %134 : vector<2x8x16xf32> to vector<2x8x16xbf16>
    %136 = vector.extract_strided_slice %52 {offsets = [0, 0, 24], sizes = [2, 16, 8], strides = [1, 1, 1]} : vector<2x16x32xbf16> to vector<2x16x8xbf16>
    "tpu.trace_start"() <{level = 10 : i32, message = "bst,btd->bsd"}> : () -> ()
    %cst_57 = arith.constant dense<0.000000e+00> : vector<2x8x8xf32>
    %137 = tpu.matmul %135, %136, %cst_57 {dimension_numbers = #tpu.dot_dimension_numbers<[2], [1], [1], [2], [0, 0, 0, 1, 1, 2], [0], [0]>} : vector<2x8x16xbf16>, vector<2x16x8xbf16>, vector<2x8x8xf32> -> vector<2x8x8xf32>
    "tpu.trace_stop"() : () -> ()
    %138 = vector.shape_cast %137 : vector<2x8x8xf32> to vector<16x8xf32>
    %139 = arith.truncf %138 : vector<16x8xf32> to vector<16x8xbf16>
    %c0_58 = arith.constant 0 : index
    %c3 = arith.constant 3 : index
    %c0_59 = arith.constant 0 : index
    %c0_60 = arith.constant 0 : index
    %140 = vector.load %arg8[%c0_58, %c3, %c0_59, %c0_60] : memref<2x4x8x32xbf16, #tpu.memory_space<vmem>>, vector<1x1x8x32xbf16>
    %141 = vector.shape_cast %140 : vector<1x1x8x32xbf16> to vector<8x32xbf16>
    %cst_61 = arith.constant dense<0.000000e+00> : vector<16x32xf32>
    %142 = tpu.matmul %139, %141, %cst_61 {dimension_numbers = #tpu.dot_dimension_numbers<[1], [0], [0], [1], [0, 0, 1, 1], [], []>} : vector<16x8xbf16>, vector<8x32xbf16>, vector<16x32xf32> -> vector<16x32xf32>
    %143 = arith.addf %120, %142 : vector<16x32xf32>
    %144 = arith.addf %0, %143 : vector<16x32xf32>
    %c0_62 = arith.constant 0 : index
    %c0_63 = arith.constant 0 : index
    %c0_64 = arith.constant 0 : index
    %145 = vector.load %arg9[%c0_62, %c0_63, %c0_64] : memref<2x1x32xf32, #tpu.memory_space<vmem>>, vector<1x1x32xf32>
    %146 = vector.shape_cast %145 : vector<1x1x32xf32> to vector<1x32xf32>
    %147 = vector.broadcast %146 : vector<1x32xf32> to vector<16x32xf32>
    %148 = arith.addf %144, %147 : vector<16x32xf32>
    %149 = vector.extract_strided_slice %3 {offsets = [1, 0], sizes = [1, 32], strides = [1, 1]} : vector<2x32xf32> to vector<1x32xf32>
    %150 = vector.extract_strided_slice %5 {offsets = [1, 0], sizes = [1, 32], strides = [1, 1]} : vector<2x32xf32> to vector<1x32xf32>
    %cst_65 = arith.constant dense<0.000000e+00> : vector<16xf32>
    %151 = vector.multi_reduction <add>, %148, %cst_65 [1] : vector<16x32xf32> to vector<16xf32>
    %152 = vector.shape_cast %151 : vector<16xf32> to vector<16x1xf32>
    %cst_66 = arith.constant 3.200000e+01 : f32
    %153 = vector.broadcast %cst_66 : f32 to vector<16x1xf32>
    %154 = arith.divf %152, %153 : vector<16x1xf32>
    %155 = vector.broadcast %154 : vector<16x1xf32> to vector<16x32xf32>
    %156 = arith.subf %148, %155 : vector<16x32xf32>
    %157 = arith.mulf %156, %156 : vector<16x32xf32>
    %cst_67 = arith.constant dense<0.000000e+00> : vector<16xf32>
    %158 = vector.multi_reduction <add>, %157, %cst_67 [1] : vector<16x32xf32> to vector<16xf32>
    %159 = vector.shape_cast %158 : vector<16xf32> to vector<16x1xf32>
    %cst_68 = arith.constant 3.200000e+01 : f32
    %160 = vector.broadcast %cst_68 : f32 to vector<16x1xf32>
    %161 = arith.divf %159, %160 : vector<16x1xf32>
    %162 = vector.broadcast %154 : vector<16x1xf32> to vector<16x32xf32>
    %163 = arith.subf %148, %162 : vector<16x32xf32>
    %cst_69 = arith.constant 9.99999974E-6 : f32
    %164 = vector.broadcast %cst_69 : f32 to vector<16x1xf32>
    %165 = arith.addf %161, %164 : vector<16x1xf32>
    %166 = math.rsqrt %165 : vector<16x1xf32>
    %167 = vector.broadcast %166 : vector<16x1xf32> to vector<16x32xf32>
    %168 = arith.mulf %163, %167 : vector<16x32xf32>
    %169 = vector.broadcast %149 : vector<1x32xf32> to vector<16x32xf32>
    %170 = arith.mulf %168, %169 : vector<16x32xf32>
    %171 = vector.broadcast %150 : vector<1x32xf32> to vector<16x32xf32>
    %172 = arith.addf %170, %171 : vector<16x32xf32>
    %173 = arith.truncf %172 : vector<16x32xf32> to vector<16x32xbf16>
    %c0_70 = arith.constant 0 : index
    %c0_71 = arith.constant 0 : index
    %c0_72 = arith.constant 0 : index
    %174 = vector.load %arg10[%c0_70, %c0_71, %c0_72] : memref<2x32x64xbf16, #tpu.memory_space<vmem>>, vector<1x32x64xbf16>
    %175 = vector.shape_cast %174 : vector<1x32x64xbf16> to vector<32x64xbf16>
    %cst_73 = arith.constant dense<0.000000e+00> : vector<16x64xf32>
    %176 = tpu.matmul %173, %175, %cst_73 {dimension_numbers = #tpu.dot_dimension_numbers<[1], [0], [0], [1], [0, 0, 1, 1], [], []>} : vector<16x32xbf16>, vector<32x64xbf16>, vector<16x64xf32> -> vector<16x64xf32>
    %c0_74 = arith.constant 0 : index
    %c0_75 = arith.constant 0 : index
    %c0_76 = arith.constant 0 : index
    %177 = vector.load %arg11[%c0_74, %c0_75, %c0_76] : memref<2x1x64xf32, #tpu.memory_space<vmem>>, vector<1x1x64xf32>
    %178 = vector.shape_cast %177 : vector<1x1x64xf32> to vector<1x64xf32>
    %179 = vector.broadcast %178 : vector<1x64xf32> to vector<16x64xf32>
    %180 = arith.addf %176, %179 : vector<16x64xf32>
    %181 = arith.mulf %180, %180 : vector<16x64xf32>
    %182 = arith.mulf %180, %181 : vector<16x64xf32>
    %cst_77 = arith.constant 4.471500e-02 : f32
    %183 = vector.broadcast %cst_77 : f32 to vector<16x64xf32>
    %184 = arith.mulf %183, %182 : vector<16x64xf32>
    %185 = arith.addf %180, %184 : vector<16x64xf32>
    %cst_78 = arith.constant 0.797884583 : f32
    %186 = vector.broadcast %cst_78 : f32 to vector<16x64xf32>
    %187 = arith.mulf %186, %185 : vector<16x64xf32>
    %188 = math.tanh %187 : vector<16x64xf32>
    %cst_79 = arith.constant 1.000000e+00 : f32
    %189 = vector.broadcast %cst_79 : f32 to vector<16x64xf32>
    %190 = arith.addf %189, %188 : vector<16x64xf32>
    %cst_80 = arith.constant 5.000000e-01 : f32
    %191 = vector.broadcast %cst_80 : f32 to vector<16x64xf32>
    %192 = arith.mulf %191, %190 : vector<16x64xf32>
    %193 = arith.mulf %180, %192 : vector<16x64xf32>
    %194 = arith.truncf %193 : vector<16x64xf32> to vector<16x64xbf16>
    %c0_81 = arith.constant 0 : index
    %c0_82 = arith.constant 0 : index
    %c0_83 = arith.constant 0 : index
    %195 = vector.load %arg12[%c0_81, %c0_82, %c0_83] : memref<2x64x32xbf16, #tpu.memory_space<vmem>>, vector<1x64x32xbf16>
    %196 = vector.shape_cast %195 : vector<1x64x32xbf16> to vector<64x32xbf16>
    %cst_84 = arith.constant dense<0.000000e+00> : vector<16x32xf32>
    %197 = tpu.matmul %194, %196, %cst_84 {dimension_numbers = #tpu.dot_dimension_numbers<[1], [0], [0], [1], [0, 0, 1, 1], [], []>} : vector<16x64xbf16>, vector<64x32xbf16>, vector<16x32xf32> -> vector<16x32xf32>
    %c0_85 = arith.constant 0 : index
    %c0_86 = arith.constant 0 : index
    %c0_87 = arith.constant 0 : index
    %198 = vector.load %arg13[%c0_85, %c0_86, %c0_87] : memref<2x1x32xf32, #tpu.memory_space<vmem>>, vector<1x1x32xf32>
    %199 = vector.shape_cast %198 : vector<1x1x32xf32> to vector<1x32xf32>
    %200 = vector.broadcast %199 : vector<1x32xf32> to vector<16x32xf32>
    %201 = arith.addf %197, %200 : vector<16x32xf32>
    %202 = arith.addf %148, %201 : vector<16x32xf32>
    %c1_88 = arith.constant 1 : index
    %c0_89 = arith.constant 0 : index
    %c0_90 = arith.constant 0 : index
    %203 = vector.load %arg4[%c1_88, %c0_89, %c0_90] : memref<2x2x32xf32, #tpu.memory_space<vmem>>, vector<1x2x32xf32>
    %204 = vector.shape_cast %203 : vector<1x2x32xf32> to vector<2x32xf32>
    %c1_91 = arith.constant 1 : index
    %c0_92 = arith.constant 0 : index
    %c0_93 = arith.constant 0 : index
    %205 = vector.load %arg5[%c1_91, %c0_92, %c0_93] : memref<2x2x32xf32, #tpu.memory_space<vmem>>, vector<1x2x32xf32>
    %206 = vector.shape_cast %205 : vector<1x2x32xf32> to vector<2x32xf32>
    %207 = vector.extract_strided_slice %204 {offsets = [0, 0], sizes = [1, 32], strides = [1, 1]} : vector<2x32xf32> to vector<1x32xf32>
    %208 = vector.extract_strided_slice %206 {offsets = [0, 0], sizes = [1, 32], strides = [1, 1]} : vector<2x32xf32> to vector<1x32xf32>
    %cst_94 = arith.constant dense<0.000000e+00> : vector<16xf32>
    %209 = vector.multi_reduction <add>, %202, %cst_94 [1] : vector<16x32xf32> to vector<16xf32>
    %210 = vector.shape_cast %209 : vector<16xf32> to vector<16x1xf32>
    %cst_95 = arith.constant 3.200000e+01 : f32
    %211 = vector.broadcast %cst_95 : f32 to vector<16x1xf32>
    %212 = arith.divf %210, %211 : vector<16x1xf32>
    %213 = vector.broadcast %212 : vector<16x1xf32> to vector<16x32xf32>
    %214 = arith.subf %202, %213 : vector<16x32xf32>
    %215 = arith.mulf %214, %214 : vector<16x32xf32>
    %cst_96 = arith.constant dense<0.000000e+00> : vector<16xf32>
    %216 = vector.multi_reduction <add>, %215, %cst_96 [1] : vector<16x32xf32> to vector<16xf32>
    %217 = vector.shape_cast %216 : vector<16xf32> to vector<16x1xf32>
    %cst_97 = arith.constant 3.200000e+01 : f32
    %218 = vector.broadcast %cst_97 : f32 to vector<16x1xf32>
    %219 = arith.divf %217, %218 : vector<16x1xf32>
    %220 = vector.broadcast %212 : vector<16x1xf32> to vector<16x32xf32>
    %221 = arith.subf %202, %220 : vector<16x32xf32>
    %cst_98 = arith.constant 9.99999974E-6 : f32
    %222 = vector.broadcast %cst_98 : f32 to vector<16x1xf32>
    %223 = arith.addf %219, %222 : vector<16x1xf32>
    %224 = math.rsqrt %223 : vector<16x1xf32>
    %225 = vector.broadcast %224 : vector<16x1xf32> to vector<16x32xf32>
    %226 = arith.mulf %221, %225 : vector<16x32xf32>
    %227 = vector.broadcast %207 : vector<1x32xf32> to vector<16x32xf32>
    %228 = arith.mulf %226, %227 : vector<16x32xf32>
    %229 = vector.broadcast %208 : vector<1x32xf32> to vector<16x32xf32>
    %230 = arith.addf %228, %229 : vector<16x32xf32>
    %231 = arith.truncf %230 : vector<16x32xf32> to vector<16x32xbf16>
    %c1_99 = arith.constant 1 : index
    %c0_100 = arith.constant 0 : index
    %c0_101 = arith.constant 0 : index
    %232 = vector.load %arg6[%c1_99, %c0_100, %c0_101] : memref<2x32x96xbf16, #tpu.memory_space<vmem>>, vector<1x32x96xbf16>
    %233 = vector.shape_cast %232 : vector<1x32x96xbf16> to vector<32x96xbf16>
    %cst_102 = arith.constant dense<0.000000e+00> : vector<16x96xf32>
    %234 = tpu.matmul %231, %233, %cst_102 {dimension_numbers = #tpu.dot_dimension_numbers<[1], [0], [0], [1], [0, 0, 1, 1], [], []>} : vector<16x32xbf16>, vector<32x96xbf16>, vector<16x96xf32> -> vector<16x96xf32>
    %c1_103 = arith.constant 1 : index
    %c0_104 = arith.constant 0 : index
    %c0_105 = arith.constant 0 : index
    %235 = vector.load %arg7[%c1_103, %c0_104, %c0_105] : memref<2x1x96xf32, #tpu.memory_space<vmem>>, vector<1x1x96xf32>
    %236 = vector.shape_cast %235 : vector<1x1x96xf32> to vector<1x96xf32>
    %237 = vector.broadcast %236 : vector<1x96xf32> to vector<16x96xf32>
    %238 = arith.addf %234, %237 : vector<16x96xf32>
    %239 = vector.extract_strided_slice %238 {offsets = [0, 0], sizes = [16, 32], strides = [1, 1]} : vector<16x96xf32> to vector<16x32xf32>
    %240 = vector.shape_cast %239 : vector<16x32xf32> to vector<2x8x32xf32>
    %241 = vector.extract_strided_slice %238 {offsets = [0, 32], sizes = [16, 32], strides = [1, 1]} : vector<16x96xf32> to vector<16x32xf32>
    %242 = vector.shape_cast %241 : vector<16x32xf32> to vector<2x8x32xf32>
    %243 = vector.extract_strided_slice %238 {offsets = [0, 64], sizes = [16, 32], strides = [1, 1]} : vector<16x96xf32> to vector<16x32xf32>
    %244 = vector.shape_cast %243 : vector<16x32xf32> to vector<2x8x32xf32>
    %c2_106 = arith.constant 2 : index
    %c0_107 = arith.constant 0 : index
    %c0_108 = arith.constant 0 : index
    %c0_109 = arith.constant 0 : index
    %245 = vector.load %arg3[%c2_106, %c0_107, %c0_108, %c0_109] : memref<4x2x8x32xf32, #tpu.memory_space<vmem>>, vector<1x2x8x32xf32>
    %246 = vector.shape_cast %245 : vector<1x2x8x32xf32> to vector<2x8x32xf32>
    %c3_110 = arith.constant 3 : index
    %c0_111 = arith.constant 0 : index
    %c0_112 = arith.constant 0 : index
    %c0_113 = arith.constant 0 : index
    %247 = vector.load %arg3[%c3_110, %c0_111, %c0_112, %c0_113] : memref<4x2x8x32xf32, #tpu.memory_space<vmem>>, vector<1x2x8x32xf32>
    %248 = vector.shape_cast %247 : vector<1x2x8x32xf32> to vector<2x8x32xf32>
    %249 = arith.truncf %240 : vector<2x8x32xf32> to vector<2x8x32xbf16>
    %250 = tpu.concatenate %246, %242 in 1 : vector<2x8x32xf32>, vector<2x8x32xf32> -> vector<2x16x32xf32>
    %251 = arith.truncf %250 : vector<2x16x32xf32> to vector<2x16x32xbf16>
    %252 = tpu.concatenate %248, %244 in 1 : vector<2x8x32xf32>, vector<2x8x32xf32> -> vector<2x16x32xf32>
    %253 = arith.truncf %252 : vector<2x16x32xf32> to vector<2x16x32xbf16>
    %254 = vector.extract_strided_slice %249 {offsets = [0, 0, 0], sizes = [2, 8, 8], strides = [1, 1, 1]} : vector<2x8x32xbf16> to vector<2x8x8xbf16>
    %255 = vector.extract_strided_slice %251 {offsets = [0, 0, 0], sizes = [2, 16, 8], strides = [1, 1, 1]} : vector<2x16x32xbf16> to vector<2x16x8xbf16>
    "tpu.trace_start"() <{level = 10 : i32, message = "bsd,btd->bst"}> : () -> ()
    %cst_114 = arith.constant dense<0.000000e+00> : vector<2x8x16xf32>
    %256 = tpu.matmul %254, %255, %cst_114 {dimension_numbers = #tpu.dot_dimension_numbers<[2], [2], [1], [1], [0, 0, 0, 1, 1, 1], [0], [0]>} : vector<2x8x8xbf16>, vector<2x16x8xbf16>, vector<2x8x16xf32> -> vector<2x8x16xf32>
    "tpu.trace_stop"() : () -> ()
    %257 = arith.addf %256, %1 : vector<2x8x16xf32>
    %cst_115 = arith.constant dense<0xFF800000> : vector<2x8xf32>
    %258 = vector.multi_reduction <maximumf>, %257, %cst_115 [2] : vector<2x8x16xf32> to vector<2x8xf32>
    %259 = vector.shape_cast %258 : vector<2x8xf32> to vector<2x8x1xf32>
    %260 = vector.broadcast %259 : vector<2x8x1xf32> to vector<2x8x16xf32>
    %261 = arith.subf %257, %260 : vector<2x8x16xf32>
    %262 = math.exp %261 : vector<2x8x16xf32>
    %cst_116 = arith.constant dense<0.000000e+00> : vector<2x8xf32>
    %263 = vector.multi_reduction <add>, %262, %cst_116 [2] : vector<2x8x16xf32> to vector<2x8xf32>
    %264 = vector.shape_cast %263 : vector<2x8xf32> to vector<2x8x1xf32>
    %265 = tpu.reciprocal %264 {approx = true} : vector<2x8x1xf32> -> vector<2x8x1xf32>
    %266 = vector.broadcast %265 : vector<2x8x1xf32> to vector<2x8x16xf32>
    %267 = arith.mulf %262, %266 : vector<2x8x16xf32>
    %268 = arith.truncf %267 : vector<2x8x16xf32> to vector<2x8x16xbf16>
    %269 = vector.extract_strided_slice %253 {offsets = [0, 0, 0], sizes = [2, 16, 8], strides = [1, 1, 1]} : vector<2x16x32xbf16> to vector<2x16x8xbf16>
    "tpu.trace_start"() <{level = 10 : i32, message = "bst,btd->bsd"}> : () -> ()
    %cst_117 = arith.constant dense<0.000000e+00> : vector<2x8x8xf32>
    %270 = tpu.matmul %268, %269, %cst_117 {dimension_numbers = #tpu.dot_dimension_numbers<[2], [1], [1], [2], [0, 0, 0, 1, 1, 2], [0], [0]>} : vector<2x8x16xbf16>, vector<2x16x8xbf16>, vector<2x8x8xf32> -> vector<2x8x8xf32>
    "tpu.trace_stop"() : () -> ()
    %271 = vector.shape_cast %270 : vector<2x8x8xf32> to vector<16x8xf32>
    %272 = arith.truncf %271 : vector<16x8xf32> to vector<16x8xbf16>
    %c1_118 = arith.constant 1 : index
    %c0_119 = arith.constant 0 : index
    %c0_120 = arith.constant 0 : index
    %c0_121 = arith.constant 0 : index
    %273 = vector.load %arg8[%c1_118, %c0_119, %c0_120, %c0_121] : memref<2x4x8x32xbf16, #tpu.memory_space<vmem>>, vector<1x1x8x32xbf16>
    %274 = vector.shape_cast %273 : vector<1x1x8x32xbf16> to vector<8x32xbf16>
    %cst_122 = arith.constant dense<0.000000e+00> : vector<16x32xf32>
    %275 = tpu.matmul %272, %274, %cst_122 {dimension_numbers = #tpu.dot_dimension_numbers<[1], [0], [0], [1], [0, 0, 1, 1], [], []>} : vector<16x8xbf16>, vector<8x32xbf16>, vector<16x32xf32> -> vector<16x32xf32>
    %276 = vector.extract_strided_slice %249 {offsets = [0, 0, 8], sizes = [2, 8, 8], strides = [1, 1, 1]} : vector<2x8x32xbf16> to vector<2x8x8xbf16>
    %277 = vector.extract_strided_slice %251 {offsets = [0, 0, 8], sizes = [2, 16, 8], strides = [1, 1, 1]} : vector<2x16x32xbf16> to vector<2x16x8xbf16>
    "tpu.trace_start"() <{level = 10 : i32, message = "bsd,btd->bst"}> : () -> ()
    %cst_123 = arith.constant dense<0.000000e+00> : vector<2x8x16xf32>
    %278 = tpu.matmul %276, %277, %cst_123 {dimension_numbers = #tpu.dot_dimension_numbers<[2], [2], [1], [1], [0, 0, 0, 1, 1, 1], [0], [0]>} : vector<2x8x8xbf16>, vector<2x16x8xbf16>, vector<2x8x16xf32> -> vector<2x8x16xf32>
    "tpu.trace_stop"() : () -> ()
    %279 = arith.addf %278, %1 : vector<2x8x16xf32>
    %cst_124 = arith.constant dense<0xFF800000> : vector<2x8xf32>
    %280 = vector.multi_reduction <maximumf>, %279, %cst_124 [2] : vector<2x8x16xf32> to vector<2x8xf32>
    %281 = vector.shape_cast %280 : vector<2x8xf32> to vector<2x8x1xf32>
    %282 = vector.broadcast %281 : vector<2x8x1xf32> to vector<2x8x16xf32>
    %283 = arith.subf %279, %282 : vector<2x8x16xf32>
    %284 = math.exp %283 : vector<2x8x16xf32>
    %cst_125 = arith.constant dense<0.000000e+00> : vector<2x8xf32>
    %285 = vector.multi_reduction <add>, %284, %cst_125 [2] : vector<2x8x16xf32> to vector<2x8xf32>
    %286 = vector.shape_cast %285 : vector<2x8xf32> to vector<2x8x1xf32>
    %287 = tpu.reciprocal %286 {approx = true} : vector<2x8x1xf32> -> vector<2x8x1xf32>
    %288 = vector.broadcast %287 : vector<2x8x1xf32> to vector<2x8x16xf32>
    %289 = arith.mulf %284, %288 : vector<2x8x16xf32>
    %290 = arith.truncf %289 : vector<2x8x16xf32> to vector<2x8x16xbf16>
    %291 = vector.extract_strided_slice %253 {offsets = [0, 0, 8], sizes = [2, 16, 8], strides = [1, 1, 1]} : vector<2x16x32xbf16> to vector<2x16x8xbf16>
    "tpu.trace_start"() <{level = 10 : i32, message = "bst,btd->bsd"}> : () -> ()
    %cst_126 = arith.constant dense<0.000000e+00> : vector<2x8x8xf32>
    %292 = tpu.matmul %290, %291, %cst_126 {dimension_numbers = #tpu.dot_dimension_numbers<[2], [1], [1], [2], [0, 0, 0, 1, 1, 2], [0], [0]>} : vector<2x8x16xbf16>, vector<2x16x8xbf16>, vector<2x8x8xf32> -> vector<2x8x8xf32>
    "tpu.trace_stop"() : () -> ()
    %293 = vector.shape_cast %292 : vector<2x8x8xf32> to vector<16x8xf32>
    %294 = arith.truncf %293 : vector<16x8xf32> to vector<16x8xbf16>
    %c1_127 = arith.constant 1 : index
    %c1_128 = arith.constant 1 : index
    %c0_129 = arith.constant 0 : index
    %c0_130 = arith.constant 0 : index
    %295 = vector.load %arg8[%c1_127, %c1_128, %c0_129, %c0_130] : memref<2x4x8x32xbf16, #tpu.memory_space<vmem>>, vector<1x1x8x32xbf16>
    %296 = vector.shape_cast %295 : vector<1x1x8x32xbf16> to vector<8x32xbf16>
    %cst_131 = arith.constant dense<0.000000e+00> : vector<16x32xf32>
    %297 = tpu.matmul %294, %296, %cst_131 {dimension_numbers = #tpu.dot_dimension_numbers<[1], [0], [0], [1], [0, 0, 1, 1], [], []>} : vector<16x8xbf16>, vector<8x32xbf16>, vector<16x32xf32> -> vector<16x32xf32>
    %298 = arith.addf %275, %297 : vector<16x32xf32>
    %299 = vector.extract_strided_slice %249 {offsets = [0, 0, 16], sizes = [2, 8, 8], strides = [1, 1, 1]} : vector<2x8x32xbf16> to vector<2x8x8xbf16>
    %300 = vector.extract_strided_slice %251 {offsets = [0, 0, 16], sizes = [2, 16, 8], strides = [1, 1, 1]} : vector<2x16x32xbf16> to vector<2x16x8xbf16>
    "tpu.trace_start"() <{level = 10 : i32, message = "bsd,btd->bst"}> : () -> ()
    %cst_132 = arith.constant dense<0.000000e+00> : vector<2x8x16xf32>
    %301 = tpu.matmul %299, %300, %cst_132 {dimension_numbers = #tpu.dot_dimension_numbers<[2], [2], [1], [1], [0, 0, 0, 1, 1, 1], [0], [0]>} : vector<2x8x8xbf16>, vector<2x16x8xbf16>, vector<2x8x16xf32> -> vector<2x8x16xf32>
    "tpu.trace_stop"() : () -> ()
    %302 = arith.addf %301, %1 : vector<2x8x16xf32>
    %cst_133 = arith.constant dense<0xFF800000> : vector<2x8xf32>
    %303 = vector.multi_reduction <maximumf>, %302, %cst_133 [2] : vector<2x8x16xf32> to vector<2x8xf32>
    %304 = vector.shape_cast %303 : vector<2x8xf32> to vector<2x8x1xf32>
    %305 = vector.broadcast %304 : vector<2x8x1xf32> to vector<2x8x16xf32>
    %306 = arith.subf %302, %305 : vector<2x8x16xf32>
    %307 = math.exp %306 : vector<2x8x16xf32>
    %cst_134 = arith.constant dense<0.000000e+00> : vector<2x8xf32>
    %308 = vector.multi_reduction <add>, %307, %cst_134 [2] : vector<2x8x16xf32> to vector<2x8xf32>
    %309 = vector.shape_cast %308 : vector<2x8xf32> to vector<2x8x1xf32>
    %310 = tpu.reciprocal %309 {approx = true} : vector<2x8x1xf32> -> vector<2x8x1xf32>
    %311 = vector.broadcast %310 : vector<2x8x1xf32> to vector<2x8x16xf32>
    %312 = arith.mulf %307, %311 : vector<2x8x16xf32>
    %313 = arith.truncf %312 : vector<2x8x16xf32> to vector<2x8x16xbf16>
    %314 = vector.extract_strided_slice %253 {offsets = [0, 0, 16], sizes = [2, 16, 8], strides = [1, 1, 1]} : vector<2x16x32xbf16> to vector<2x16x8xbf16>
    "tpu.trace_start"() <{level = 10 : i32, message = "bst,btd->bsd"}> : () -> ()
    %cst_135 = arith.constant dense<0.000000e+00> : vector<2x8x8xf32>
    %315 = tpu.matmul %313, %314, %cst_135 {dimension_numbers = #tpu.dot_dimension_numbers<[2], [1], [1], [2], [0, 0, 0, 1, 1, 2], [0], [0]>} : vector<2x8x16xbf16>, vector<2x16x8xbf16>, vector<2x8x8xf32> -> vector<2x8x8xf32>
    "tpu.trace_stop"() : () -> ()
    %316 = vector.shape_cast %315 : vector<2x8x8xf32> to vector<16x8xf32>
    %317 = arith.truncf %316 : vector<16x8xf32> to vector<16x8xbf16>
    %c1_136 = arith.constant 1 : index
    %c2_137 = arith.constant 2 : index
    %c0_138 = arith.constant 0 : index
    %c0_139 = arith.constant 0 : index
    %318 = vector.load %arg8[%c1_136, %c2_137, %c0_138, %c0_139] : memref<2x4x8x32xbf16, #tpu.memory_space<vmem>>, vector<1x1x8x32xbf16>
    %319 = vector.shape_cast %318 : vector<1x1x8x32xbf16> to vector<8x32xbf16>
    %cst_140 = arith.constant dense<0.000000e+00> : vector<16x32xf32>
    %320 = tpu.matmul %317, %319, %cst_140 {dimension_numbers = #tpu.dot_dimension_numbers<[1], [0], [0], [1], [0, 0, 1, 1], [], []>} : vector<16x8xbf16>, vector<8x32xbf16>, vector<16x32xf32> -> vector<16x32xf32>
    %321 = arith.addf %298, %320 : vector<16x32xf32>
    %322 = vector.extract_strided_slice %249 {offsets = [0, 0, 24], sizes = [2, 8, 8], strides = [1, 1, 1]} : vector<2x8x32xbf16> to vector<2x8x8xbf16>
    %323 = vector.extract_strided_slice %251 {offsets = [0, 0, 24], sizes = [2, 16, 8], strides = [1, 1, 1]} : vector<2x16x32xbf16> to vector<2x16x8xbf16>
    "tpu.trace_start"() <{level = 10 : i32, message = "bsd,btd->bst"}> : () -> ()
    %cst_141 = arith.constant dense<0.000000e+00> : vector<2x8x16xf32>
    %324 = tpu.matmul %322, %323, %cst_141 {dimension_numbers = #tpu.dot_dimension_numbers<[2], [2], [1], [1], [0, 0, 0, 1, 1, 1], [0], [0]>} : vector<2x8x8xbf16>, vector<2x16x8xbf16>, vector<2x8x16xf32> -> vector<2x8x16xf32>
    "tpu.trace_stop"() : () -> ()
    %325 = arith.addf %324, %1 : vector<2x8x16xf32>
    %cst_142 = arith.constant dense<0xFF800000> : vector<2x8xf32>
    %326 = vector.multi_reduction <maximumf>, %325, %cst_142 [2] : vector<2x8x16xf32> to vector<2x8xf32>
    %327 = vector.shape_cast %326 : vector<2x8xf32> to vector<2x8x1xf32>
    %328 = vector.broadcast %327 : vector<2x8x1xf32> to vector<2x8x16xf32>
    %329 = arith.subf %325, %328 : vector<2x8x16xf32>
    %330 = math.exp %329 : vector<2x8x16xf32>
    %cst_143 = arith.constant dense<0.000000e+00> : vector<2x8xf32>
    %331 = vector.multi_reduction <add>, %330, %cst_143 [2] : vector<2x8x16xf32> to vector<2x8xf32>
    %332 = vector.shape_cast %331 : vector<2x8xf32> to vector<2x8x1xf32>
    %333 = tpu.reciprocal %332 {approx = true} : vector<2x8x1xf32> -> vector<2x8x1xf32>
    %334 = vector.broadcast %333 : vector<2x8x1xf32> to vector<2x8x16xf32>
    %335 = arith.mulf %330, %334 : vector<2x8x16xf32>
    %336 = arith.truncf %335 : vector<2x8x16xf32> to vector<2x8x16xbf16>
    %337 = vector.extract_strided_slice %253 {offsets = [0, 0, 24], sizes = [2, 16, 8], strides = [1, 1, 1]} : vector<2x16x32xbf16> to vector<2x16x8xbf16>
    "tpu.trace_start"() <{level = 10 : i32, message = "bst,btd->bsd"}> : () -> ()
    %cst_144 = arith.constant dense<0.000000e+00> : vector<2x8x8xf32>
    %338 = tpu.matmul %336, %337, %cst_144 {dimension_numbers = #tpu.dot_dimension_numbers<[2], [1], [1], [2], [0, 0, 0, 1, 1, 2], [0], [0]>} : vector<2x8x16xbf16>, vector<2x16x8xbf16>, vector<2x8x8xf32> -> vector<2x8x8xf32>
    "tpu.trace_stop"() : () -> ()
    %339 = vector.shape_cast %338 : vector<2x8x8xf32> to vector<16x8xf32>
    %340 = arith.truncf %339 : vector<16x8xf32> to vector<16x8xbf16>
    %c1_145 = arith.constant 1 : index
    %c3_146 = arith.constant 3 : index
    %c0_147 = arith.constant 0 : index
    %c0_148 = arith.constant 0 : index
    %341 = vector.load %arg8[%c1_145, %c3_146, %c0_147, %c0_148] : memref<2x4x8x32xbf16, #tpu.memory_space<vmem>>, vector<1x1x8x32xbf16>
    %342 = vector.shape_cast %341 : vector<1x1x8x32xbf16> to vector<8x32xbf16>
    %cst_149 = arith.constant dense<0.000000e+00> : vector<16x32xf32>
    %343 = tpu.matmul %340, %342, %cst_149 {dimension_numbers = #tpu.dot_dimension_numbers<[1], [0], [0], [1], [0, 0, 1, 1], [], []>} : vector<16x8xbf16>, vector<8x32xbf16>, vector<16x32xf32> -> vector<16x32xf32>
    %344 = arith.addf %321, %343 : vector<16x32xf32>
    %345 = arith.addf %202, %344 : vector<16x32xf32>
    %c1_150 = arith.constant 1 : index
    %c0_151 = arith.constant 0 : index
    %c0_152 = arith.constant 0 : index
    %346 = vector.load %arg9[%c1_150, %c0_151, %c0_152] : memref<2x1x32xf32, #tpu.memory_space<vmem>>, vector<1x1x32xf32>
    %347 = vector.shape_cast %346 : vector<1x1x32xf32> to vector<1x32xf32>
    %348 = vector.broadcast %347 : vector<1x32xf32> to vector<16x32xf32>
    %349 = arith.addf %345, %348 : vector<16x32xf32>
    %350 = vector.extract_strided_slice %204 {offsets = [1, 0], sizes = [1, 32], strides = [1, 1]} : vector<2x32xf32> to vector<1x32xf32>
    %351 = vector.extract_strided_slice %206 {offsets = [1, 0], sizes = [1, 32], strides = [1, 1]} : vector<2x32xf32> to vector<1x32xf32>
    %cst_153 = arith.constant dense<0.000000e+00> : vector<16xf32>
    %352 = vector.multi_reduction <add>, %349, %cst_153 [1] : vector<16x32xf32> to vector<16xf32>
    %353 = vector.shape_cast %352 : vector<16xf32> to vector<16x1xf32>
    %cst_154 = arith.constant 3.200000e+01 : f32
    %354 = vector.broadcast %cst_154 : f32 to vector<16x1xf32>
    %355 = arith.divf %353, %354 : vector<16x1xf32>
    %356 = vector.broadcast %355 : vector<16x1xf32> to vector<16x32xf32>
    %357 = arith.subf %349, %356 : vector<16x32xf32>
    %358 = arith.mulf %357, %357 : vector<16x32xf32>
    %cst_155 = arith.constant dense<0.000000e+00> : vector<16xf32>
    %359 = vector.multi_reduction <add>, %358, %cst_155 [1] : vector<16x32xf32> to vector<16xf32>
    %360 = vector.shape_cast %359 : vector<16xf32> to vector<16x1xf32>
    %cst_156 = arith.constant 3.200000e+01 : f32
    %361 = vector.broadcast %cst_156 : f32 to vector<16x1xf32>
    %362 = arith.divf %360, %361 : vector<16x1xf32>
    %363 = vector.broadcast %355 : vector<16x1xf32> to vector<16x32xf32>
    %364 = arith.subf %349, %363 : vector<16x32xf32>
    %cst_157 = arith.constant 9.99999974E-6 : f32
    %365 = vector.broadcast %cst_157 : f32 to vector<16x1xf32>
    %366 = arith.addf %362, %365 : vector<16x1xf32>
    %367 = math.rsqrt %366 : vector<16x1xf32>
    %368 = vector.broadcast %367 : vector<16x1xf32> to vector<16x32xf32>
    %369 = arith.mulf %364, %368 : vector<16x32xf32>
    %370 = vector.broadcast %350 : vector<1x32xf32> to vector<16x32xf32>
    %371 = arith.mulf %369, %370 : vector<16x32xf32>
    %372 = vector.broadcast %351 : vector<1x32xf32> to vector<16x32xf32>
    %373 = arith.addf %371, %372 : vector<16x32xf32>
    %374 = arith.truncf %373 : vector<16x32xf32> to vector<16x32xbf16>
    %c1_158 = arith.constant 1 : index
    %c0_159 = arith.constant 0 : index
    %c0_160 = arith.constant 0 : index
    %375 = vector.load %arg10[%c1_158, %c0_159, %c0_160] : memref<2x32x64xbf16, #tpu.memory_space<vmem>>, vector<1x32x64xbf16>
    %376 = vector.shape_cast %375 : vector<1x32x64xbf16> to vector<32x64xbf16>
    %cst_161 = arith.constant dense<0.000000e+00> : vector<16x64xf32>
    %377 = tpu.matmul %374, %376, %cst_161 {dimension_numbers = #tpu.dot_dimension_numbers<[1], [0], [0], [1], [0, 0, 1, 1], [], []>} : vector<16x32xbf16>, vector<32x64xbf16>, vector<16x64xf32> -> vector<16x64xf32>
    %c1_162 = arith.constant 1 : index
    %c0_163 = arith.constant 0 : index
    %c0_164 = arith.constant 0 : index
    %378 = vector.load %arg11[%c1_162, %c0_163, %c0_164] : memref<2x1x64xf32, #tpu.memory_space<vmem>>, vector<1x1x64xf32>
    %379 = vector.shape_cast %378 : vector<1x1x64xf32> to vector<1x64xf32>
    %380 = vector.broadcast %379 : vector<1x64xf32> to vector<16x64xf32>
    %381 = arith.addf %377, %380 : vector<16x64xf32>
    %382 = arith.mulf %381, %381 : vector<16x64xf32>
    %383 = arith.mulf %381, %382 : vector<16x64xf32>
    %cst_165 = arith.constant 4.471500e-02 : f32
    %384 = vector.broadcast %cst_165 : f32 to vector<16x64xf32>
    %385 = arith.mulf %384, %383 : vector<16x64xf32>
    %386 = arith.addf %381, %385 : vector<16x64xf32>
    %cst_166 = arith.constant 0.797884583 : f32
    %387 = vector.broadcast %cst_166 : f32 to vector<16x64xf32>
    %388 = arith.mulf %387, %386 : vector<16x64xf32>
    %389 = math.tanh %388 : vector<16x64xf32>
    %cst_167 = arith.constant 1.000000e+00 : f32
    %390 = vector.broadcast %cst_167 : f32 to vector<16x64xf32>
    %391 = arith.addf %390, %389 : vector<16x64xf32>
    %cst_168 = arith.constant 5.000000e-01 : f32
    %392 = vector.broadcast %cst_168 : f32 to vector<16x64xf32>
    %393 = arith.mulf %392, %391 : vector<16x64xf32>
    %394 = arith.mulf %381, %393 : vector<16x64xf32>
    %395 = arith.truncf %394 : vector<16x64xf32> to vector<16x64xbf16>
    %c1_169 = arith.constant 1 : index
    %c0_170 = arith.constant 0 : index
    %c0_171 = arith.constant 0 : index
    %396 = vector.load %arg12[%c1_169, %c0_170, %c0_171] : memref<2x64x32xbf16, #tpu.memory_space<vmem>>, vector<1x64x32xbf16>
    %397 = vector.shape_cast %396 : vector<1x64x32xbf16> to vector<64x32xbf16>
    %cst_172 = arith.constant dense<0.000000e+00> : vector<16x32xf32>
    %398 = tpu.matmul %395, %397, %cst_172 {dimension_numbers = #tpu.dot_dimension_numbers<[1], [0], [0], [1], [0, 0, 1, 1], [], []>} : vector<16x64xbf16>, vector<64x32xbf16>, vector<16x32xf32> -> vector<16x32xf32>
    %c1_173 = arith.constant 1 : index
    %c0_174 = arith.constant 0 : index
    %c0_175 = arith.constant 0 : index
    %399 = vector.load %arg13[%c1_173, %c0_174, %c0_175] : memref<2x1x32xf32, #tpu.memory_space<vmem>>, vector<1x1x32xf32>
    %400 = vector.shape_cast %399 : vector<1x1x32xf32> to vector<1x32xf32>
    %401 = vector.broadcast %400 : vector<1x32xf32> to vector<16x32xf32>
    %402 = arith.addf %398, %401 : vector<16x32xf32>
    %403 = arith.addf %349, %402 : vector<16x32xf32>
    %c0_176 = arith.constant 0 : index
    %c0_177 = arith.constant 0 : index
    %404 = vector.load %arg14[%c0_176, %c0_177] : memref<1x32xf32, #tpu.memory_space<vmem>>, vector<1x32xf32>
    %c0_178 = arith.constant 0 : index
    %c0_179 = arith.constant 0 : index
    %405 = vector.load %arg15[%c0_178, %c0_179] : memref<1x32xf32, #tpu.memory_space<vmem>>, vector<1x32xf32>
    %cst_180 = arith.constant dense<0.000000e+00> : vector<16xf32>
    %406 = vector.multi_reduction <add>, %403, %cst_180 [1] : vector<16x32xf32> to vector<16xf32>
    %407 = vector.shape_cast %406 : vector<16xf32> to vector<16x1xf32>
    %cst_181 = arith.constant 3.200000e+01 : f32
    %408 = vector.broadcast %cst_181 : f32 to vector<16x1xf32>
    %409 = arith.divf %407, %408 : vector<16x1xf32>
    %410 = vector.broadcast %409 : vector<16x1xf32> to vector<16x32xf32>
    %411 = arith.subf %403, %410 : vector<16x32xf32>
    %412 = arith.mulf %411, %411 : vector<16x32xf32>
    %cst_182 = arith.constant dense<0.000000e+00> : vector<16xf32>
    %413 = vector.multi_reduction <add>, %412, %cst_182 [1] : vector<16x32xf32> to vector<16xf32>
    %414 = vector.shape_cast %413 : vector<16xf32> to vector<16x1xf32>
    %cst_183 = arith.constant 3.200000e+01 : f32
    %415 = vector.broadcast %cst_183 : f32 to vector<16x1xf32>
    %416 = arith.divf %414, %415 : vector<16x1xf32>
    %417 = vector.broadcast %409 : vector<16x1xf32> to vector<16x32xf32>
    %418 = arith.subf %403, %417 : vector<16x32xf32>
    %cst_184 = arith.constant 9.99999974E-6 : f32
    %419 = vector.broadcast %cst_184 : f32 to vector<16x1xf32>
    %420 = arith.addf %416, %419 : vector<16x1xf32>
    %421 = math.rsqrt %420 : vector<16x1xf32>
    %422 = vector.broadcast %421 : vector<16x1xf32> to vector<16x32xf32>
    %423 = arith.mulf %418, %422 : vector<16x32xf32>
    %424 = vector.broadcast %404 : vector<1x32xf32> to vector<16x32xf32>
    %425 = arith.mulf %423, %424 : vector<16x32xf32>
    %426 = vector.broadcast %405 : vector<1x32xf32> to vector<16x32xf32>
    %427 = arith.addf %425, %426 : vector<16x32xf32>
    %c0_185 = arith.constant 0 : index
    %c0_186 = arith.constant 0 : index
    %428 = vector.load %arg16[%c0_185, %c0_186] : memref<16x32xf32, #tpu.memory_space<vmem>>, vector<16x32xf32>
    tpu.vector_store %arg16[%c0_185, %c0_186], %427 {strides = array<i32>} : memref<16x32xf32, #tpu.memory_space<vmem>>, vector<16x32xf32>,
    %c0_187 = arith.constant 0 : index
    %c0_188 = arith.constant 0 : index
    %429 = vector.load %arg2[%c0_187, %c0_188] : memref<16x1xf32, #tpu.memory_space<vmem>>, vector<16x1xf32>
    %430 = vector.extract_strided_slice %427 {offsets = [0, 0], sizes = [8, 32], strides = [1, 1]} : vector<16x32xf32> to vector<8x32xf32>
    %431 = vector.extract_strided_slice %429 {offsets = [0, 0], sizes = [8, 1], strides = [1, 1]} : vector<16x1xf32> to vector<8x1xf32>
    %432 = vector.broadcast %431 : vector<8x1xf32> to vector<8x32xf32>
    %433 = arith.mulf %430, %432 : vector<8x32xf32>
    %cst_189 = arith.constant dense<0.000000e+00> : vector<32xf32>
    %434 = vector.multi_reduction <add>, %433, %cst_189 [0] : vector<8x32xf32> to vector<32xf32>
    %435 = vector.shape_cast %434 : vector<32xf32> to vector<1x32xf32>
    %cst_190 = arith.constant dense<0.000000e+00> : vector<1xf32>
    %436 = vector.multi_reduction <add>, %431, %cst_190 [0] : vector<8x1xf32> to vector<1xf32>
    %437 = vector.shape_cast %436 : vector<1xf32> to vector<1x1xf32>
    %cst_191 = arith.constant 1.000000e+00 : f32
    %438 = vector.broadcast %cst_191 : f32 to vector<1x1xf32>
    %439 = arith.maximumf %437, %438 : vector<1x1xf32>
    %440 = tpu.reciprocal %439 {approx = true} : vector<1x1xf32> -> vector<1x1xf32>
    %441 = vector.broadcast %440 : vector<1x1xf32> to vector<1x32xf32>
    %442 = arith.mulf %435, %441 : vector<1x32xf32>
    %443 = vector.extract_strided_slice %427 {offsets = [8, 0], sizes = [8, 32], strides = [1, 1]} : vector<16x32xf32> to vector<8x32xf32>
    %444 = vector.extract_strided_slice %429 {offsets = [8, 0], sizes = [8, 1], strides = [1, 1]} : vector<16x1xf32> to vector<8x1xf32>
    %445 = vector.broadcast %444 : vector<8x1xf32> to vector<8x32xf32>
    %446 = arith.mulf %443, %445 : vector<8x32xf32>
    %cst_192 = arith.constant dense<0.000000e+00> : vector<32xf32>
    %447 = vector.multi_reduction <add>, %446, %cst_192 [0] : vector<8x32xf32> to vector<32xf32>
    %448 = vector.shape_cast %447 : vector<32xf32> to vector<1x32xf32>
    %cst_193 = arith.constant dense<0.000000e+00> : vector<1xf32>
    %449 = vector.multi_reduction <add>, %444, %cst_193 [0] : vector<8x1xf32> to vector<1xf32>
    %450 = vector.shape_cast %449 : vector<1xf32> to vector<1x1xf32>
    %cst_194 = arith.constant 1.000000e+00 : f32
    %451 = vector.broadcast %cst_194 : f32 to vector<1x1xf32>
    %452 = arith.maximumf %450, %451 : vector<1x1xf32>
    %453 = tpu.reciprocal %452 {approx = true} : vector<1x1xf32> -> vector<1x1xf32>
    %454 = vector.broadcast %453 : vector<1x1xf32> to vector<1x32xf32>
    %455 = arith.mulf %448, %454 : vector<1x32xf32>
    %456 = tpu.concatenate %442, %455 in 1 : vector<1x32xf32>, vector<1x32xf32> -> vector<1x64xf32>
    %c0_195 = arith.constant 0 : index
    %c0_196 = arith.constant 0 : index
    %457 = vector.load %arg17[%c0_195, %c0_196] : memref<1x64xf32, #tpu.memory_space<vmem>>, vector<1x64xf32>
    tpu.vector_store %arg17[%c0_195, %c0_196], %456 {strides = array<i32>} : memref<1x64xf32, #tpu.memory_space<vmem>>, vector<1x64xf32>,
    return
  }
}

</mosaic_0001>

<llo_original>
// kernel: biogpt_forward.1
$region0: #{biogpt_forward.1}
  #allocation0 [shape = 'u32[]', space=smem, size = 0x4, offset = 0x4, fixed_abs, tag = 'smem constant byte address 0x4 - core index']
  #allocation1 [shape = 'u32[144,128]{1,0:T(1,128)}', space=vmem, size = 0x12000, scoped, tag = 'internal scratch']
  %s0 = inlined_call_operand.vmem [shape: f32[16,32], index: 0, kind: input, shape index: {}]
  %s1 = inlined_call_operand.vmem [shape: f32[2,8,16], index: 1, kind: input, shape index: {}]
  %s2 = inlined_call_operand.vmem [shape: f32[16,1], index: 2, kind: input, shape index: {}]
  %s3 = inlined_call_operand.vmem [shape: f32[4,2,8,32], index: 3, kind: input, shape index: {}]
  %s4 = inlined_call_operand.vmem [shape: f32[2,2,32], index: 4, kind: input, shape index: {}]
  %s5 = inlined_call_operand.vmem [shape: f32[2,2,32], index: 5, kind: input, shape index: {}]
  %s6 = inlined_call_operand.vmem [shape: bf16[2,32,96], index: 6, kind: input, shape index: {}]
  %s7 = inlined_call_operand.vmem [shape: f32[2,1,96], index: 7, kind: input, shape index: {}]
  %s8 = inlined_call_operand.vmem [shape: bf16[2,4,8,32], index: 8, kind: input, shape index: {}]
  %s9 = inlined_call_operand.vmem [shape: f32[2,1,32], index: 9, kind: input, shape index: {}]
  %s10 = inlined_call_operand.vmem [shape: bf16[2,32,64], index: 10, kind: input, shape index: {}]
  %s11 = inlined_call_operand.vmem [shape: f32[2,1,64], index: 11, kind: input, shape index: {}]
  %s12 = inlined_call_operand.vmem [shape: bf16[2,64,32], index: 12, kind: input, shape index: {}]
  %s13 = inlined_call_operand.vmem [shape: f32[2,1,32], index: 13, kind: input, shape index: {}]
  %s14 = inlined_call_operand.vmem [shape: f32[1,32], index: 14, kind: input, shape index: {}]
  %s15 = inlined_call_operand.vmem [shape: f32[1,32], index: 15, kind: input, shape index: {}]
  %s16 = inlined_call_operand.hbm [shape: f32[16,32], index: 16, kind: output, shape index: {0}]
  %s17 = inlined_call_operand.vmem [shape: f32[1,64], index: 17, kind: output, shape index: {1}]
  %18 = xla_tuple %s16, %s17
  %s19 = sld [smem:[#allocation0]]
  $region82: #{biogpt_forward.1} parent=0
    _
  %s21 = ssub.s32 1, %s19
  %s22 = scalar_select 0, %s21, %s19
  $region1: #{biogpt_forward.1} parent=0
    #allocation2 [shape = 'u8[8192]{0}', space=vmem, size = 0x2000, scoped, tag = 'output window, operand 0, single buffered']
    #allocation3 [shape = 's32[1]{0}', space=sflag, size = 0x4, scoped, tag = 'scoped memory for biogpt_forward.1']
    %23 = vsyncpa [#allocation3], 0
    // Predicated region
    $region2: #{biogpt_forward.1} parent=1 // pred_check
      _
    $region3: #{biogpt_forward.1} parent=1 // pred_check_branch
      %25 = sbr.rel (0) target = $region5
    $region4: #{biogpt_forward.1} parent=1 // pred_region
      _
    $region5: #{biogpt_forward.1} parent=1 // pred_fallthru
      _
    // Predicated region
    $region6: #{biogpt_forward.1} parent=1 // pred_check
      _
    $region7: #{biogpt_forward.1} parent=1 // pred_check_branch
      %27 = sbr.rel (0) target = $region9
    $region8: #{biogpt_forward.1} parent=1 // pred_region
      _
    $region9: #{biogpt_forward.1} parent=1 // pred_fallthru
      _
    // Predicated region
    $region10: #{biogpt_forward.1} parent=1 // pred_check
      _
    $region11: #{biogpt_forward.1} parent=1 // pred_check_branch
      %29 = sbr.rel (0) target = $region13
    $region12: #{biogpt_forward.1} parent=1 // pred_region
      _
    $region13: #{biogpt_forward.1} parent=1 // pred_fallthru
      _
    // Predicated region
    $region14: #{biogpt_forward.1} parent=1 // pred_check
      _
    $region15: #{biogpt_forward.1} parent=1 // pred_check_branch
      %31 = sbr.rel (0) target = $region17
    $region16: #{biogpt_forward.1} parent=1 // pred_region
      _
    $region17: #{biogpt_forward.1} parent=1 // pred_fallthru
      _
    // Predicated region
    $region18: #{biogpt_forward.1} parent=1 // pred_check
      _
    $region19: #{biogpt_forward.1} parent=1 // pred_check_branch
      %33 = sbr.rel (0) target = $region21
    $region20: #{biogpt_forward.1} parent=1 // pred_region
      _
    $region21: #{biogpt_forward.1} parent=1 // pred_fallthru
      _
    // Predicated region
    $region22: #{biogpt_forward.1} parent=1 // pred_check
      _
    $region23: #{biogpt_forward.1} parent=1 // pred_check_branch
      %35 = sbr.rel (0) target = $region25
    $region24: #{biogpt_forward.1} parent=1 // pred_region
      _
    $region25: #{biogpt_forward.1} parent=1 // pred_fallthru
      _
    // Predicated region
    $region26: #{biogpt_forward.1} parent=1 // pred_check
      _
    $region27: #{biogpt_forward.1} parent=1 // pred_check_branch
      %37 = sbr.rel (0) target = $region29
    $region28: #{biogpt_forward.1} parent=1 // pred_region
      _
    $region29: #{biogpt_forward.1} parent=1 // pred_fallthru
      _
    // Predicated region
    $region30: #{biogpt_forward.1} parent=1 // pred_check
      _
    $region31: #{biogpt_forward.1} parent=1 // pred_check_branch
      %39 = sbr.rel (0) target = $region33
    $region32: #{biogpt_forward.1} parent=1 // pred_region
      _
    $region33: #{biogpt_forward.1} parent=1 // pred_fallthru
      _
    // Predicated region
    $region34: #{biogpt_forward.1} parent=1 // pred_check
      _
    $region35: #{biogpt_forward.1} parent=1 // pred_check_branch
      %41 = sbr.rel (0) target = $region37
    $region36: #{biogpt_forward.1} parent=1 // pred_region
      _
    $region37: #{biogpt_forward.1} parent=1 // pred_fallthru
      _
    // Predicated region
    $region38: #{biogpt_forward.1} parent=1 // pred_check
      _
    $region39: #{biogpt_forward.1} parent=1 // pred_check_branch
      %43 = sbr.rel (0) target = $region41
    $region40: #{biogpt_forward.1} parent=1 // pred_region
      _
    $region41: #{biogpt_forward.1} parent=1 // pred_fallthru
      _
    // Predicated region
    $region42: #{biogpt_forward.1} parent=1 // pred_check
      _
    $region43: #{biogpt_forward.1} parent=1 // pred_check_branch
      %45 = sbr.rel (0) target = $region45
    $region44: #{biogpt_forward.1} parent=1 // pred_region
      _
    $region45: #{biogpt_forward.1} parent=1 // pred_fallthru
      _
    // Predicated region
    $region46: #{biogpt_forward.1} parent=1 // pred_check
      _
    $region47: #{biogpt_forward.1} parent=1 // pred_check_branch
      %47 = sbr.rel (0) target = $region49
    $region48: #{biogpt_forward.1} parent=1 // pred_region
      _
    $region49: #{biogpt_forward.1} parent=1 // pred_fallthru
      _
    // Predicated region
    $region50: #{biogpt_forward.1} parent=1 // pred_check
      _
    $region51: #{biogpt_forward.1} parent=1 // pred_check_branch
      %49 = sbr.rel (0) target = $region53
    $region52: #{biogpt_forward.1} parent=1 // pred_region
      _
    $region53: #{biogpt_forward.1} parent=1 // pred_fallthru
      _
    // Predicated region
    $region54: #{biogpt_forward.1} parent=1 // pred_check
      _
    $region55: #{biogpt_forward.1} parent=1 // pred_check_branch
      %51 = sbr.rel (0) target = $region57
    $region56: #{biogpt_forward.1} parent=1 // pred_region
      _
    $region57: #{biogpt_forward.1} parent=1 // pred_fallthru
      _
    // Predicated region
    $region58: #{biogpt_forward.1} parent=1 // pred_check
      _
    $region59: #{biogpt_forward.1} parent=1 // pred_check_branch
      %53 = sbr.rel (0) target = $region61
    $region60: #{biogpt_forward.1} parent=1 // pred_region
      _
    $region61: #{biogpt_forward.1} parent=1 // pred_fallthru
      _
    // Predicated region
    $region62: #{biogpt_forward.1} parent=1 // pred_check
      _
    $region63: #{biogpt_forward.1} parent=1 // pred_check_branch
      %55 = sbr.rel (0) target = $region65
    $region64: #{biogpt_forward.1} parent=1 // pred_region
      _
    $region65: #{biogpt_forward.1} parent=1 // pred_fallthru
      _
    %v57 = vld [vmem:[%s0] sm:$0xff]
    %v58 = vld [vmem:[%s0 + $0x8] sm:$0xff]
    %v59 = vld [vmem:[%s1] sm:$0xff]
    %v60 = vld [vmem:[%s1 + $0x8] sm:$0xff]
    %v61 = vld [vmem:[%s4] sm:$0x3]
    %v62 = vld [vmem:[%s5] sm:$0x3]
    %vm63 = vcmask 261120
    %v64 = vsel %vm63, %v57, 0.0
    %65 = vadd.xlane.f32.xlu0 %v64
    %v66 = vpop.xlane.xlu0 %65
    %v67 = vsel %vm63, %v58, 0.0
    %68 = vadd.xlane.f32.xlu0 %v67
    %v69 = vpop.xlane.xlu0 %68
    %v70 = vrcp.pop 32.0
    %v71 = vmul.f32 %v66, %v70
    %v72 = vmul.f32 %v69, %v70
    %v73 = vsub.f32 %v57, %v71
    %v74 = vsub.f32 %v58, %v72
    %v75 = vmul.f32 %v73, %v73
    %v76 = vmul.f32 %v74, %v74
    %v77 = vsel %vm63, %v75, 0.0
    %78 = vadd.xlane.f32.xlu0 %v77
    %v79 = vpop.xlane.xlu0 %78
    %v80 = vsel %vm63, %v76, 0.0
    %81 = vadd.xlane.f32.xlu0 %v80
    %v82 = vpop.xlane.xlu0 %81
    %v83 = vmul.f32 %v79, %v70
    %v84 = vmul.f32 %v82, %v70
    %v85 = vadd.f32 %v83, 1e-05
    %v86 = vadd.f32 %v84, 1e-05
    %v87 = vrsqrt.pop %v85
    %v88 = vrsqrt.pop %v86
    %v89 = vmul.f32 %v73, %v87
    %v90 = vmul.f32 %v74, %v88
    %v91 = vlaneseq
    %v92 = vshrl.u32 %v91, 7
    %v93 = vsub.s32 0, %v92
    %v94 = vrot.slane %v61, %v93
    %v95 = vmul.f32 %v89, %v94
    %v96 = vmul.f32 %v90, %v94
    %v97 = vlaneseq
    %v98 = vshrl.u32 %v97, 7
    %v99 = vsub.s32 0, %v98
    %v100 = vrot.slane %v62, %v99
    %v101 = vadd.f32 %v95, %v100
    %v102 = vadd.f32 %v96, %v100
    %v103 = vpack.c.bf16 %v102, %v101
    %v104 = vld [vmem:[%s6] sm:$0xf]
    %v105 = vld [vmem:[%s6 + $0x4] sm:$0xf]
    %v106 = vld [vmem:[%s6 + $0x8] sm:$0xf]
    %v107 = vld [vmem:[%s6 + $0xc] sm:$0xf]
    %v108 = vld [vmem:[%s7] sm:$0x1]
    %v110 = vlaneseq
    %v111 = vshrl.u32 %v110, 7
    %v112 = vsub.s32 0, %v111
    %v113 = vrot.slane %v108, %v112
    %v119 = vunpack.c.l.b16 %v104
    %v120 = vunpack.c.l.b16 %v105
    %v121 = vunpack.c.l.b16 %v106
    %v122 = vunpack.c.l.b16 %v107
    %v123 = vpack.c.b16 %v120, %v119
    %v124 = vpack.c.b16 %v122, %v121
    %v128 = vsel %vm63, %v103, 0
    %130 = vmatprep.subr.bf16.mxu0 0
    %131 = vmatpush1.bf16.msra.mxu0 0
    %132 = vmatprep.subr.bf16.mxu0 0
    %133 = vmatpush1.bf16.msra.mxu0 0
    %134 = vmatprep.subr.bf16.mxu0 0
    %135 = vmatpush1.bf16.msra.mxu0 0
    %136 = vmatprep.subr.bf16.mxu0 0
    %137 = vmatpush1.bf16.msra.mxu0 0
    %138 = vmatprep.subr.bf16.mxu0 0
    %139 = vmatpush1.bf16.msra.mxu0 0
    %140 = vmatprep.subr.bf16.mxu0 0
    %141 = vmatpush1.bf16.msra.mxu0 0
    %142 = vmatprep.subr.bf16.mxu0 0
    %143 = vmatpush1.bf16.msra.mxu0 %v124
    %144 = vmatprep.subr.bf16.mxu0 0
    %145 = vmatpush1.bf16.msra.mxu0 %v123
    %146 = vmatprep.subr.bf16.mxu0 0
    %147 = vmatpush2.bf16.msra.mxu0 0
    %148 = vmatprep.subr.bf16.mxu0 0
    %149 = vmatpush2.bf16.msra.mxu0 0
    %150 = vmatprep.subr.bf16.mxu0 0
    %151 = vmatpush2.bf16.msra.mxu0 0
    %152 = vmatprep.subr.bf16.mxu0 0
    %153 = vmatpush2.bf16.msra.mxu0 0
    %154 = vmatprep.subr.bf16.mxu0 0
    %155 = vmatpush2.bf16.msra.mxu0 0
    %156 = vmatprep.subr.bf16.mxu0 0
    %157 = vmatpush2.bf16.msra.mxu0 0
    %158 = vmatprep.subr.bf16.mxu0 0
    %159 = vmatpush2.bf16.msra.mxu0 0
    %160 = vmatprep.subr.bf16.mxu0 0
    %161 = vmatpush2.bf16.msra.mxu0 0
    %162 = vmatprep.mubr.bf16.mxu0 0
    %163 = vmatmul.mubr.bf16.gmra.mxu0 %v128
    %v164 = vpop.f32.mrf.mxu0
    %v165 = vadd.f32 %v113, %v164
    %v166 = vpop.f32.mrf.mxu0
    %v167 = vpop.f32.mrf.mxu0
    %v168 = vadd.f32 %v113, %v167
    %v169 = vpop.f32.mrf.mxu0
    %170 = vdwg.mxu0
    %v171 = vld [vmem:[%s3] sm:$0xff]
    %v172 = vld [vmem:[%s3 + $0x8] sm:$0xff]
    %s173 = scalar_lea.vmem %s3, 16
    %v174 = vld [vmem:[%s173] sm:$0xff]
    %v175 = vld [vmem:[%s173 + $0x8] sm:$0xff]
    %v176 = vpack.c.bf16 %v165, %v165
    %v177 = vpack.c.bf16 %v168, %v168
    %180 = vrot.lane.b32.xlu0 %v165, 96
    %v181 = vpop.permute.xlu0 %180
    %182 = vrot.lane.b32.xlu0 %v168, 96
    %v183 = vpop.permute.xlu0 %182
    %v186 = vpack.c.bf16 %v181, %v171
    %v187 = vpack.c.bf16 %v183, %v172
    %188 = vrot.lane.b32.xlu0 %v165, 64
    %v189 = vpop.permute.xlu0 %188
    %190 = vrot.lane.b32.xlu0 %v168, 64
    %v191 = vpop.permute.xlu0 %190
    %v194 = vpack.c.bf16 %v189, %v174
    %v195 = vpack.c.bf16 %v191, %v175
    %vm196 = vcmask 64512
    %v198 = vsel %vm196, %v176, 0
    %v201 = vsel %vm196, %v186, 0
    %203 = vmatprep.subr.bf16.mxu0 0
    %204 = vmatpush1.bf16.xpose.msra.mxu0 0
    %205 = vmatprep.subr.bf16.mxu0 0
    %206 = vmatpush1.bf16.xpose.msra.mxu0 0
    %207 = vmatprep.subr.bf16.mxu0 0
    %208 = vmatpush1.bf16.xpose.msra.mxu0 0
    %209 = vmatprep.subr.bf16.mxu0 0
    %210 = vmatpush1.bf16.xpose.msra.mxu0 0
    %211 = vmatprep.subr.bf16.mxu0 0
    %212 = vmatpush1.bf16.xpose.msra.mxu0 0
    %213 = vmatprep.subr.bf16.mxu0 0
    %214 = vmatpush1.bf16.xpose.msra.mxu0 0
    %215 = vmatprep.subr.bf16.mxu0 0
    %216 = vmatpush1.bf16.xpose.msra.mxu0 0
    %217 = vmatprep.subr.bf16.mxu0 0
    %218 = vmatpush1.bf16.xpose.msra.mxu0 %v201
    %219 = vmatprep.subr.bf16.mxu0 0
    %220 = vmatpush2.bf16.xpose.msra.mxu0 0
    %221 = vmatprep.subr.bf16.mxu0 0
    %222 = vmatpush2.bf16.xpose.msra.mxu0 0
    %223 = vmatprep.subr.bf16.mxu0 0
    %224 = vmatpush2.bf16.xpose.msra.mxu0 0
    %225 = vmatprep.subr.bf16.mxu0 0
    %226 = vmatpush2.bf16.xpose.msra.mxu0 0
    %227 = vmatprep.subr.bf16.mxu0 0
    %228 = vmatpush2.bf16.xpose.msra.mxu0 0
    %229 = vmatprep.subr.bf16.mxu0 0
    %230 = vmatpush2.bf16.xpose.msra.mxu0 0
    %231 = vmatprep.subr.bf16.mxu0 0
    %232 = vmatpush2.bf16.xpose.msra.mxu0 0
    %233 = vmatprep.subr.bf16.mxu0 0
    %234 = vmatpush2.bf16.xpose.msra.mxu0 0
    %235 = vmatprep.mubr.bf16.mxu0 0
    %236 = vmatmul.mubr.bf16.gmra.mxu0 %v198
    %v237 = vpop.f32.mrf.mxu0
    %v238 = vadd.f32 %v59, %v237
    %v239 = vpop.f32.mrf.mxu0
    %v240 = vpop.f32.mrf.mxu0
    %v241 = vpop.f32.mrf.mxu0
    %242 = vdwg.mxu0
    %v244 = vsel %vm196, %v177, 0
    %v247 = vsel %vm196, %v187, 0
    %249 = vmatprep.subr.bf16.mxu0 0
    %250 = vmatpush1.bf16.xpose.msra.mxu0 0
    %251 = vmatprep.subr.bf16.mxu0 0
    %252 = vmatpush1.bf16.xpose.msra.mxu0 0
    %253 = vmatprep.subr.bf16.mxu0 0
    %254 = vmatpush1.bf16.xpose.msra.mxu0 0
    %255 = vmatprep.subr.bf16.mxu0 0
    %256 = vmatpush1.bf16.xpose.msra.mxu0 0
    %257 = vmatprep.subr.bf16.mxu0 0
    %258 = vmatpush1.bf16.xpose.msra.mxu0 0
    %259 = vmatprep.subr.bf16.mxu0 0
    %260 = vmatpush1.bf16.xpose.msra.mxu0 0
    %261 = vmatprep.subr.bf16.mxu0 0
    %262 = vmatpush1.bf16.xpose.msra.mxu0 0
    %263 = vmatprep.subr.bf16.mxu0 0
    %264 = vmatpush1.bf16.xpose.msra.mxu0 %v247
    %265 = vmatprep.subr.bf16.mxu0 0
    %266 = vmatpush2.bf16.xpose.msra.mxu0 0
    %267 = vmatprep.subr.bf16.mxu0 0
    %268 = vmatpush2.bf16.xpose.msra.mxu0 0
    %269 = vmatprep.subr.bf16.mxu0 0
    %270 = vmatpush2.bf16.xpose.msra.mxu0 0
    %271 = vmatprep.subr.bf16.mxu0 0
    %272 = vmatpush2.bf16.xpose.msra.mxu0 0
    %273 = vmatprep.subr.bf16.mxu0 0
    %274 = vmatpush2.bf16.xpose.msra.mxu0 0
    %275 = vmatprep.subr.bf16.mxu0 0
    %276 = vmatpush2.bf16.xpose.msra.mxu0 0
    %277 = vmatprep.subr.bf16.mxu0 0
    %278 = vmatpush2.bf16.xpose.msra.mxu0 0
    %279 = vmatprep.subr.bf16.mxu0 0
    %280 = vmatpush2.bf16.xpose.msra.mxu0 0
    %281 = vmatprep.mubr.bf16.mxu0 0
    %282 = vmatmul.mubr.bf16.gmra.mxu0 %v244
    %v283 = vpop.f32.mrf.mxu0
    %v284 = vadd.f32 %v60, %v283
    %v285 = vpop.f32.mrf.mxu0
    %v286 = vpop.f32.mrf.mxu0
    %v287 = vpop.f32.mrf.mxu0
    %288 = vdwg.mxu0
    %vm289 = vcmask 130048
    %v290 = vsel %vm289, %v238, -inf
    %291 = vmax.xlane.f32.xlu0 %v290
    %v292 = vpop.xlane.xlu0 %291
    %v293 = vsel %vm289, %v284, -inf
    %294 = vmax.xlane.f32.xlu0 %v293
    %v295 = vpop.xlane.xlu0 %294
    %v296 = vsub.f32 %v238, %v292
    %v297 = vsub.f32 %v284, %v295
    %v298 = vmul.f32 %v296, 1.442695
    %v299 = vpow.pop %v298
    %v300 = vmul.f32 %v297, 1.442695
    %v301 = vpow.pop %v300
    %v302 = vsel %vm289, %v299, 0.0
    %303 = vadd.xlane.f32.xlu0 %v302
    %v304 = vpop.xlane.xlu0 %303
    %v305 = vsel %vm289, %v301, 0.0
    %306 = vadd.xlane.f32.xlu0 %v305
    %v307 = vpop.xlane.xlu0 %306
    %v308 = vrcp.pop %v304
    %v309 = vrcp.pop %v307
    %v310 = vmul.f32 %v299, %v308
    %v311 = vmul.f32 %v301, %v309
    %v312 = vpack.c.bf16 %v310, %v310
    %v313 = vpack.c.bf16 %v311, %v311
    %v315 = vsel %vm289, %v312, 0
    %317 = vmatprep.subr.bf16.mxu0 0
    %318 = vmatpush1.bf16.msra.mxu0 0
    %319 = vmatprep.subr.bf16.mxu0 0
    %320 = vmatpush1.bf16.msra.mxu0 0
    %321 = vmatprep.subr.bf16.mxu0 0
    %322 = vmatpush1.bf16.msra.mxu0 0
    %323 = vmatprep.subr.bf16.mxu0 0
    %324 = vmatpush1.bf16.msra.mxu0 0
    %325 = vmatprep.subr.bf16.mxu0 0
    %326 = vmatpush1.bf16.msra.mxu0 0
    %327 = vmatprep.subr.bf16.mxu0 0
    %328 = vmatpush1.bf16.msra.mxu0 0
    %329 = vmatprep.subr.bf16.mxu0 0
    %330 = vmatpush1.bf16.msra.mxu0 0
    %331 = vmatprep.subr.bf16.mxu0 0
    %332 = vmatpush1.bf16.msra.mxu0 %v194
    %333 = vmatprep.subr.bf16.mxu0 0
    %334 = vmatpush2.bf16.msra.mxu0 0
    %335 = vmatprep.subr.bf16.mxu0 0
    %336 = vmatpush2.bf16.msra.mxu0 0
    %337 = vmatprep.subr.bf16.mxu0 0
    %338 = vmatpush2.bf16.msra.mxu0 0
    %339 = vmatprep.subr.bf16.mxu0 0
    %340 = vmatpush2.bf16.msra.mxu0 0
    %341 = vmatprep.subr.bf16.mxu0 0
    %342 = vmatpush2.bf16.msra.mxu0 0
    %343 = vmatprep.subr.bf16.mxu0 0
    %344 = vmatpush2.bf16.msra.mxu0 0
    %345 = vmatprep.subr.bf16.mxu0 0
    %346 = vmatpush2.bf16.msra.mxu0 0
    %347 = vmatprep.subr.bf16.mxu0 0
    %348 = vmatpush2.bf16.msra.mxu0 0
    %349 = vmatprep.mubr.bf16.mxu0 0
    %350 = vmatmul.mubr.bf16.gmra.mxu0 %v315
    %v351 = vpop.f32.mrf.mxu0
    %v352 = vadd.f32 0.0, %v351
    %v353 = vpop.f32.mrf.mxu0
    %v354 = vpop.f32.mrf.mxu0
    %v355 = vpop.f32.mrf.mxu0
    %356 = vdwg.mxu0
    %v358 = vsel %vm289, %v313, 0
    %360 = vmatprep.subr.bf16.mxu0 0
    %361 = vmatpush1.bf16.msra.mxu0 0
    %362 = vmatprep.subr.bf16.mxu0 0
    %363 = vmatpush1.bf16.msra.mxu0 0
    %364 = vmatprep.subr.bf16.mxu0 0
    %365 = vmatpush1.bf16.msra.mxu0 0
    %366 = vmatprep.subr.bf16.mxu0 0
    %367 = vmatpush1.bf16.msra.mxu0 0
    %368 = vmatprep.subr.bf16.mxu0 0
    %369 = vmatpush1.bf16.msra.mxu0 0
    %370 = vmatprep.subr.bf16.mxu0 0
    %371 = vmatpush1.bf16.msra.mxu0 0
    %372 = vmatprep.subr.bf16.mxu0 0
    %373 = vmatpush1.bf16.msra.mxu0 0
    %374 = vmatprep.subr.bf16.mxu0 0
    %375 = vmatpush1.bf16.msra.mxu0 %v195
    %376 = vmatprep.subr.bf16.mxu0 0
    %377 = vmatpush2.bf16.msra.mxu0 0
    %378 = vmatprep.subr.bf16.mxu0 0
    %379 = vmatpush2.bf16.msra.mxu0 0
    %380 = vmatprep.subr.bf16.mxu0 0
    %381 = vmatpush2.bf16.msra.mxu0 0
    %382 = vmatprep.subr.bf16.mxu0 0
    %383 = vmatpush2.bf16.msra.mxu0 0
    %384 = vmatprep.subr.bf16.mxu0 0
    %385 = vmatpush2.bf16.msra.mxu0 0
    %386 = vmatprep.subr.bf16.mxu0 0
    %387 = vmatpush2.bf16.msra.mxu0 0
    %388 = vmatprep.subr.bf16.mxu0 0
    %389 = vmatpush2.bf16.msra.mxu0 0
    %390 = vmatprep.subr.bf16.mxu0 0
    %391 = vmatpush2.bf16.msra.mxu0 0
    %392 = vmatprep.mubr.bf16.mxu0 0
    %393 = vmatmul.mubr.bf16.gmra.mxu0 %v358
    %v394 = vpop.f32.mrf.mxu0
    %v395 = vadd.f32 0.0, %v394
    %v396 = vpop.f32.mrf.mxu0
    %v397 = vpop.f32.mrf.mxu0
    %v398 = vpop.f32.mrf.mxu0
    %399 = vdwg.mxu0
    %v400 = vpack.c.bf16 %v395, %v352
    %v401 = vld [vmem:[%s8] sm:$0xf]
    %403 = vrot.lane.b32.xlu0 %v176, 120
    %v404 = vpop.permute.xlu0 %403
    %406 = vrot.lane.b32.xlu0 %v186, 120
    %v407 = vpop.permute.xlu0 %406
    %v409 = vsel %vm196, %v404, 0
    %v412 = vsel %vm196, %v407, 0
    %414 = vmatprep.subr.bf16.mxu0 0
    %415 = vmatpush1.bf16.xpose.msra.mxu0 0
    %416 = vmatprep.subr.bf16.mxu0 0
    %417 = vmatpush1.bf16.xpose.msra.mxu0 0
    %418 = vmatprep.subr.bf16.mxu0 0
    %419 = vmatpush1.bf16.xpose.msra.mxu0 0
    %420 = vmatprep.subr.bf16.mxu0 0
    %421 = vmatpush1.bf16.xpose.msra.mxu0 0
    %422 = vmatprep.subr.bf16.mxu0 0
    %423 = vmatpush1.bf16.xpose.msra.mxu0 0
    %424 = vmatprep.subr.bf16.mxu0 0
    %425 = vmatpush1.bf16.xpose.msra.mxu0 0
    %426 = vmatprep.subr.bf16.mxu0 0
    %427 = vmatpush1.bf16.xpose.msra.mxu0 0
    %428 = vmatprep.subr.bf16.mxu0 0
    %429 = vmatpush1.bf16.xpose.msra.mxu0 %v412
    %430 = vmatprep.subr.bf16.mxu0 0
    %431 = vmatpush2.bf16.xpose.msra.mxu0 0
    %432 = vmatprep.subr.bf16.mxu0 0
    %433 = vmatpush2.bf16.xpose.msra.mxu0 0
    %434 = vmatprep.subr.bf16.mxu0 0
    %435 = vmatpush2.bf16.xpose.msra.mxu0 0
    %436 = vmatprep.subr.bf16.mxu0 0
    %437 = vmatpush2.bf16.xpose.msra.mxu0 0
    %438 = vmatprep.subr.bf16.mxu0 0
    %439 = vmatpush2.bf16.xpose.msra.mxu0 0
    %440 = vmatprep.subr.bf16.mxu0 0
    %441 = vmatpush2.bf16.xpose.msra.mxu0 0
    %442 = vmatprep.subr.bf16.mxu0 0
    %443 = vmatpush2.bf16.xpose.msra.mxu0 0
    %444 = vmatprep.subr.bf16.mxu0 0
    %445 = vmatpush2.bf16.xpose.msra.mxu0 0
    %446 = vmatprep.mubr.bf16.mxu0 0
    %447 = vmatmul.mubr.bf16.gmra.mxu0 %v409
    %v448 = vpop.f32.mrf.mxu0
    %v449 = vadd.f32 %v59, %v448
    %v450 = vpop.f32.mrf.mxu0
    %v451 = vpop.f32.mrf.mxu0
    %v452 = vpop.f32.mrf.mxu0
    %453 = vdwg.mxu0
    %455 = vrot.lane.b32.xlu0 %v177, 120
    %v456 = vpop.permute.xlu0 %455
    %458 = vrot.lane.b32.xlu0 %v187, 120
    %v459 = vpop.permute.xlu0 %458
    %v461 = vsel %vm196, %v456, 0
    %v464 = vsel %vm196, %v459, 0
    %466 = vmatprep.subr.bf16.mxu0 0
    %467 = vmatpush1.bf16.xpose.msra.mxu0 0
    %468 = vmatprep.subr.bf16.mxu0 0
    %469 = vmatpush1.bf16.xpose.msra.mxu0 0
    %470 = vmatprep.subr.bf16.mxu0 0
    %471 = vmatpush1.bf16.xpose.msra.mxu0 0
    %472 = vmatprep.subr.bf16.mxu0 0
    %473 = vmatpush1.bf16.xpose.msra.mxu0 0
    %474 = vmatprep.subr.bf16.mxu0 0
    %475 = vmatpush1.bf16.xpose.msra.mxu0 0
    %476 = vmatprep.subr.bf16.mxu0 0
    %477 = vmatpush1.bf16.xpose.msra.mxu0 0
    %478 = vmatprep.subr.bf16.mxu0 0
    %479 = vmatpush1.bf16.xpose.msra.mxu0 0
    %480 = vmatprep.subr.bf16.mxu0 0
    %481 = vmatpush1.bf16.xpose.msra.mxu0 %v464
    %482 = vmatprep.subr.bf16.mxu0 0
    %483 = vmatpush2.bf16.xpose.msra.mxu0 0
    %484 = vmatprep.subr.bf16.mxu0 0
    %485 = vmatpush2.bf16.xpose.msra.mxu0 0
    %486 = vmatprep.subr.bf16.mxu0 0
    %487 = vmatpush2.bf16.xpose.msra.mxu0 0
    %488 = vmatprep.subr.bf16.mxu0 0
    %489 = vmatpush2.bf16.xpose.msra.mxu0 0
    %490 = vmatprep.subr.bf16.mxu0 0
    %491 = vmatpush2.bf16.xpose.msra.mxu0 0
    %492 = vmatprep.subr.bf16.mxu0 0
    %493 = vmatpush2.bf16.xpose.msra.mxu0 0
    %494 = vmatprep.subr.bf16.mxu0 0
    %495 = vmatpush2.bf16.xpose.msra.mxu0 0
    %496 = vmatprep.subr.bf16.mxu0 0
    %497 = vmatpush2.bf16.xpose.msra.mxu0 0
    %498 = vmatprep.mubr.bf16.mxu0 0
    %499 = vmatmul.mubr.bf16.gmra.mxu0 %v461
    %v500 = vpop.f32.mrf.mxu0
    %v501 = vadd.f32 %v60, %v500
    %v502 = vpop.f32.mrf.mxu0
    %v503 = vpop.f32.mrf.mxu0
    %v504 = vpop.f32.mrf.mxu0
    %505 = vdwg.mxu0
    %v506 = vsel %vm289, %v449, -inf
    %507 = vmax.xlane.f32.xlu0 %v506
    %v508 = vpop.xlane.xlu0 %507
    %v509 = vsel %vm289, %v501, -inf
    %510 = vmax.xlane.f32.xlu0 %v509
    %v511 = vpop.xlane.xlu0 %510
    %v512 = vsub.f32 %v449, %v508
    %v513 = vsub.f32 %v501, %v511
    %v514 = vmul.f32 %v512, 1.442695
    %v515 = vpow.pop %v514
    %v516 = vmul.f32 %v513, 1.442695
    %v517 = vpow.pop %v516
    %v518 = vsel %vm289, %v515, 0.0
    %519 = vadd.xlane.f32.xlu0 %v518
    %v520 = vpop.xlane.xlu0 %519
    %v521 = vsel %vm289, %v517, 0.0
    %522 = vadd.xlane.f32.xlu0 %v521
    %v523 = vpop.xlane.xlu0 %522
    %v524 = vrcp.pop %v520
    %v525 = vrcp.pop %v523
    %v526 = vmul.f32 %v515, %v524
    %v527 = vmul.f32 %v517, %v525
    %v528 = vpack.c.bf16 %v526, %v526
    %v529 = vpack.c.bf16 %v527, %v527
    %531 = vrot.lane.b32.xlu0 %v194, 120
    %v532 = vpop.permute.xlu0 %531
    %v535 = vsel %vm289, %v528, 0
    %537 = vmatprep.subr.bf16.mxu0 0
    %538 = vmatpush1.bf16.msra.mxu0 0
    %539 = vmatprep.subr.bf16.mxu0 0
    %540 = vmatpush1.bf16.msra.mxu0 0
    %541 = vmatprep.subr.bf16.mxu0 0
    %542 = vmatpush1.bf16.msra.mxu0 0
    %543 = vmatprep.subr.bf16.mxu0 0
    %544 = vmatpush1.bf16.msra.mxu0 0
    %545 = vmatprep.subr.bf16.mxu0 0
    %546 = vmatpush1.bf16.msra.mxu0 0
    %547 = vmatprep.subr.bf16.mxu0 0
    %548 = vmatpush1.bf16.msra.mxu0 0
    %549 = vmatprep.subr.bf16.mxu0 0
    %550 = vmatpush1.bf16.msra.mxu0 0
    %551 = vmatprep.subr.bf16.mxu0 0
    %552 = vmatpush1.bf16.msra.mxu0 %v532
    %553 = vmatprep.subr.bf16.mxu0 0
    %554 = vmatpush2.bf16.msra.mxu0 0
    %555 = vmatprep.subr.bf16.mxu0 0
    %556 = vmatpush2.bf16.msra.mxu0 0
    %557 = vmatprep.subr.bf16.mxu0 0
    %558 = vmatpush2.bf16.msra.mxu0 0
    %559 = vmatprep.subr.bf16.mxu0 0
    %560 = vmatpush2.bf16.msra.mxu0 0
    %561 = vmatprep.subr.bf16.mxu0 0
    %562 = vmatpush2.bf16.msra.mxu0 0
    %563 = vmatprep.subr.bf16.mxu0 0
    %564 = vmatpush2.bf16.msra.mxu0 0
    %565 = vmatprep.subr.bf16.mxu0 0
    %566 = vmatpush2.bf16.msra.mxu0 0
    %567 = vmatprep.subr.bf16.mxu0 0
    %568 = vmatpush2.bf16.msra.mxu0 0
    %569 = vmatprep.mubr.bf16.mxu0 0
    %570 = vmatmul.mubr.bf16.gmra.mxu0 %v535
    %v571 = vpop.f32.mrf.mxu0
    %v572 = vadd.f32 0.0, %v571
    %v573 = vpop.f32.mrf.mxu0
    %v574 = vpop.f32.mrf.mxu0
    %v575 = vpop.f32.mrf.mxu0
    %576 = vdwg.mxu0
    %578 = vrot.lane.b32.xlu0 %v195, 120
    %v579 = vpop.permute.xlu0 %578
    %v582 = vsel %vm289, %v529, 0
    %584 = vmatprep.subr.bf16.mxu0 0
    %585 = vmatpush1.bf16.msra.mxu0 0
    %586 = vmatprep.subr.bf16.mxu0 0
    %587 = vmatpush1.bf16.msra.mxu0 0
    %588 = vmatprep.subr.bf16.mxu0 0
    %589 = vmatpush1.bf16.msra.mxu0 0
    %590 = vmatprep.subr.bf16.mxu0 0
    %591 = vmatpush1.bf16.msra.mxu0 0
    %592 = vmatprep.subr.bf16.mxu0 0
    %593 = vmatpush1.bf16.msra.mxu0 0
    %594 = vmatprep.subr.bf16.mxu0 0
    %595 = vmatpush1.bf16.msra.mxu0 0
    %596 = vmatprep.subr.bf16.mxu0 0
    %597 = vmatpush1.bf16.msra.mxu0 0
    %598 = vmatprep.subr.bf16.mxu0 0
    %599 = vmatpush1.bf16.msra.mxu0 %v579
    %600 = vmatprep.subr.bf16.mxu0 0
    %601 = vmatpush2.bf16.msra.mxu0 0
    %602 = vmatprep.subr.bf16.mxu0 0
    %603 = vmatpush2.bf16.msra.mxu0 0
    %604 = vmatprep.subr.bf16.mxu0 0
    %605 = vmatpush2.bf16.msra.mxu0 0
    %606 = vmatprep.subr.bf16.mxu0 0
    %607 = vmatpush2.bf16.msra.mxu0 0
    %608 = vmatprep.subr.bf16.mxu0 0
    %609 = vmatpush2.bf16.msra.mxu0 0
    %610 = vmatprep.subr.bf16.mxu0 0
    %611 = vmatpush2.bf16.msra.mxu0 0
    %612 = vmatprep.subr.bf16.mxu0 0
    %613 = vmatpush2.bf16.msra.mxu0 0
    %614 = vmatprep.subr.bf16.mxu0 0
    %615 = vmatpush2.bf16.msra.mxu0 0
    %616 = vmatprep.mubr.bf16.mxu0 0
    %617 = vmatmul.mubr.bf16.gmra.mxu0 %v582
    %v618 = vpop.f32.mrf.mxu0
    %v619 = vadd.f32 0.0, %v618
    %v620 = vpop.f32.mrf.mxu0
    %v621 = vpop.f32.mrf.mxu0
    %v622 = vpop.f32.mrf.mxu0
    %623 = vdwg.mxu0
    %v624 = vpack.c.bf16 %v619, %v572
    %s625 = scalar_lea.vmem %s8, 4
    %v626 = vld [vmem:[%s625] sm:$0xf]
    %v628 = vsel %vm196, %v624, 0
    %vm630 = vcmask 1043456
    %v632 = vsel %vm630, %v626, 0
    %634 = vmatprep.subr.bf16.mxu0 0
    %635 = vmatpush1.bf16.msra.mxu0 0
    %636 = vmatprep.subr.bf16.mxu0 0
    %637 = vmatpush1.bf16.msra.mxu0 0
    %638 = vmatprep.subr.bf16.mxu0 0
    %639 = vmatpush1.bf16.msra.mxu0 0
    %640 = vmatprep.subr.bf16.mxu0 0
    %641 = vmatpush1.bf16.msra.mxu0 0
    %642 = vmatprep.subr.bf16.mxu0 0
    %643 = vmatpush1.bf16.msra.mxu0 0
    %644 = vmatprep.subr.bf16.mxu0 0
    %645 = vmatpush1.bf16.msra.mxu0 0
    %646 = vmatprep.subr.bf16.mxu0 0
    %647 = vmatpush1.bf16.msra.mxu0 0
    %648 = vmatprep.subr.bf16.mxu0 0
    %649 = vmatpush1.bf16.msra.mxu0 %v632
    %650 = vmatprep.subr.bf16.mxu0 0
    %651 = vmatpush2.bf16.msra.mxu0 0
    %652 = vmatprep.subr.bf16.mxu0 0
    %653 = vmatpush2.bf16.msra.mxu0 0
    %654 = vmatprep.subr.bf16.mxu0 0
    %655 = vmatpush2.bf16.msra.mxu0 0
    %656 = vmatprep.subr.bf16.mxu0 0
    %657 = vmatpush2.bf16.msra.mxu0 0
    %658 = vmatprep.subr.bf16.mxu0 0
    %659 = vmatpush2.bf16.msra.mxu0 0
    %660 = vmatprep.subr.bf16.mxu0 0
    %661 = vmatpush2.bf16.msra.mxu0 0
    %662 = vmatprep.subr.bf16.mxu0 0
    %663 = vmatpush2.bf16.msra.mxu0 0
    %664 = vmatprep.subr.bf16.mxu0 0
    %665 = vmatpush2.bf16.msra.mxu0 0
    %666 = vmatprep.mubr.bf16.mxu0 0
    %667 = vmatmul.mubr.bf16.gmra.mxu0 %v628
    %v668 = vpop.f32.mrf.mxu0
    %v669 = vadd.f32 0.0, %v668
    %v670 = vpop.f32.mrf.mxu0
    %v671 = vpop.f32.mrf.mxu0
    %v672 = vadd.f32 0.0, %v671
    %v673 = vpop.f32.mrf.mxu0
    %674 = vdwg.mxu0
    %v676 = vsel %vm196, %v400, 0
    %v679 = vsel %vm630, %v401, 0
    %681 = vmatprep.subr.bf16.mxu0 0
    %682 = vmatpush1.bf16.msra.mxu0 0
    %683 = vmatprep.subr.bf16.mxu0 0
    %684 = vmatpush1.bf16.msra.mxu0 0
    %685 = vmatprep.subr.bf16.mxu0 0
    %686 = vmatpush1.bf16.msra.mxu0 0
    %687 = vmatprep.subr.bf16.mxu0 0
    %688 = vmatpush1.bf16.msra.mxu0 0
    %689 = vmatprep.subr.bf16.mxu0 0
    %690 = vmatpush1.bf16.msra.mxu0 0
    %691 = vmatprep.subr.bf16.mxu0 0
    %692 = vmatpush1.bf16.msra.mxu0 0
    %693 = vmatprep.subr.bf16.mxu0 0
    %694 = vmatpush1.bf16.msra.mxu0 0
    %695 = vmatprep.subr.bf16.mxu0 0
    %696 = vmatpush1.bf16.msra.mxu0 %v679
    %697 = vmatprep.subr.bf16.mxu0 0
    %698 = vmatpush2.bf16.msra.mxu0 0
    %699 = vmatprep.subr.bf16.mxu0 0
    %700 = vmatpush2.bf16.msra.mxu0 0
    %701 = vmatprep.subr.bf16.mxu0 0
    %702 = vmatpush2.bf16.msra.mxu0 0
    %703 = vmatprep.subr.bf16.mxu0 0
    %704 = vmatpush2.bf16.msra.mxu0 0
    %705 = vmatprep.subr.bf16.mxu0 0
    %706 = vmatpush2.bf16.msra.mxu0 0
    %707 = vmatprep.subr.bf16.mxu0 0
    %708 = vmatpush2.bf16.msra.mxu0 0
    %709 = vmatprep.subr.bf16.mxu0 0
    %710 = vmatpush2.bf16.msra.mxu0 0
    %711 = vmatprep.subr.bf16.mxu0 0
    %712 = vmatpush2.bf16.msra.mxu0 0
    %713 = vmatprep.mubr.bf16.mxu0 0
    %714 = vmatmul.mubr.bf16.gmra.mxu0 %v676
    %v715 = vpop.f32.mrf.mxu0
    %v716 = vadd.f32 %v669, %v715
    %v717 = vpop.f32.mrf.mxu0
    %v718 = vpop.f32.mrf.mxu0
    %v719 = vadd.f32 %v672, %v718
    %v720 = vpop.f32.mrf.mxu0
    %721 = vdwg.mxu0
    %722 = vrot.lane.b32.xlu0 %v176, 112
    %v723 = vpop.permute.xlu0 %722
    %724 = vrot.lane.b32.xlu0 %v186, 112
    %v725 = vpop.permute.xlu0 %724
    %v727 = vsel %vm196, %v723, 0
    %v730 = vsel %vm196, %v725, 0
    %732 = vmatprep.subr.bf16.mxu0 0
    %733 = vmatpush1.bf16.xpose.msra.mxu0 0
    %734 = vmatprep.subr.bf16.mxu0 0
    %735 = vmatpush1.bf16.xpose.msra.mxu0 0
    %736 = vmatprep.subr.bf16.mxu0 0
    %737 = vmatpush1.bf16.xpose.msra.mxu0 0
    %738 = vmatprep.subr.bf16.mxu0 0
    %739 = vmatpush1.bf16.xpose.msra.mxu0 0
    %740 = vmatprep.subr.bf16.mxu0 0
    %741 = vmatpush1.bf16.xpose.msra.mxu0 0
    %742 = vmatprep.subr.bf16.mxu0 0
    %743 = vmatpush1.bf16.xpose.msra.mxu0 0
    %744 = vmatprep.subr.bf16.mxu0 0
    %745 = vmatpush1.bf16.xpose.msra.mxu0 0
    %746 = vmatprep.subr.bf16.mxu0 0
    %747 = vmatpush1.bf16.xpose.msra.mxu0 %v730
    %748 = vmatprep.subr.bf16.mxu0 0
    %749 = vmatpush2.bf16.xpose.msra.mxu0 0
    %750 = vmatprep.subr.bf16.mxu0 0
    %751 = vmatpush2.bf16.xpose.msra.mxu0 0
    %752 = vmatprep.subr.bf16.mxu0 0
    %753 = vmatpush2.bf16.xpose.msra.mxu0 0
    %754 = vmatprep.subr.bf16.mxu0 0
    %755 = vmatpush2.bf16.xpose.msra.mxu0 0
    %756 = vmatprep.subr.bf16.mxu0 0
    %757 = vmatpush2.bf16.xpose.msra.mxu0 0
    %758 = vmatprep.subr.bf16.mxu0 0
    %759 = vmatpush2.bf16.xpose.msra.mxu0 0
    %760 = vmatprep.subr.bf16.mxu0 0
    %761 = vmatpush2.bf16.xpose.msra.mxu0 0
    %762 = vmatprep.subr.bf16.mxu0 0
    %763 = vmatpush2.bf16.xpose.msra.mxu0 0
    %764 = vmatprep.mubr.bf16.mxu0 0
    %765 = vmatmul.mubr.bf16.gmra.mxu0 %v727
    %v766 = vpop.f32.mrf.mxu0
    %v767 = vadd.f32 %v59, %v766
    %v768 = vpop.f32.mrf.mxu0
    %v769 = vpop.f32.mrf.mxu0
    %v770 = vpop.f32.mrf.mxu0
    %771 = vdwg.mxu0
    %772 = vrot.lane.b32.xlu0 %v177, 112
    %v773 = vpop.permute.xlu0 %772
    %774 = vrot.lane.b32.xlu0 %v187, 112
    %v775 = vpop.permute.xlu0 %774
    %v777 = vsel %vm196, %v773, 0
    %v780 = vsel %vm196, %v775, 0
    %782 = vmatprep.subr.bf16.mxu0 0
    %783 = vmatpush1.bf16.xpose.msra.mxu0 0
    %784 = vmatprep.subr.bf16.mxu0 0
    %785 = vmatpush1.bf16.xpose.msra.mxu0 0
    %786 = vmatprep.subr.bf16.mxu0 0
    %787 = vmatpush1.bf16.xpose.msra.mxu0 0
    %788 = vmatprep.subr.bf16.mxu0 0
    %789 = vmatpush1.bf16.xpose.msra.mxu0 0
    %790 = vmatprep.subr.bf16.mxu0 0
    %791 = vmatpush1.bf16.xpose.msra.mxu0 0
    %792 = vmatprep.subr.bf16.mxu0 0
    %793 = vmatpush1.bf16.xpose.msra.mxu0 0
    %794 = vmatprep.subr.bf16.mxu0 0
    %795 = vmatpush1.bf16.xpose.msra.mxu0 0
    %796 = vmatprep.subr.bf16.mxu0 0
    %797 = vmatpush1.bf16.xpose.msra.mxu0 %v780
    %798 = vmatprep.subr.bf16.mxu0 0
    %799 = vmatpush2.bf16.xpose.msra.mxu0 0
    %800 = vmatprep.subr.bf16.mxu0 0
    %801 = vmatpush2.bf16.xpose.msra.mxu0 0
    %802 = vmatprep.subr.bf16.mxu0 0
    %803 = vmatpush2.bf16.xpose.msra.mxu0 0
    %804 = vmatprep.subr.bf16.mxu0 0
    %805 = vmatpush2.bf16.xpose.msra.mxu0 0
    %806 = vmatprep.subr.bf16.mxu0 0
    %807 = vmatpush2.bf16.xpose.msra.mxu0 0
    %808 = vmatprep.subr.bf16.mxu0 0
    %809 = vmatpush2.bf16.xpose.msra.mxu0 0
    %810 = vmatprep.subr.bf16.mxu0 0
    %811 = vmatpush2.bf16.xpose.msra.mxu0 0
    %812 = vmatprep.subr.bf16.mxu0 0
    %813 = vmatpush2.bf16.xpose.msra.mxu0 0
    %814 = vmatprep.mubr.bf16.mxu0 0
    %815 = vmatmul.mubr.bf16.gmra.mxu0 %v777
    %v816 = vpop.f32.mrf.mxu0
    %v817 = vadd.f32 %v60, %v816
    %v818 = vpop.f32.mrf.mxu0
    %v819 = vpop.f32.mrf.mxu0
    %v820 = vpop.f32.mrf.mxu0
    %821 = vdwg.mxu0
    %v822 = vsel %vm289, %v767, -inf
    %823 = vmax.xlane.f32.xlu0 %v822
    %v824 = vpop.xlane.xlu0 %823
    %v825 = vsel %vm289, %v817, -inf
    %826 = vmax.xlane.f32.xlu0 %v825
    %v827 = vpop.xlane.xlu0 %826
    %v828 = vsub.f32 %v767, %v824
    %v829 = vsub.f32 %v817, %v827
    %v830 = vmul.f32 %v828, 1.442695
    %v831 = vpow.pop %v830
    %v832 = vmul.f32 %v829, 1.442695
    %v833 = vpow.pop %v832
    %v834 = vsel %vm289, %v831, 0.0
    %835 = vadd.xlane.f32.xlu0 %v834
    %v836 = vpop.xlane.xlu0 %835
    %v837 = vsel %vm289, %v833, 0.0
    %838 = vadd.xlane.f32.xlu0 %v837
    %v839 = vpop.xlane.xlu0 %838
    %v840 = vrcp.pop %v836
    %v841 = vrcp.pop %v839
    %v842 = vmul.f32 %v831, %v840
    %v843 = vmul.f32 %v833, %v841
    %v844 = vpack.c.bf16 %v842, %v842
    %v845 = vpack.c.bf16 %v843, %v843
    %846 = vrot.lane.b32.xlu0 %v194, 112
    %v847 = vpop.permute.xlu0 %846
    %v850 = vsel %vm289, %v844, 0
    %852 = vmatprep.subr.bf16.mxu0 0
    %853 = vmatpush1.bf16.msra.mxu0 0
    %854 = vmatprep.subr.bf16.mxu0 0
    %855 = vmatpush1.bf16.msra.mxu0 0
    %856 = vmatprep.subr.bf16.mxu0 0
    %857 = vmatpush1.bf16.msra.mxu0 0
    %858 = vmatprep.subr.bf16.mxu0 0
    %859 = vmatpush1.bf16.msra.mxu0 0
    %860 = vmatprep.subr.bf16.mxu0 0
    %861 = vmatpush1.bf16.msra.mxu0 0
    %862 = vmatprep.subr.bf16.mxu0 0
    %863 = vmatpush1.bf16.msra.mxu0 0
    %864 = vmatprep.subr.bf16.mxu0 0
    %865 = vmatpush1.bf16.msra.mxu0 0
    %866 = vmatprep.subr.bf16.mxu0 0
    %867 = vmatpush1.bf16.msra.mxu0 %v847
    %868 = vmatprep.subr.bf16.mxu0 0
    %869 = vmatpush2.bf16.msra.mxu0 0
    %870 = vmatprep.subr.bf16.mxu0 0
    %871 = vmatpush2.bf16.msra.mxu0 0
    %872 = vmatprep.subr.bf16.mxu0 0
    %873 = vmatpush2.bf16.msra.mxu0 0
    %874 = vmatprep.subr.bf16.mxu0 0
    %875 = vmatpush2.bf16.msra.mxu0 0
    %876 = vmatprep.subr.bf16.mxu0 0
    %877 = vmatpush2.bf16.msra.mxu0 0
    %878 = vmatprep.subr.bf16.mxu0 0
    %879 = vmatpush2.bf16.msra.mxu0 0
    %880 = vmatprep.subr.bf16.mxu0 0
    %881 = vmatpush2.bf16.msra.mxu0 0
    %882 = vmatprep.subr.bf16.mxu0 0
    %883 = vmatpush2.bf16.msra.mxu0 0
    %884 = vmatprep.mubr.bf16.mxu0 0
    %885 = vmatmul.mubr.bf16.gmra.mxu0 %v850
    %v886 = vpop.f32.mrf.mxu0
    %v887 = vadd.f32 0.0, %v886
    %v888 = vpop.f32.mrf.mxu0
    %v889 = vpop.f32.mrf.mxu0
    %v890 = vpop.f32.mrf.mxu0
    %891 = vdwg.mxu0
    %892 = vrot.lane.b32.xlu0 %v195, 112
    %v893 = vpop.permute.xlu0 %892
    %v896 = vsel %vm289, %v845, 0
    %898 = vmatprep.subr.bf16.mxu0 0
    %899 = vmatpush1.bf16.msra.mxu0 0
    %900 = vmatprep.subr.bf16.mxu0 0
    %901 = vmatpush1.bf16.msra.mxu0 0
    %902 = vmatprep.subr.bf16.mxu0 0
    %903 = vmatpush1.bf16.msra.mxu0 0
    %904 = vmatprep.subr.bf16.mxu0 0
    %905 = vmatpush1.bf16.msra.mxu0 0
    %906 = vmatprep.subr.bf16.mxu0 0
    %907 = vmatpush1.bf16.msra.mxu0 0
    %908 = vmatprep.subr.bf16.mxu0 0
    %909 = vmatpush1.bf16.msra.mxu0 0
    %910 = vmatprep.subr.bf16.mxu0 0
    %911 = vmatpush1.bf16.msra.mxu0 0
    %912 = vmatprep.subr.bf16.mxu0 0
    %913 = vmatpush1.bf16.msra.mxu0 %v893
    %914 = vmatprep.subr.bf16.mxu0 0
    %915 = vmatpush2.bf16.msra.mxu0 0
    %916 = vmatprep.subr.bf16.mxu0 0
    %917 = vmatpush2.bf16.msra.mxu0 0
    %918 = vmatprep.subr.bf16.mxu0 0
    %919 = vmatpush2.bf16.msra.mxu0 0
    %920 = vmatprep.subr.bf16.mxu0 0
    %921 = vmatpush2.bf16.msra.mxu0 0
    %922 = vmatprep.subr.bf16.mxu0 0
    %923 = vmatpush2.bf16.msra.mxu0 0
    %924 = vmatprep.subr.bf16.mxu0 0
    %925 = vmatpush2.bf16.msra.mxu0 0
    %926 = vmatprep.subr.bf16.mxu0 0
    %927 = vmatpush2.bf16.msra.mxu0 0
    %928 = vmatprep.subr.bf16.mxu0 0
    %929 = vmatpush2.bf16.msra.mxu0 0
    %930 = vmatprep.mubr.bf16.mxu0 0
    %931 = vmatmul.mubr.bf16.gmra.mxu0 %v896
    %v932 = vpop.f32.mrf.mxu0
    %v933 = vadd.f32 0.0, %v932
    %v934 = vpop.f32.mrf.mxu0
    %v935 = vpop.f32.mrf.mxu0
    %v936 = vpop.f32.mrf.mxu0
    %937 = vdwg.mxu0
    %v938 = vpack.c.bf16 %v933, %v887
    %s939 = scalar_lea.vmem %s8, 8
    %v940 = vld [vmem:[%s939] sm:$0xf]
    %v942 = vsel %vm196, %v938, 0
    %v945 = vsel %vm630, %v940, 0
    %947 = vmatprep.subr.bf16.mxu0 0
    %948 = vmatpush1.bf16.msra.mxu0 0
    %949 = vmatprep.subr.bf16.mxu0 0
    %950 = vmatpush1.bf16.msra.mxu0 0
    %951 = vmatprep.subr.bf16.mxu0 0
    %952 = vmatpush1.bf16.msra.mxu0 0
    %953 = vmatprep.subr.bf16.mxu0 0
    %954 = vmatpush1.bf16.msra.mxu0 0
    %955 = vmatprep.subr.bf16.mxu0 0
    %956 = vmatpush1.bf16.msra.mxu0 0
    %957 = vmatprep.subr.bf16.mxu0 0
    %958 = vmatpush1.bf16.msra.mxu0 0
    %959 = vmatprep.subr.bf16.mxu0 0
    %960 = vmatpush1.bf16.msra.mxu0 0
    %961 = vmatprep.subr.bf16.mxu0 0
    %962 = vmatpush1.bf16.msra.mxu0 %v945
    %963 = vmatprep.subr.bf16.mxu0 0
    %964 = vmatpush2.bf16.msra.mxu0 0
    %965 = vmatprep.subr.bf16.mxu0 0
    %966 = vmatpush2.bf16.msra.mxu0 0
    %967 = vmatprep.subr.bf16.mxu0 0
    %968 = vmatpush2.bf16.msra.mxu0 0
    %969 = vmatprep.subr.bf16.mxu0 0
    %970 = vmatpush2.bf16.msra.mxu0 0
    %971 = vmatprep.subr.bf16.mxu0 0
    %972 = vmatpush2.bf16.msra.mxu0 0
    %973 = vmatprep.subr.bf16.mxu0 0
    %974 = vmatpush2.bf16.msra.mxu0 0
    %975 = vmatprep.subr.bf16.mxu0 0
    %976 = vmatpush2.bf16.msra.mxu0 0
    %977 = vmatprep.subr.bf16.mxu0 0
    %978 = vmatpush2.bf16.msra.mxu0 0
    %979 = vmatprep.mubr.bf16.mxu0 0
    %980 = vmatmul.mubr.bf16.gmra.mxu0 %v942
    %v981 = vpop.f32.mrf.mxu0
    %v982 = vadd.f32 0.0, %v981
    %v983 = vpop.f32.mrf.mxu0
    %v984 = vpop.f32.mrf.mxu0
    %v985 = vadd.f32 0.0, %v984
    %v986 = vpop.f32.mrf.mxu0
    %987 = vdwg.mxu0
    %v988 = vadd.f32 %v716, %v982
    %v989 = vadd.f32 %v719, %v985
    %990 = vrot.lane.b32.xlu0 %v176, 104
    %v991 = vpop.permute.xlu0 %990
    %992 = vrot.lane.b32.xlu0 %v186, 104
    %v993 = vpop.permute.xlu0 %992
    %v995 = vsel %vm196, %v991, 0
    %v998 = vsel %vm196, %v993, 0
    %1000 = vmatprep.subr.bf16.mxu0 0
    %1001 = vmatpush1.bf16.xpose.msra.mxu0 0
    %1002 = vmatprep.subr.bf16.mxu0 0
    %1003 = vmatpush1.bf16.xpose.msra.mxu0 0
    %1004 = vmatprep.subr.bf16.mxu0 0
    %1005 = vmatpush1.bf16.xpose.msra.mxu0 0
    %1006 = vmatprep.subr.bf16.mxu0 0
    %1007 = vmatpush1.bf16.xpose.msra.mxu0 0
    %1008 = vmatprep.subr.bf16.mxu0 0
    %1009 = vmatpush1.bf16.xpose.msra.mxu0 0
    %1010 = vmatprep.subr.bf16.mxu0 0
    %1011 = vmatpush1.bf16.xpose.msra.mxu0 0
    %1012 = vmatprep.subr.bf16.mxu0 0
    %1013 = vmatpush1.bf16.xpose.msra.mxu0 0
    %1014 = vmatprep.subr.bf16.mxu0 0
    %1015 = vmatpush1.bf16.xpose.msra.mxu0 %v998
    %1016 = vmatprep.subr.bf16.mxu0 0
    %1017 = vmatpush2.bf16.xpose.msra.mxu0 0
    %1018 = vmatprep.subr.bf16.mxu0 0
    %1019 = vmatpush2.bf16.xpose.msra.mxu0 0
    %1020 = vmatprep.subr.bf16.mxu0 0
    %1021 = vmatpush2.bf16.xpose.msra.mxu0 0
    %1022 = vmatprep.subr.bf16.mxu0 0
    %1023 = vmatpush2.bf16.xpose.msra.mxu0 0
    %1024 = vmatprep.subr.bf16.mxu0 0
    %1025 = vmatpush2.bf16.xpose.msra.mxu0 0
    %1026 = vmatprep.subr.bf16.mxu0 0
    %1027 = vmatpush2.bf16.xpose.msra.mxu0 0
    %1028 = vmatprep.subr.bf16.mxu0 0
    %1029 = vmatpush2.bf16.xpose.msra.mxu0 0
    %1030 = vmatprep.subr.bf16.mxu0 0
    %1031 = vmatpush2.bf16.xpose.msra.mxu0 0
    %1032 = vmatprep.mubr.bf16.mxu0 0
    %1033 = vmatmul.mubr.bf16.gmra.mxu0 %v995
    %v1034 = vpop.f32.mrf.mxu0
    %v1035 = vadd.f32 %v59, %v1034
    %v1036 = vpop.f32.mrf.mxu0
    %v1037 = vpop.f32.mrf.mxu0
    %v1038 = vpop.f32.mrf.mxu0
    %1039 = vdwg.mxu0
    %1040 = vrot.lane.b32.xlu0 %v177, 104
    %v1041 = vpop.permute.xlu0 %1040
    %1042 = vrot.lane.b32.xlu0 %v187, 104
    %v1043 = vpop.permute.xlu0 %1042
    %v1045 = vsel %vm196, %v1041, 0
    %v1048 = vsel %vm196, %v1043, 0
    %1050 = vmatprep.subr.bf16.mxu0 0
    %1051 = vmatpush1.bf16.xpose.msra.mxu0 0
    %1052 = vmatprep.subr.bf16.mxu0 0
    %1053 = vmatpush1.bf16.xpose.msra.mxu0 0
    %1054 = vmatprep.subr.bf16.mxu0 0
    %1055 = vmatpush1.bf16.xpose.msra.mxu0 0
    %1056 = vmatprep.subr.bf16.mxu0 0
    %1057 = vmatpush1.bf16.xpose.msra.mxu0 0
    %1058 = vmatprep.subr.bf16.mxu0 0
    %1059 = vmatpush1.bf16.xpose.msra.mxu0 0
    %1060 = vmatprep.subr.bf16.mxu0 0
    %1061 = vmatpush1.bf16.xpose.msra.mxu0 0
    %1062 = vmatprep.subr.bf16.mxu0 0
    %1063 = vmatpush1.bf16.xpose.msra.mxu0 0
    %1064 = vmatprep.subr.bf16.mxu0 0
    %1065 = vmatpush1.bf16.xpose.msra.mxu0 %v1048
    %1066 = vmatprep.subr.bf16.mxu0 0
    %1067 = vmatpush2.bf16.xpose.msra.mxu0 0
    %1068 = vmatprep.subr.bf16.mxu0 0
    %1069 = vmatpush2.bf16.xpose.msra.mxu0 0
    %1070 = vmatprep.subr.bf16.mxu0 0
    %1071 = vmatpush2.bf16.xpose.msra.mxu0 0
    %1072 = vmatprep.subr.bf16.mxu0 0
    %1073 = vmatpush2.bf16.xpose.msra.mxu0 0
    %1074 = vmatprep.subr.bf16.mxu0 0
    %1075 = vmatpush2.bf16.xpose.msra.mxu0 0
    %1076 = vmatprep.subr.bf16.mxu0 0
    %1077 = vmatpush2.bf16.xpose.msra.mxu0 0
    %1078 = vmatprep.subr.bf16.mxu0 0
    %1079 = vmatpush2.bf16.xpose.msra.mxu0 0
    %1080 = vmatprep.subr.bf16.mxu0 0
    %1081 = vmatpush2.bf16.xpose.msra.mxu0 0
    %1082 = vmatprep.mubr.bf16.mxu0 0
    %1083 = vmatmul.mubr.bf16.gmra.mxu0 %v1045
    %v1084 = vpop.f32.mrf.mxu0
    %v1085 = vadd.f32 %v60, %v1084
    %v1086 = vpop.f32.mrf.mxu0
    %v1087 = vpop.f32.mrf.mxu0
    %v1088 = vpop.f32.mrf.mxu0
    %1089 = vdwg.mxu0
    %v1090 = vsel %vm289, %v1035, -inf
    %1091 = vmax.xlane.f32.xlu0 %v1090
    %v1092 = vpop.xlane.xlu0 %1091
    %v1093 = vsel %vm289, %v1085, -inf
    %1094 = vmax.xlane.f32.xlu0 %v1093
    %v1095 = vpop.xlane.xlu0 %1094
    %v1096 = vsub.f32 %v1035, %v1092
    %v1097 = vsub.f32 %v1085, %v1095
    %v1098 = vmul.f32 %v1096, 1.442695
    %v1099 = vpow.pop %v1098
    %v1100 = vmul.f32 %v1097, 1.442695
    %v1101 = vpow.pop %v1100
    %v1102 = vsel %vm289, %v1099, 0.0
    %1103 = vadd.xlane.f32.xlu0 %v1102
    %v1104 = vpop.xlane.xlu0 %1103
    %v1105 = vsel %vm289, %v1101, 0.0
    %1106 = vadd.xlane.f32.xlu0 %v1105
    %v1107 = vpop.xlane.xlu0 %1106
    %v1108 = vrcp.pop %v1104
    %v1109 = vrcp.pop %v1107
    %v1110 = vmul.f32 %v1099, %v1108
    %v1111 = vmul.f32 %v1101, %v1109
    %v1112 = vpack.c.bf16 %v1110, %v1110
    %v1113 = vpack.c.bf16 %v1111, %v1111
    %1114 = vrot.lane.b32.xlu0 %v194, 104
    %v1115 = vpop.permute.xlu0 %1114
    %v1118 = vsel %vm289, %v1112, 0
    %1120 = vmatprep.subr.bf16.mxu0 0
    %1121 = vmatpush1.bf16.msra.mxu0 0
    %1122 = vmatprep.subr.bf16.mxu0 0
    %1123 = vmatpush1.bf16.msra.mxu0 0
    %1124 = vmatprep.subr.bf16.mxu0 0
    %1125 = vmatpush1.bf16.msra.mxu0 0
    %1126 = vmatprep.subr.bf16.mxu0 0
    %1127 = vmatpush1.bf16.msra.mxu0 0
    %1128 = vmatprep.subr.bf16.mxu0 0
    %1129 = vmatpush1.bf16.msra.mxu0 0
    %1130 = vmatprep.subr.bf16.mxu0 0
    %1131 = vmatpush1.bf16.msra.mxu0 0
    %1132 = vmatprep.subr.bf16.mxu0 0
    %1133 = vmatpush1.bf16.msra.mxu0 0
    %1134 = vmatprep.subr.bf16.mxu0 0
    %1135 = vmatpush1.bf16.msra.mxu0 %v1115
    %1136 = vmatprep.subr.bf16.mxu0 0
    %1137 = vmatpush2.bf16.msra.mxu0 0
    %1138 = vmatprep.subr.bf16.mxu0 0
    %1139 = vmatpush2.bf16.msra.mxu0 0
    %1140 = vmatprep.subr.bf16.mxu0 0
    %1141 = vmatpush2.bf16.msra.mxu0 0
    %1142 = vmatprep.subr.bf16.mxu0 0
    %1143 = vmatpush2.bf16.msra.mxu0 0
    %1144 = vmatprep.subr.bf16.mxu0 0
    %1145 = vmatpush2.bf16.msra.mxu0 0
    %1146 = vmatprep.subr.bf16.mxu0 0
    %1147 = vmatpush2.bf16.msra.mxu0 0
    %1148 = vmatprep.subr.bf16.mxu0 0
    %1149 = vmatpush2.bf16.msra.mxu0 0
    %1150 = vmatprep.subr.bf16.mxu0 0
    %1151 = vmatpush2.bf16.msra.mxu0 0
    %1152 = vmatprep.mubr.bf16.mxu0 0
    %1153 = vmatmul.mubr.bf16.gmra.mxu0 %v1118
    %v1154 = vpop.f32.mrf.mxu0
    %v1155 = vadd.f32 0.0, %v1154
    %v1156 = vpop.f32.mrf.mxu0
    %v1157 = vpop.f32.mrf.mxu0
    %v1158 = vpop.f32.mrf.mxu0
    %1159 = vdwg.mxu0
    %1160 = vrot.lane.b32.xlu0 %v195, 104
    %v1161 = vpop.permute.xlu0 %1160
    %v1164 = vsel %vm289, %v1113, 0
    %1166 = vmatprep.subr.bf16.mxu0 0
    %1167 = vmatpush1.bf16.msra.mxu0 0
    %1168 = vmatprep.subr.bf16.mxu0 0
    %1169 = vmatpush1.bf16.msra.mxu0 0
    %1170 = vmatprep.subr.bf16.mxu0 0
    %1171 = vmatpush1.bf16.msra.mxu0 0
    %1172 = vmatprep.subr.bf16.mxu0 0
    %1173 = vmatpush1.bf16.msra.mxu0 0
    %1174 = vmatprep.subr.bf16.mxu0 0
    %1175 = vmatpush1.bf16.msra.mxu0 0
    %1176 = vmatprep.subr.bf16.mxu0 0
    %1177 = vmatpush1.bf16.msra.mxu0 0
    %1178 = vmatprep.subr.bf16.mxu0 0
    %1179 = vmatpush1.bf16.msra.mxu0 0
    %1180 = vmatprep.subr.bf16.mxu0 0
    %1181 = vmatpush1.bf16.msra.mxu0 %v1161
    %1182 = vmatprep.subr.bf16.mxu0 0
    %1183 = vmatpush2.bf16.msra.mxu0 0
    %1184 = vmatprep.subr.bf16.mxu0 0
    %1185 = vmatpush2.bf16.msra.mxu0 0
    %1186 = vmatprep.subr.bf16.mxu0 0
    %1187 = vmatpush2.bf16.msra.mxu0 0
    %1188 = vmatprep.subr.bf16.mxu0 0
    %1189 = vmatpush2.bf16.msra.mxu0 0
    %1190 = vmatprep.subr.bf16.mxu0 0
    %1191 = vmatpush2.bf16.msra.mxu0 0
    %1192 = vmatprep.subr.bf16.mxu0 0
    %1193 = vmatpush2.bf16.msra.mxu0 0
    %1194 = vmatprep.subr.bf16.mxu0 0
    %1195 = vmatpush2.bf16.msra.mxu0 0
    %1196 = vmatprep.subr.bf16.mxu0 0
    %1197 = vmatpush2.bf16.msra.mxu0 0
    %1198 = vmatprep.mubr.bf16.mxu0 0
    %1199 = vmatmul.mubr.bf16.gmra.mxu0 %v1164
    %v1200 = vpop.f32.mrf.mxu0
    %v1201 = vadd.f32 0.0, %v1200
    %v1202 = vpop.f32.mrf.mxu0
    %v1203 = vpop.f32.mrf.mxu0
    %v1204 = vpop.f32.mrf.mxu0
    %1205 = vdwg.mxu0
    %v1206 = vpack.c.bf16 %v1201, %v1155
    %s1207 = scalar_lea.vmem %s8, 12
    %v1208 = vld [vmem:[%s1207] sm:$0xf]
    %v1210 = vsel %vm196, %v1206, 0
    %v1213 = vsel %vm630, %v1208, 0
    %1215 = vmatprep.subr.bf16.mxu0 0
    %1216 = vmatpush1.bf16.msra.mxu0 0
    %1217 = vmatprep.subr.bf16.mxu0 0
    %1218 = vmatpush1.bf16.msra.mxu0 0
    %1219 = vmatprep.subr.bf16.mxu0 0
    %1220 = vmatpush1.bf16.msra.mxu0 0
    %1221 = vmatprep.subr.bf16.mxu0 0
    %1222 = vmatpush1.bf16.msra.mxu0 0
    %1223 = vmatprep.subr.bf16.mxu0 0
    %1224 = vmatpush1.bf16.msra.mxu0 0
    %1225 = vmatprep.subr.bf16.mxu0 0
    %1226 = vmatpush1.bf16.msra.mxu0 0
    %1227 = vmatprep.subr.bf16.mxu0 0
    %1228 = vmatpush1.bf16.msra.mxu0 0
    %1229 = vmatprep.subr.bf16.mxu0 0
    %1230 = vmatpush1.bf16.msra.mxu0 %v1213
    %1231 = vmatprep.subr.bf16.mxu0 0
    %1232 = vmatpush2.bf16.msra.mxu0 0
    %1233 = vmatprep.subr.bf16.mxu0 0
    %1234 = vmatpush2.bf16.msra.mxu0 0
    %1235 = vmatprep.subr.bf16.mxu0 0
    %1236 = vmatpush2.bf16.msra.mxu0 0
    %1237 = vmatprep.subr.bf16.mxu0 0
    %1238 = vmatpush2.bf16.msra.mxu0 0
    %1239 = vmatprep.subr.bf16.mxu0 0
    %1240 = vmatpush2.bf16.msra.mxu0 0
    %1241 = vmatprep.subr.bf16.mxu0 0
    %1242 = vmatpush2.bf16.msra.mxu0 0
    %1243 = vmatprep.subr.bf16.mxu0 0
    %1244 = vmatpush2.bf16.msra.mxu0 0
    %1245 = vmatprep.subr.bf16.mxu0 0
    %1246 = vmatpush2.bf16.msra.mxu0 0
    %1247 = vmatprep.mubr.bf16.mxu0 0
    %1248 = vmatmul.mubr.bf16.gmra.mxu0 %v1210
    %v1249 = vpop.f32.mrf.mxu0
    %v1250 = vadd.f32 0.0, %v1249
    %v1251 = vpop.f32.mrf.mxu0
    %v1252 = vpop.f32.mrf.mxu0
    %v1253 = vadd.f32 0.0, %v1252
    %v1254 = vpop.f32.mrf.mxu0
    %1255 = vdwg.mxu0
    %v1256 = vadd.f32 %v988, %v1250
    %v1257 = vadd.f32 %v989, %v1253
    %v1258 = vadd.f32 %v57, %v1256
    %v1259 = vadd.f32 %v58, %v1257
    %v1260 = vld [vmem:[%s9] sm:$0x1]
    %v1262 = vlaneseq
    %v1263 = vshrl.u32 %v1262, 7
    %v1264 = vsub.s32 0, %v1263
    %v1265 = vrot.slane %v1260, %v1264
    %v1267 = vadd.f32 %v1258, %v1265
    %v1268 = vadd.f32 %v1259, %v1265
    %v1269 = vsel %vm63, %v1267, 0.0
    %1270 = vadd.xlane.f32.xlu0 %v1269
    %v1271 = vpop.xlane.xlu0 %1270
    %v1272 = vsel %vm63, %v1268, 0.0
    %1273 = vadd.xlane.f32.xlu0 %v1272
    %v1274 = vpop.xlane.xlu0 %1273
    %v1275 = vmul.f32 %v1271, %v70
    %v1276 = vmul.f32 %v1274, %v70
    %v1277 = vsub.f32 %v1267, %v1275
    %v1278 = vsub.f32 %v1268, %v1276
    %v1279 = vmul.f32 %v1277, %v1277
    %v1280 = vmul.f32 %v1278, %v1278
    %v1281 = vsel %vm63, %v1279, 0.0
    %1282 = vadd.xlane.f32.xlu0 %v1281
    %v1283 = vpop.xlane.xlu0 %1282
    %v1284 = vsel %vm63, %v1280, 0.0
    %1285 = vadd.xlane.f32.xlu0 %v1284
    %v1286 = vpop.xlane.xlu0 %1285
    %v1287 = vmul.f32 %v1283, %v70
    %v1288 = vmul.f32 %v1286, %v70
    %v1289 = vadd.f32 %v1287, 1e-05
    %v1290 = vadd.f32 %v1288, 1e-05
    %v1291 = vrsqrt.pop %v1289
    %v1292 = vrsqrt.pop %v1290
    %v1293 = vmul.f32 %v1277, %v1291
    %v1294 = vmul.f32 %v1278, %v1292
    %v1295 = vlaneseq
    %v1296 = vshrl.u32 %v1295, 7
    %v1297 = vsub.s32 1, %v1296
    %v1298 = vrot.slane %v61, %v1297
    %v1299 = vmul.f32 %v1293, %v1298
    %v1300 = vmul.f32 %v1294, %v1298
    %v1301 = vlaneseq
    %v1302 = vshrl.u32 %v1301, 7
    %v1303 = vsub.s32 1, %v1302
    %v1304 = vrot.slane %v62, %v1303
    %v1305 = vadd.f32 %v1299, %v1304
    %v1306 = vadd.f32 %v1300, %v1304
    %v1307 = vpack.c.bf16 %v1306, %v1305
    %v1308 = vld [vmem:[%s10] sm:$0xf]
    %v1309 = vld [vmem:[%s10 + $0x4] sm:$0xf]
    %v1310 = vld [vmem:[%s10 + $0x8] sm:$0xf]
    %v1311 = vld [vmem:[%s10 + $0xc] sm:$0xf]
    %v1312 = vld [vmem:[%s11] sm:$0x1]
    %v1314 = vlaneseq
    %v1315 = vshrl.u32 %v1314, 7
    %v1316 = vsub.s32 0, %v1315
    %v1317 = vrot.slane %v1312, %v1316
    %v1323 = vunpack.c.l.b16 %v1308
    %v1324 = vunpack.c.l.b16 %v1309
    %v1325 = vunpack.c.l.b16 %v1310
    %v1326 = vunpack.c.l.b16 %v1311
    %v1327 = vpack.c.b16 %v1324, %v1323
    %v1328 = vpack.c.b16 %v1326, %v1325
    %v1332 = vsel %vm63, %v1307, 0
    %1334 = vmatprep.subr.bf16.mxu0 0
    %1335 = vmatpush1.bf16.msra.mxu0 0
    %1336 = vmatprep.subr.bf16.mxu0 0
    %1337 = vmatpush1.bf16.msra.mxu0 0
    %1338 = vmatprep.subr.bf16.mxu0 0
    %1339 = vmatpush1.bf16.msra.mxu0 0
    %1340 = vmatprep.subr.bf16.mxu0 0
    %1341 = vmatpush1.bf16.msra.mxu0 0
    %1342 = vmatprep.subr.bf16.mxu0 0
    %1343 = vmatpush1.bf16.msra.mxu0 0
    %1344 = vmatprep.subr.bf16.mxu0 0
    %1345 = vmatpush1.bf16.msra.mxu0 0
    %1346 = vmatprep.subr.bf16.mxu0 0
    %1347 = vmatpush1.bf16.msra.mxu0 %v1328
    %1348 = vmatprep.subr.bf16.mxu0 0
    %1349 = vmatpush1.bf16.msra.mxu0 %v1327
    %1350 = vmatprep.subr.bf16.mxu0 0
    %1351 = vmatpush2.bf16.msra.mxu0 0
    %1352 = vmatprep.subr.bf16.mxu0 0
    %1353 = vmatpush2.bf16.msra.mxu0 0
    %1354 = vmatprep.subr.bf16.mxu0 0
    %1355 = vmatpush2.bf16.msra.mxu0 0
    %1356 = vmatprep.subr.bf16.mxu0 0
    %1357 = vmatpush2.bf16.msra.mxu0 0
    %1358 = vmatprep.subr.bf16.mxu0 0
    %1359 = vmatpush2.bf16.msra.mxu0 0
    %1360 = vmatprep.subr.bf16.mxu0 0
    %1361 = vmatpush2.bf16.msra.mxu0 0
    %1362 = vmatprep.subr.bf16.mxu0 0
    %1363 = vmatpush2.bf16.msra.mxu0 0
    %1364 = vmatprep.subr.bf16.mxu0 0
    %1365 = vmatpush2.bf16.msra.mxu0 0
    %1366 = vmatprep.mubr.bf16.mxu0 0
    %1367 = vmatmul.mubr.bf16.gmra.mxu0 %v1332
    %v1368 = vpop.f32.mrf.mxu0
    %v1369 = vadd.f32 %v1317, %v1368
    %v1370 = vpop.f32.mrf.mxu0
    %v1371 = vpop.f32.mrf.mxu0
    %v1372 = vadd.f32 %v1317, %v1371
    %v1373 = vpop.f32.mrf.mxu0
    %1374 = vdwg.mxu0
    %v1375 = vmul.f32 %v1369, %v1369
    %v1376 = vmul.f32 %v1372, %v1372
    %v1377 = vmul.f32 %v1369, %v1375
    %v1378 = vmul.f32 %v1372, %v1376
    %v1379 = vmul.f32 %v1377, 0.044715
    %v1380 = vmul.f32 %v1378, 0.044715
    %v1381 = vadd.f32 %v1369, %v1379
    %v1382 = vadd.f32 %v1372, %v1380
    %v1383 = vmul.f32 %v1381, 0.7978846
    %v1384 = vmul.f32 %v1382, 0.7978846
    %v1385 = vtanh.pop %v1383
    %v1386 = vtanh.pop %v1384
    %v1387 = vadd.f32 %v1385, 1.0
    %v1388 = vadd.f32 %v1386, 1.0
    %v1389 = vmul.f32 %v1387, 0.5
    %v1390 = vmul.f32 %v1388, 0.5
    %v1391 = vmul.f32 %v1369, %v1389
    %v1392 = vmul.f32 %v1372, %v1390
    %v1393 = vpack.c.bf16 %v1392, %v1391
    %v1394 = vld [vmem:[%s12] sm:$0xf]
    %v1395 = vld [vmem:[%s12 + $0x4] sm:$0xf]
    %v1396 = vld [vmem:[%s12 + $0x8] sm:$0xf]
    %v1397 = vld [vmem:[%s12 + $0xc] sm:$0xf]
    %v1398 = vld [vmem:[%s12 + $0x10] sm:$0xf]
    %v1399 = vld [vmem:[%s12 + $0x14] sm:$0xf]
    %v1400 = vld [vmem:[%s12 + $0x18] sm:$0xf]
    %v1401 = vld [vmem:[%s12 + $0x1c] sm:$0xf]
    %v1402 = vld [vmem:[%s13] sm:$0x1]
    %v1404 = vlaneseq
    %v1405 = vshrl.u32 %v1404, 7
    %v1406 = vsub.s32 0, %v1405
    %v1407 = vrot.slane %v1402, %v1406
    %v1417 = vunpack.c.l.b16 %v1394
    %v1418 = vunpack.c.l.b16 %v1395
    %v1419 = vunpack.c.l.b16 %v1396
    %v1420 = vunpack.c.l.b16 %v1397
    %v1421 = vunpack.c.l.b16 %v1398
    %v1422 = vunpack.c.l.b16 %v1399
    %v1423 = vunpack.c.l.b16 %v1400
    %v1424 = vunpack.c.l.b16 %v1401
    %v1425 = vpack.c.b16 %v1418, %v1417
    %v1426 = vpack.c.b16 %v1420, %v1419
    %v1427 = vpack.c.b16 %v1422, %v1421
    %v1428 = vpack.c.b16 %v1424, %v1423
    %vm1433 = vcmask 523264
    %v1435 = vsel %vm1433, %v1393, 0
    %1437 = vmatprep.subr.bf16.mxu0 0
    %1438 = vmatpush1.bf16.msra.mxu0 0
    %1439 = vmatprep.subr.bf16.mxu0 0
    %1440 = vmatpush1.bf16.msra.mxu0 0
    %1441 = vmatprep.subr.bf16.mxu0 0
    %1442 = vmatpush1.bf16.msra.mxu0 0
    %1443 = vmatprep.subr.bf16.mxu0 0
    %1444 = vmatpush1.bf16.msra.mxu0 0
    %1445 = vmatprep.subr.bf16.mxu0 0
    %1446 = vmatpush1.bf16.msra.mxu0 %v1428
    %1447 = vmatprep.subr.bf16.mxu0 0
    %1448 = vmatpush1.bf16.msra.mxu0 %v1427
    %1449 = vmatprep.subr.bf16.mxu0 0
    %1450 = vmatpush1.bf16.msra.mxu0 %v1426
    %1451 = vmatprep.subr.bf16.mxu0 0
    %1452 = vmatpush1.bf16.msra.mxu0 %v1425
    %1453 = vmatprep.subr.bf16.mxu0 0
    %1454 = vmatpush2.bf16.msra.mxu0 0
    %1455 = vmatprep.subr.bf16.mxu0 0
    %1456 = vmatpush2.bf16.msra.mxu0 0
    %1457 = vmatprep.subr.bf16.mxu0 0
    %1458 = vmatpush2.bf16.msra.mxu0 0
    %1459 = vmatprep.subr.bf16.mxu0 0
    %1460 = vmatpush2.bf16.msra.mxu0 0
    %1461 = vmatprep.subr.bf16.mxu0 0
    %1462 = vmatpush2.bf16.msra.mxu0 0
    %1463 = vmatprep.subr.bf16.mxu0 0
    %1464 = vmatpush2.bf16.msra.mxu0 0
    %1465 = vmatprep.subr.bf16.mxu0 0
    %1466 = vmatpush2.bf16.msra.mxu0 0
    %1467 = vmatprep.subr.bf16.mxu0 0
    %1468 = vmatpush2.bf16.msra.mxu0 0
    %1469 = vmatprep.mubr.bf16.mxu0 0
    %1470 = vmatmul.mubr.bf16.gmra.mxu0 %v1435
    %v1471 = vpop.f32.mrf.mxu0
    %v1472 = vadd.f32 %v1407, %v1471
    %v1473 = vpop.f32.mrf.mxu0
    %v1474 = vpop.f32.mrf.mxu0
    %v1475 = vadd.f32 %v1407, %v1474
    %v1476 = vpop.f32.mrf.mxu0
    %1477 = vdwg.mxu0
    %v1478 = vadd.f32 %v1267, %v1472
    %v1479 = vadd.f32 %v1268, %v1475
    %s1480 = scalar_lea.vmem %s4, 2
    %v1481 = vld [vmem:[%s1480] sm:$0x3]
    %s1482 = scalar_lea.vmem %s5, 2
    %v1483 = vld [vmem:[%s1482] sm:$0x3]
    %v1484 = vsel %vm63, %v1478, 0.0
    %1485 = vadd.xlane.f32.xlu0 %v1484
    %v1486 = vpop.xlane.xlu0 %1485
    %v1487 = vsel %vm63, %v1479, 0.0
    %1488 = vadd.xlane.f32.xlu0 %v1487
    %v1489 = vpop.xlane.xlu0 %1488
    %v1490 = vmul.f32 %v1486, %v70
    %v1491 = vmul.f32 %v1489, %v70
    %v1492 = vsub.f32 %v1478, %v1490
    %v1493 = vsub.f32 %v1479, %v1491
    %v1494 = vmul.f32 %v1492, %v1492
    %v1495 = vmul.f32 %v1493, %v1493
    %v1496 = vsel %vm63, %v1494, 0.0
    %1497 = vadd.xlane.f32.xlu0 %v1496
    %v1498 = vpop.xlane.xlu0 %1497
    %v1499 = vsel %vm63, %v1495, 0.0
    %1500 = vadd.xlane.f32.xlu0 %v1499
    %v1501 = vpop.xlane.xlu0 %1500
    %v1502 = vmul.f32 %v1498, %v70
    %v1503 = vmul.f32 %v1501, %v70
    %v1504 = vadd.f32 %v1502, 1e-05
    %v1505 = vadd.f32 %v1503, 1e-05
    %v1506 = vrsqrt.pop %v1504
    %v1507 = vrsqrt.pop %v1505
    %v1508 = vmul.f32 %v1492, %v1506
    %v1509 = vmul.f32 %v1493, %v1507
    %v1510 = vlaneseq
    %v1511 = vshrl.u32 %v1510, 7
    %v1512 = vsub.s32 0, %v1511
    %v1513 = vrot.slane %v1481, %v1512
    %v1514 = vmul.f32 %v1508, %v1513
    %v1515 = vmul.f32 %v1509, %v1513
    %v1516 = vlaneseq
    %v1517 = vshrl.u32 %v1516, 7
    %v1518 = vsub.s32 0, %v1517
    %v1519 = vrot.slane %v1483, %v1518
    %v1520 = vadd.f32 %v1514, %v1519
    %v1521 = vadd.f32 %v1515, %v1519
    %v1522 = vpack.c.bf16 %v1521, %v1520
    %s1523 = scalar_lea.vmem %s6, 16
    %v1524 = vld [vmem:[%s1523] sm:$0xf]
    %v1525 = vld [vmem:[%s1523 + $0x4] sm:$0xf]
    %v1526 = vld [vmem:[%s1523 + $0x8] sm:$0xf]
    %v1527 = vld [vmem:[%s1523 + $0xc] sm:$0xf]
    %s1528 = scalar_lea.vmem %s7, 1
    %v1529 = vld [vmem:[%s1528] sm:$0x1]
    %v1531 = vlaneseq
    %v1532 = vshrl.u32 %v1531, 7
    %v1533 = vsub.s32 0, %v1532
    %v1534 = vrot.slane %v1529, %v1533
    %v1540 = vunpack.c.l.b16 %v1524
    %v1541 = vunpack.c.l.b16 %v1525
    %v1542 = vunpack.c.l.b16 %v1526
    %v1543 = vunpack.c.l.b16 %v1527
    %v1544 = vpack.c.b16 %v1541, %v1540
    %v1545 = vpack.c.b16 %v1543, %v1542
    %v1549 = vsel %vm63, %v1522, 0
    %1551 = vmatprep.subr.bf16.mxu0 0
    %1552 = vmatpush1.bf16.msra.mxu0 0
    %1553 = vmatprep.subr.bf16.mxu0 0
    %1554 = vmatpush1.bf16.msra.mxu0 0
    %1555 = vmatprep.subr.bf16.mxu0 0
    %1556 = vmatpush1.bf16.msra.mxu0 0
    %1557 = vmatprep.subr.bf16.mxu0 0
    %1558 = vmatpush1.bf16.msra.mxu0 0
    %1559 = vmatprep.subr.bf16.mxu0 0
    %1560 = vmatpush1.bf16.msra.mxu0 0
    %1561 = vmatprep.subr.bf16.mxu0 0
    %1562 = vmatpush1.bf16.msra.mxu0 0
    %1563 = vmatprep.subr.bf16.mxu0 0
    %1564 = vmatpush1.bf16.msra.mxu0 %v1545
    %1565 = vmatprep.subr.bf16.mxu0 0
    %1566 = vmatpush1.bf16.msra.mxu0 %v1544
    %1567 = vmatprep.subr.bf16.mxu0 0
    %1568 = vmatpush2.bf16.msra.mxu0 0
    %1569 = vmatprep.subr.bf16.mxu0 0
    %1570 = vmatpush2.bf16.msra.mxu0 0
    %1571 = vmatprep.subr.bf16.mxu0 0
    %1572 = vmatpush2.bf16.msra.mxu0 0
    %1573 = vmatprep.subr.bf16.mxu0 0
    %1574 = vmatpush2.bf16.msra.mxu0 0
    %1575 = vmatprep.subr.bf16.mxu0 0
    %1576 = vmatpush2.bf16.msra.mxu0 0
    %1577 = vmatprep.subr.bf16.mxu0 0
    %1578 = vmatpush2.bf16.msra.mxu0 0
    %1579 = vmatprep.subr.bf16.mxu0 0
    %1580 = vmatpush2.bf16.msra.mxu0 0
    %1581 = vmatprep.subr.bf16.mxu0 0
    %1582 = vmatpush2.bf16.msra.mxu0 0
    %1583 = vmatprep.mubr.bf16.mxu0 0
    %1584 = vmatmul.mubr.bf16.gmra.mxu0 %v1549
    %v1585 = vpop.f32.mrf.mxu0
    %v1586 = vadd.f32 %v1534, %v1585
    %v1587 = vpop.f32.mrf.mxu0
    %v1588 = vpop.f32.mrf.mxu0
    %v1589 = vadd.f32 %v1534, %v1588
    %v1590 = vpop.f32.mrf.mxu0
    %1591 = vdwg.mxu0
    %s1592 = scalar_lea.vmem %s3, 32
    %v1593 = vld [vmem:[%s1592] sm:$0xff]
    %v1594 = vld [vmem:[%s1592 + $0x8] sm:$0xff]
    %s1595 = scalar_lea.vmem %s3, 48
    %v1596 = vld [vmem:[%s1595] sm:$0xff]
    %v1597 = vld [vmem:[%s1595 + $0x8] sm:$0xff]
    %v1598 = vpack.c.bf16 %v1586, %v1586
    %v1599 = vpack.c.bf16 %v1589, %v1589
    %1602 = vrot.lane.b32.xlu0 %v1586, 96
    %v1603 = vpop.permute.xlu0 %1602
    %1604 = vrot.lane.b32.xlu0 %v1589, 96
    %v1605 = vpop.permute.xlu0 %1604
    %v1608 = vpack.c.bf16 %v1603, %v1593
    %v1609 = vpack.c.bf16 %v1605, %v1594
    %1610 = vrot.lane.b32.xlu0 %v1586, 64
    %v1611 = vpop.permute.xlu0 %1610
    %1612 = vrot.lane.b32.xlu0 %v1589, 64
    %v1613 = vpop.permute.xlu0 %1612
    %v1616 = vpack.c.bf16 %v1611, %v1596
    %v1617 = vpack.c.bf16 %v1613, %v1597
    %v1619 = vsel %vm196, %v1598, 0
    %v1622 = vsel %vm196, %v1608, 0
    %1624 = vmatprep.subr.bf16.mxu0 0
    %1625 = vmatpush1.bf16.xpose.msra.mxu0 0
    %1626 = vmatprep.subr.bf16.mxu0 0
    %1627 = vmatpush1.bf16.xpose.msra.mxu0 0
    %1628 = vmatprep.subr.bf16.mxu0 0
    %1629 = vmatpush1.bf16.xpose.msra.mxu0 0
    %1630 = vmatprep.subr.bf16.mxu0 0
    %1631 = vmatpush1.bf16.xpose.msra.mxu0 0
    %1632 = vmatprep.subr.bf16.mxu0 0
    %1633 = vmatpush1.bf16.xpose.msra.mxu0 0
    %1634 = vmatprep.subr.bf16.mxu0 0
    %1635 = vmatpush1.bf16.xpose.msra.mxu0 0
    %1636 = vmatprep.subr.bf16.mxu0 0
    %1637 = vmatpush1.bf16.xpose.msra.mxu0 0
    %1638 = vmatprep.subr.bf16.mxu0 0
    %1639 = vmatpush1.bf16.xpose.msra.mxu0 %v1622
    %1640 = vmatprep.subr.bf16.mxu0 0
    %1641 = vmatpush2.bf16.xpose.msra.mxu0 0
    %1642 = vmatprep.subr.bf16.mxu0 0
    %1643 = vmatpush2.bf16.xpose.msra.mxu0 0
    %1644 = vmatprep.subr.bf16.mxu0 0
    %1645 = vmatpush2.bf16.xpose.msra.mxu0 0
    %1646 = vmatprep.subr.bf16.mxu0 0
    %1647 = vmatpush2.bf16.xpose.msra.mxu0 0
    %1648 = vmatprep.subr.bf16.mxu0 0
    %1649 = vmatpush2.bf16.xpose.msra.mxu0 0
    %1650 = vmatprep.subr.bf16.mxu0 0
    %1651 = vmatpush2.bf16.xpose.msra.mxu0 0
    %1652 = vmatprep.subr.bf16.mxu0 0
    %1653 = vmatpush2.bf16.xpose.msra.mxu0 0
    %1654 = vmatprep.subr.bf16.mxu0 0
    %1655 = vmatpush2.bf16.xpose.msra.mxu0 0
    %1656 = vmatprep.mubr.bf16.mxu0 0
    %1657 = vmatmul.mubr.bf16.gmra.mxu0 %v1619
    %v1658 = vpop.f32.mrf.mxu0
    %v1659 = vadd.f32 %v59, %v1658
    %v1660 = vpop.f32.mrf.mxu0
    %v1661 = vpop.f32.mrf.mxu0
    %v1662 = vpop.f32.mrf.mxu0
    %1663 = vdwg.mxu0
    %v1665 = vsel %vm196, %v1599, 0
    %v1668 = vsel %vm196, %v1609, 0
    %1670 = vmatprep.subr.bf16.mxu0 0
    %1671 = vmatpush1.bf16.xpose.msra.mxu0 0
    %1672 = vmatprep.subr.bf16.mxu0 0
    %1673 = vmatpush1.bf16.xpose.msra.mxu0 0
    %1674 = vmatprep.subr.bf16.mxu0 0
    %1675 = vmatpush1.bf16.xpose.msra.mxu0 0
    %1676 = vmatprep.subr.bf16.mxu0 0
    %1677 = vmatpush1.bf16.xpose.msra.mxu0 0
    %1678 = vmatprep.subr.bf16.mxu0 0
    %1679 = vmatpush1.bf16.xpose.msra.mxu0 0
    %1680 = vmatprep.subr.bf16.mxu0 0
    %1681 = vmatpush1.bf16.xpose.msra.mxu0 0
    %1682 = vmatprep.subr.bf16.mxu0 0
    %1683 = vmatpush1.bf16.xpose.msra.mxu0 0
    %1684 = vmatprep.subr.bf16.mxu0 0
    %1685 = vmatpush1.bf16.xpose.msra.mxu0 %v1668
    %1686 = vmatprep.subr.bf16.mxu0 0
    %1687 = vmatpush2.bf16.xpose.msra.mxu0 0
    %1688 = vmatprep.subr.bf16.mxu0 0
    %1689 = vmatpush2.bf16.xpose.msra.mxu0 0
    %1690 = vmatprep.subr.bf16.mxu0 0
    %1691 = vmatpush2.bf16.xpose.msra.mxu0 0
    %1692 = vmatprep.subr.bf16.mxu0 0
    %1693 = vmatpush2.bf16.xpose.msra.mxu0 0
    %1694 = vmatprep.subr.bf16.mxu0 0
    %1695 = vmatpush2.bf16.xpose.msra.mxu0 0
    %1696 = vmatprep.subr.bf16.mxu0 0
    %1697 = vmatpush2.bf16.xpose.msra.mxu0 0
    %1698 = vmatprep.subr.bf16.mxu0 0
    %1699 = vmatpush2.bf16.xpose.msra.mxu0 0
    %1700 = vmatprep.subr.bf16.mxu0 0
    %1701 = vmatpush2.bf16.xpose.msra.mxu0 0
    %1702 = vmatprep.mubr.bf16.mxu0 0
    %1703 = vmatmul.mubr.bf16.gmra.mxu0 %v1665
    %v1704 = vpop.f32.mrf.mxu0
    %v1705 = vadd.f32 %v60, %v1704
    %v1706 = vpop.f32.mrf.mxu0
    %v1707 = vpop.f32.mrf.mxu0
    %v1708 = vpop.f32.mrf.mxu0
    %1709 = vdwg.mxu0
    %v1710 = vsel %vm289, %v1659, -inf
    %1711 = vmax.xlane.f32.xlu0 %v1710
    %v1712 = vpop.xlane.xlu0 %1711
    %v1713 = vsel %vm289, %v1705, -inf
    %1714 = vmax.xlane.f32.xlu0 %v1713
    %v1715 = vpop.xlane.xlu0 %1714
    %v1716 = vsub.f32 %v1659, %v1712
    %v1717 = vsub.f32 %v1705, %v1715
    %v1718 = vmul.f32 %v1716, 1.442695
    %v1719 = vpow.pop %v1718
    %v1720 = vmul.f32 %v1717, 1.442695
    %v1721 = vpow.pop %v1720
    %v1722 = vsel %vm289, %v1719, 0.0
    %1723 = vadd.xlane.f32.xlu0 %v1722
    %v1724 = vpop.xlane.xlu0 %1723
    %v1725 = vsel %vm289, %v1721, 0.0
    %1726 = vadd.xlane.f32.xlu0 %v1725
    %v1727 = vpop.xlane.xlu0 %1726
    %v1728 = vrcp.pop %v1724
    %v1729 = vrcp.pop %v1727
    %v1730 = vmul.f32 %v1719, %v1728
    %v1731 = vmul.f32 %v1721, %v1729
    %v1732 = vpack.c.bf16 %v1730, %v1730
    %v1733 = vpack.c.bf16 %v1731, %v1731
    %v1735 = vsel %vm289, %v1732, 0
    %1737 = vmatprep.subr.bf16.mxu0 0
    %1738 = vmatpush1.bf16.msra.mxu0 0
    %1739 = vmatprep.subr.bf16.mxu0 0
    %1740 = vmatpush1.bf16.msra.mxu0 0
    %1741 = vmatprep.subr.bf16.mxu0 0
    %1742 = vmatpush1.bf16.msra.mxu0 0
    %1743 = vmatprep.subr.bf16.mxu0 0
    %1744 = vmatpush1.bf16.msra.mxu0 0
    %1745 = vmatprep.subr.bf16.mxu0 0
    %1746 = vmatpush1.bf16.msra.mxu0 0
    %1747 = vmatprep.subr.bf16.mxu0 0
    %1748 = vmatpush1.bf16.msra.mxu0 0
    %1749 = vmatprep.subr.bf16.mxu0 0
    %1750 = vmatpush1.bf16.msra.mxu0 0
    %1751 = vmatprep.subr.bf16.mxu0 0
    %1752 = vmatpush1.bf16.msra.mxu0 %v1616
    %1753 = vmatprep.subr.bf16.mxu0 0
    %1754 = vmatpush2.bf16.msra.mxu0 0
    %1755 = vmatprep.subr.bf16.mxu0 0
    %1756 = vmatpush2.bf16.msra.mxu0 0
    %1757 = vmatprep.subr.bf16.mxu0 0
    %1758 = vmatpush2.bf16.msra.mxu0 0
    %1759 = vmatprep.subr.bf16.mxu0 0
    %1760 = vmatpush2.bf16.msra.mxu0 0
    %1761 = vmatprep.subr.bf16.mxu0 0
    %1762 = vmatpush2.bf16.msra.mxu0 0
    %1763 = vmatprep.subr.bf16.mxu0 0
    %1764 = vmatpush2.bf16.msra.mxu0 0
    %1765 = vmatprep.subr.bf16.mxu0 0
    %1766 = vmatpush2.bf16.msra.mxu0 0
    %1767 = vmatprep.subr.bf16.mxu0 0
    %1768 = vmatpush2.bf16.msra.mxu0 0
    %1769 = vmatprep.mubr.bf16.mxu0 0
    %1770 = vmatmul.mubr.bf16.gmra.mxu0 %v1735
    %v1771 = vpop.f32.mrf.mxu0
    %v1772 = vadd.f32 0.0, %v1771
    %v1773 = vpop.f32.mrf.mxu0
    %v1774 = vpop.f32.mrf.mxu0
    %v1775 = vpop.f32.mrf.mxu0
    %1776 = vdwg.mxu0
    %v1778 = vsel %vm289, %v1733, 0
    %1780 = vmatprep.subr.bf16.mxu0 0
    %1781 = vmatpush1.bf16.msra.mxu0 0
    %1782 = vmatprep.subr.bf16.mxu0 0
    %1783 = vmatpush1.bf16.msra.mxu0 0
    %1784 = vmatprep.subr.bf16.mxu0 0
    %1785 = vmatpush1.bf16.msra.mxu0 0
    %1786 = vmatprep.subr.bf16.mxu0 0
    %1787 = vmatpush1.bf16.msra.mxu0 0
    %1788 = vmatprep.subr.bf16.mxu0 0
    %1789 = vmatpush1.bf16.msra.mxu0 0
    %1790 = vmatprep.subr.bf16.mxu0 0
    %1791 = vmatpush1.bf16.msra.mxu0 0
    %1792 = vmatprep.subr.bf16.mxu0 0
    %1793 = vmatpush1.bf16.msra.mxu0 0
    %1794 = vmatprep.subr.bf16.mxu0 0
    %1795 = vmatpush1.bf16.msra.mxu0 %v1617
    %1796 = vmatprep.subr.bf16.mxu0 0
    %1797 = vmatpush2.bf16.msra.mxu0 0
    %1798 = vmatprep.subr.bf16.mxu0 0
    %1799 = vmatpush2.bf16.msra.mxu0 0
    %1800 = vmatprep.subr.bf16.mxu0 0
    %1801 = vmatpush2.bf16.msra.mxu0 0
    %1802 = vmatprep.subr.bf16.mxu0 0
    %1803 = vmatpush2.bf16.msra.mxu0 0
    %1804 = vmatprep.subr.bf16.mxu0 0
    %1805 = vmatpush2.bf16.msra.mxu0 0
    %1806 = vmatprep.subr.bf16.mxu0 0
    %1807 = vmatpush2.bf16.msra.mxu0 0
    %1808 = vmatprep.subr.bf16.mxu0 0
    %1809 = vmatpush2.bf16.msra.mxu0 0
    %1810 = vmatprep.subr.bf16.mxu0 0
    %1811 = vmatpush2.bf16.msra.mxu0 0
    %1812 = vmatprep.mubr.bf16.mxu0 0
    %1813 = vmatmul.mubr.bf16.gmra.mxu0 %v1778
    %v1814 = vpop.f32.mrf.mxu0
    %v1815 = vadd.f32 0.0, %v1814
    %v1816 = vpop.f32.mrf.mxu0
    %v1817 = vpop.f32.mrf.mxu0
    %v1818 = vpop.f32.mrf.mxu0
    %1819 = vdwg.mxu0
    %v1820 = vpack.c.bf16 %v1815, %v1772
    %s1821 = scalar_lea.vmem %s8, 16
    %v1822 = vld [vmem:[%s1821] sm:$0xf]
    %1824 = vrot.lane.b32.xlu0 %v1598, 120
    %v1825 = vpop.permute.xlu0 %1824
    %1827 = vrot.lane.b32.xlu0 %v1608, 120
    %v1828 = vpop.permute.xlu0 %1827
    %v1830 = vsel %vm196, %v1825, 0
    %v1833 = vsel %vm196, %v1828, 0
    %1835 = vmatprep.subr.bf16.mxu0 0
    %1836 = vmatpush1.bf16.xpose.msra.mxu0 0
    %1837 = vmatprep.subr.bf16.mxu0 0
    %1838 = vmatpush1.bf16.xpose.msra.mxu0 0
    %1839 = vmatprep.subr.bf16.mxu0 0
    %1840 = vmatpush1.bf16.xpose.msra.mxu0 0
    %1841 = vmatprep.subr.bf16.mxu0 0
    %1842 = vmatpush1.bf16.xpose.msra.mxu0 0
    %1843 = vmatprep.subr.bf16.mxu0 0
    %1844 = vmatpush1.bf16.xpose.msra.mxu0 0
    %1845 = vmatprep.subr.bf16.mxu0 0
    %1846 = vmatpush1.bf16.xpose.msra.mxu0 0
    %1847 = vmatprep.subr.bf16.mxu0 0
    %1848 = vmatpush1.bf16.xpose.msra.mxu0 0
    %1849 = vmatprep.subr.bf16.mxu0 0
    %1850 = vmatpush1.bf16.xpose.msra.mxu0 %v1833
    %1851 = vmatprep.subr.bf16.mxu0 0
    %1852 = vmatpush2.bf16.xpose.msra.mxu0 0
    %1853 = vmatprep.subr.bf16.mxu0 0
    %1854 = vmatpush2.bf16.xpose.msra.mxu0 0
    %1855 = vmatprep.subr.bf16.mxu0 0
    %1856 = vmatpush2.bf16.xpose.msra.mxu0 0
    %1857 = vmatprep.subr.bf16.mxu0 0
    %1858 = vmatpush2.bf16.xpose.msra.mxu0 0
    %1859 = vmatprep.subr.bf16.mxu0 0
    %1860 = vmatpush2.bf16.xpose.msra.mxu0 0
    %1861 = vmatprep.subr.bf16.mxu0 0
    %1862 = vmatpush2.bf16.xpose.msra.mxu0 0
    %1863 = vmatprep.subr.bf16.mxu0 0
    %1864 = vmatpush2.bf16.xpose.msra.mxu0 0
    %1865 = vmatprep.subr.bf16.mxu0 0
    %1866 = vmatpush2.bf16.xpose.msra.mxu0 0
    %1867 = vmatprep.mubr.bf16.mxu0 0
    %1868 = vmatmul.mubr.bf16.gmra.mxu0 %v1830
    %v1869 = vpop.f32.mrf.mxu0
    %v1870 = vadd.f32 %v59, %v1869
    %v1871 = vpop.f32.mrf.mxu0
    %v1872 = vpop.f32.mrf.mxu0
    %v1873 = vpop.f32.mrf.mxu0
    %1874 = vdwg.mxu0
    %1876 = vrot.lane.b32.xlu0 %v1599, 120
    %v1877 = vpop.permute.xlu0 %1876
    %1879 = vrot.lane.b32.xlu0 %v1609, 120
    %v1880 = vpop.permute.xlu0 %1879
    %v1882 = vsel %vm196, %v1877, 0
    %v1885 = vsel %vm196, %v1880, 0
    %1887 = vmatprep.subr.bf16.mxu0 0
    %1888 = vmatpush1.bf16.xpose.msra.mxu0 0
    %1889 = vmatprep.subr.bf16.mxu0 0
    %1890 = vmatpush1.bf16.xpose.msra.mxu0 0
    %1891 = vmatprep.subr.bf16.mxu0 0
    %1892 = vmatpush1.bf16.xpose.msra.mxu0 0
    %1893 = vmatprep.subr.bf16.mxu0 0
    %1894 = vmatpush1.bf16.xpose.msra.mxu0 0
    %1895 = vmatprep.subr.bf16.mxu0 0
    %1896 = vmatpush1.bf16.xpose.msra.mxu0 0
    %1897 = vmatprep.subr.bf16.mxu0 0
    %1898 = vmatpush1.bf16.xpose.msra.mxu0 0
    %1899 = vmatprep.subr.bf16.mxu0 0
    %1900 = vmatpush1.bf16.xpose.msra.mxu0 0
    %1901 = vmatprep.subr.bf16.mxu0 0
    %1902 = vmatpush1.bf16.xpose.msra.mxu0 %v1885
    %1903 = vmatprep.subr.bf16.mxu0 0
    %1904 = vmatpush2.bf16.xpose.msra.mxu0 0
    %1905 = vmatprep.subr.bf16.mxu0 0
    %1906 = vmatpush2.bf16.xpose.msra.mxu0 0
    %1907 = vmatprep.subr.bf16.mxu0 0
    %1908 = vmatpush2.bf16.xpose.msra.mxu0 0
    %1909 = vmatprep.subr.bf16.mxu0 0
    %1910 = vmatpush2.bf16.xpose.msra.mxu0 0
    %1911 = vmatprep.subr.bf16.mxu0 0
    %1912 = vmatpush2.bf16.xpose.msra.mxu0 0
    %1913 = vmatprep.subr.bf16.mxu0 0
    %1914 = vmatpush2.bf16.xpose.msra.mxu0 0
    %1915 = vmatprep.subr.bf16.mxu0 0
    %1916 = vmatpush2.bf16.xpose.msra.mxu0 0
    %1917 = vmatprep.subr.bf16.mxu0 0
    %1918 = vmatpush2.bf16.xpose.msra.mxu0 0
    %1919 = vmatprep.mubr.bf16.mxu0 0
    %1920 = vmatmul.mubr.bf16.gmra.mxu0 %v1882
    %v1921 = vpop.f32.mrf.mxu0
    %v1922 = vadd.f32 %v60, %v1921
    %v1923 = vpop.f32.mrf.mxu0
    %v1924 = vpop.f32.mrf.mxu0
    %v1925 = vpop.f32.mrf.mxu0
    %1926 = vdwg.mxu0
    %v1927 = vsel %vm289, %v1870, -inf
    %1928 = vmax.xlane.f32.xlu0 %v1927
    %v1929 = vpop.xlane.xlu0 %1928
    %v1930 = vsel %vm289, %v1922, -inf
    %1931 = vmax.xlane.f32.xlu0 %v1930
    %v1932 = vpop.xlane.xlu0 %1931
    %v1933 = vsub.f32 %v1870, %v1929
    %v1934 = vsub.f32 %v1922, %v1932
    %v1935 = vmul.f32 %v1933, 1.442695
    %v1936 = vpow.pop %v1935
    %v1937 = vmul.f32 %v1934, 1.442695
    %v1938 = vpow.pop %v1937
    %v1939 = vsel %vm289, %v1936, 0.0
    %1940 = vadd.xlane.f32.xlu0 %v1939
    %v1941 = vpop.xlane.xlu0 %1940
    %v1942 = vsel %vm289, %v1938, 0.0
    %1943 = vadd.xlane.f32.xlu0 %v1942
    %v1944 = vpop.xlane.xlu0 %1943
    %v1945 = vrcp.pop %v1941
    %v1946 = vrcp.pop %v1944
    %v1947 = vmul.f32 %v1936, %v1945
    %v1948 = vmul.f32 %v1938, %v1946
    %v1949 = vpack.c.bf16 %v1947, %v1947
    %v1950 = vpack.c.bf16 %v1948, %v1948
    %1952 = vrot.lane.b32.xlu0 %v1616, 120
    %v1953 = vpop.permute.xlu0 %1952
    %v1956 = vsel %vm289, %v1949, 0
    %1958 = vmatprep.subr.bf16.mxu0 0
    %1959 = vmatpush1.bf16.msra.mxu0 0
    %1960 = vmatprep.subr.bf16.mxu0 0
    %1961 = vmatpush1.bf16.msra.mxu0 0
    %1962 = vmatprep.subr.bf16.mxu0 0
    %1963 = vmatpush1.bf16.msra.mxu0 0
    %1964 = vmatprep.subr.bf16.mxu0 0
    %1965 = vmatpush1.bf16.msra.mxu0 0
    %1966 = vmatprep.subr.bf16.mxu0 0
    %1967 = vmatpush1.bf16.msra.mxu0 0
    %1968 = vmatprep.subr.bf16.mxu0 0
    %1969 = vmatpush1.bf16.msra.mxu0 0
    %1970 = vmatprep.subr.bf16.mxu0 0
    %1971 = vmatpush1.bf16.msra.mxu0 0
    %1972 = vmatprep.subr.bf16.mxu0 0
    %1973 = vmatpush1.bf16.msra.mxu0 %v1953
    %1974 = vmatprep.subr.bf16.mxu0 0
    %1975 = vmatpush2.bf16.msra.mxu0 0
    %1976 = vmatprep.subr.bf16.mxu0 0
    %1977 = vmatpush2.bf16.msra.mxu0 0
    %1978 = vmatprep.subr.bf16.mxu0 0
    %1979 = vmatpush2.bf16.msra.mxu0 0
    %1980 = vmatprep.subr.bf16.mxu0 0
    %1981 = vmatpush2.bf16.msra.mxu0 0
    %1982 = vmatprep.subr.bf16.mxu0 0
    %1983 = vmatpush2.bf16.msra.mxu0 0
    %1984 = vmatprep.subr.bf16.mxu0 0
    %1985 = vmatpush2.bf16.msra.mxu0 0
    %1986 = vmatprep.subr.bf16.mxu0 0
    %1987 = vmatpush2.bf16.msra.mxu0 0
    %1988 = vmatprep.subr.bf16.mxu0 0
    %1989 = vmatpush2.bf16.msra.mxu0 0
    %1990 = vmatprep.mubr.bf16.mxu0 0
    %1991 = vmatmul.mubr.bf16.gmra.mxu0 %v1956
    %v1992 = vpop.f32.mrf.mxu0
    %v1993 = vadd.f32 0.0, %v1992
    %v1994 = vpop.f32.mrf.mxu0
    %v1995 = vpop.f32.mrf.mxu0
    %v1996 = vpop.f32.mrf.mxu0
    %1997 = vdwg.mxu0
    %1999 = vrot.lane.b32.xlu0 %v1617, 120
    %v2000 = vpop.permute.xlu0 %1999
    %v2003 = vsel %vm289, %v1950, 0
    %2005 = vmatprep.subr.bf16.mxu0 0
    %2006 = vmatpush1.bf16.msra.mxu0 0
    %2007 = vmatprep.subr.bf16.mxu0 0
    %2008 = vmatpush1.bf16.msra.mxu0 0
    %2009 = vmatprep.subr.bf16.mxu0 0
    %2010 = vmatpush1.bf16.msra.mxu0 0
    %2011 = vmatprep.subr.bf16.mxu0 0
    %2012 = vmatpush1.bf16.msra.mxu0 0
    %2013 = vmatprep.subr.bf16.mxu0 0
    %2014 = vmatpush1.bf16.msra.mxu0 0
    %2015 = vmatprep.subr.bf16.mxu0 0
    %2016 = vmatpush1.bf16.msra.mxu0 0
    %2017 = vmatprep.subr.bf16.mxu0 0
    %2018 = vmatpush1.bf16.msra.mxu0 0
    %2019 = vmatprep.subr.bf16.mxu0 0
    %2020 = vmatpush1.bf16.msra.mxu0 %v2000
    %2021 = vmatprep.subr.bf16.mxu0 0
    %2022 = vmatpush2.bf16.msra.mxu0 0
    %2023 = vmatprep.subr.bf16.mxu0 0
    %2024 = vmatpush2.bf16.msra.mxu0 0
    %2025 = vmatprep.subr.bf16.mxu0 0
    %2026 = vmatpush2.bf16.msra.mxu0 0
    %2027 = vmatprep.subr.bf16.mxu0 0
    %2028 = vmatpush2.bf16.msra.mxu0 0
    %2029 = vmatprep.subr.bf16.mxu0 0
    %2030 = vmatpush2.bf16.msra.mxu0 0
    %2031 = vmatprep.subr.bf16.mxu0 0
    %2032 = vmatpush2.bf16.msra.mxu0 0
    %2033 = vmatprep.subr.bf16.mxu0 0
    %2034 = vmatpush2.bf16.msra.mxu0 0
    %2035 = vmatprep.subr.bf16.mxu0 0
    %2036 = vmatpush2.bf16.msra.mxu0 0
    %2037 = vmatprep.mubr.bf16.mxu0 0
    %2038 = vmatmul.mubr.bf16.gmra.mxu0 %v2003
    %v2039 = vpop.f32.mrf.mxu0
    %v2040 = vadd.f32 0.0, %v2039
    %v2041 = vpop.f32.mrf.mxu0
    %v2042 = vpop.f32.mrf.mxu0
    %v2043 = vpop.f32.mrf.mxu0
    %2044 = vdwg.mxu0
    %v2045 = vpack.c.bf16 %v2040, %v1993
    %s2046 = scalar_lea.vmem %s8, 20
    %v2047 = vld [vmem:[%s2046] sm:$0xf]
    %v2049 = vsel %vm196, %v2045, 0
    %v2052 = vsel %vm630, %v2047, 0
    %2054 = vmatprep.subr.bf16.mxu0 0
    %2055 = vmatpush1.bf16.msra.mxu0 0
    %2056 = vmatprep.subr.bf16.mxu0 0
    %2057 = vmatpush1.bf16.msra.mxu0 0
    %2058 = vmatprep.subr.bf16.mxu0 0
    %2059 = vmatpush1.bf16.msra.mxu0 0
    %2060 = vmatprep.subr.bf16.mxu0 0
    %2061 = vmatpush1.bf16.msra.mxu0 0
    %2062 = vmatprep.subr.bf16.mxu0 0
    %2063 = vmatpush1.bf16.msra.mxu0 0
    %2064 = vmatprep.subr.bf16.mxu0 0
    %2065 = vmatpush1.bf16.msra.mxu0 0
    %2066 = vmatprep.subr.bf16.mxu0 0
    %2067 = vmatpush1.bf16.msra.mxu0 0
    %2068 = vmatprep.subr.bf16.mxu0 0
    %2069 = vmatpush1.bf16.msra.mxu0 %v2052
    %2070 = vmatprep.subr.bf16.mxu0 0
    %2071 = vmatpush2.bf16.msra.mxu0 0
    %2072 = vmatprep.subr.bf16.mxu0 0
    %2073 = vmatpush2.bf16.msra.mxu0 0
    %2074 = vmatprep.subr.bf16.mxu0 0
    %2075 = vmatpush2.bf16.msra.mxu0 0
    %2076 = vmatprep.subr.bf16.mxu0 0
    %2077 = vmatpush2.bf16.msra.mxu0 0
    %2078 = vmatprep.subr.bf16.mxu0 0
    %2079 = vmatpush2.bf16.msra.mxu0 0
    %2080 = vmatprep.subr.bf16.mxu0 0
    %2081 = vmatpush2.bf16.msra.mxu0 0
    %2082 = vmatprep.subr.bf16.mxu0 0
    %2083 = vmatpush2.bf16.msra.mxu0 0
    %2084 = vmatprep.subr.bf16.mxu0 0
    %2085 = vmatpush2.bf16.msra.mxu0 0
    %2086 = vmatprep.mubr.bf16.mxu0 0
    %2087 = vmatmul.mubr.bf16.gmra.mxu0 %v2049
    %v2088 = vpop.f32.mrf.mxu0
    %v2089 = vadd.f32 0.0, %v2088
    %v2090 = vpop.f32.mrf.mxu0
    %v2091 = vpop.f32.mrf.mxu0
    %v2092 = vadd.f32 0.0, %v2091
    %v2093 = vpop.f32.mrf.mxu0
    %2094 = vdwg.mxu0
    %v2096 = vsel %vm196, %v1820, 0
    %v2099 = vsel %vm630, %v1822, 0
    %2101 = vmatprep.subr.bf16.mxu0 0
    %2102 = vmatpush1.bf16.msra.mxu0 0
    %2103 = vmatprep.subr.bf16.mxu0 0
    %2104 = vmatpush1.bf16.msra.mxu0 0
    %2105 = vmatprep.subr.bf16.mxu0 0
    %2106 = vmatpush1.bf16.msra.mxu0 0
    %2107 = vmatprep.subr.bf16.mxu0 0
    %2108 = vmatpush1.bf16.msra.mxu0 0
    %2109 = vmatprep.subr.bf16.mxu0 0
    %2110 = vmatpush1.bf16.msra.mxu0 0
    %2111 = vmatprep.subr.bf16.mxu0 0
    %2112 = vmatpush1.bf16.msra.mxu0 0
    %2113 = vmatprep.subr.bf16.mxu0 0
    %2114 = vmatpush1.bf16.msra.mxu0 0
    %2115 = vmatprep.subr.bf16.mxu0 0
    %2116 = vmatpush1.bf16.msra.mxu0 %v2099
    %2117 = vmatprep.subr.bf16.mxu0 0
    %2118 = vmatpush2.bf16.msra.mxu0 0
    %2119 = vmatprep.subr.bf16.mxu0 0
    %2120 = vmatpush2.bf16.msra.mxu0 0
    %2121 = vmatprep.subr.bf16.mxu0 0
    %2122 = vmatpush2.bf16.msra.mxu0 0
    %2123 = vmatprep.subr.bf16.mxu0 0
    %2124 = vmatpush2.bf16.msra.mxu0 0
    %2125 = vmatprep.subr.bf16.mxu0 0
    %2126 = vmatpush2.bf16.msra.mxu0 0
    %2127 = vmatprep.subr.bf16.mxu0 0
    %2128 = vmatpush2.bf16.msra.mxu0 0
    %2129 = vmatprep.subr.bf16.mxu0 0
    %2130 = vmatpush2.bf16.msra.mxu0 0
    %2131 = vmatprep.subr.bf16.mxu0 0
    %2132 = vmatpush2.bf16.msra.mxu0 0
    %2133 = vmatprep.mubr.bf16.mxu0 0
    %2134 = vmatmul.mubr.bf16.gmra.mxu0 %v2096
    %v2135 = vpop.f32.mrf.mxu0
    %v2136 = vadd.f32 %v2089, %v2135
    %v2137 = vpop.f32.mrf.mxu0
    %v2138 = vpop.f32.mrf.mxu0
    %v2139 = vadd.f32 %v2092, %v2138
    %v2140 = vpop.f32.mrf.mxu0
    %2141 = vdwg.mxu0
    %2142 = vrot.lane.b32.xlu0 %v1598, 112
    %v2143 = vpop.permute.xlu0 %2142
    %2144 = vrot.lane.b32.xlu0 %v1608, 112
    %v2145 = vpop.permute.xlu0 %2144
    %v2147 = vsel %vm196, %v2143, 0
    %v2150 = vsel %vm196, %v2145, 0
    %2152 = vmatprep.subr.bf16.mxu0 0
    %2153 = vmatpush1.bf16.xpose.msra.mxu0 0
    %2154 = vmatprep.subr.bf16.mxu0 0
    %2155 = vmatpush1.bf16.xpose.msra.mxu0 0
    %2156 = vmatprep.subr.bf16.mxu0 0
    %2157 = vmatpush1.bf16.xpose.msra.mxu0 0
    %2158 = vmatprep.subr.bf16.mxu0 0
    %2159 = vmatpush1.bf16.xpose.msra.mxu0 0
    %2160 = vmatprep.subr.bf16.mxu0 0
    %2161 = vmatpush1.bf16.xpose.msra.mxu0 0
    %2162 = vmatprep.subr.bf16.mxu0 0
    %2163 = vmatpush1.bf16.xpose.msra.mxu0 0
    %2164 = vmatprep.subr.bf16.mxu0 0
    %2165 = vmatpush1.bf16.xpose.msra.mxu0 0
    %2166 = vmatprep.subr.bf16.mxu0 0
    %2167 = vmatpush1.bf16.xpose.msra.mxu0 %v2150
    %2168 = vmatprep.subr.bf16.mxu0 0
    %2169 = vmatpush2.bf16.xpose.msra.mxu0 0
    %2170 = vmatprep.subr.bf16.mxu0 0
    %2171 = vmatpush2.bf16.xpose.msra.mxu0 0
    %2172 = vmatprep.subr.bf16.mxu0 0
    %2173 = vmatpush2.bf16.xpose.msra.mxu0 0
    %2174 = vmatprep.subr.bf16.mxu0 0
    %2175 = vmatpush2.bf16.xpose.msra.mxu0 0
    %2176 = vmatprep.subr.bf16.mxu0 0
    %2177 = vmatpush2.bf16.xpose.msra.mxu0 0
    %2178 = vmatprep.subr.bf16.mxu0 0
    %2179 = vmatpush2.bf16.xpose.msra.mxu0 0
    %2180 = vmatprep.subr.bf16.mxu0 0
    %2181 = vmatpush2.bf16.xpose.msra.mxu0 0
    %2182 = vmatprep.subr.bf16.mxu0 0
    %2183 = vmatpush2.bf16.xpose.msra.mxu0 0
    %2184 = vmatprep.mubr.bf16.mxu0 0
    %2185 = vmatmul.mubr.bf16.gmra.mxu0 %v2147
    %v2186 = vpop.f32.mrf.mxu0
    %v2187 = vadd.f32 %v59, %v2186
    %v2188 = vpop.f32.mrf.mxu0
    %v2189 = vpop.f32.mrf.mxu0
    %v2190 = vpop.f32.mrf.mxu0
    %2191 = vdwg.mxu0
    %2192 = vrot.lane.b32.xlu0 %v1599, 112
    %v2193 = vpop.permute.xlu0 %2192
    %2194 = vrot.lane.b32.xlu0 %v1609, 112
    %v2195 = vpop.permute.xlu0 %2194
    %v2197 = vsel %vm196, %v2193, 0
    %v2200 = vsel %vm196, %v2195, 0
    %2202 = vmatprep.subr.bf16.mxu0 0
    %2203 = vmatpush1.bf16.xpose.msra.mxu0 0
    %2204 = vmatprep.subr.bf16.mxu0 0
    %2205 = vmatpush1.bf16.xpose.msra.mxu0 0
    %2206 = vmatprep.subr.bf16.mxu0 0
    %2207 = vmatpush1.bf16.xpose.msra.mxu0 0
    %2208 = vmatprep.subr.bf16.mxu0 0
    %2209 = vmatpush1.bf16.xpose.msra.mxu0 0
    %2210 = vmatprep.subr.bf16.mxu0 0
    %2211 = vmatpush1.bf16.xpose.msra.mxu0 0
    %2212 = vmatprep.subr.bf16.mxu0 0
    %2213 = vmatpush1.bf16.xpose.msra.mxu0 0
    %2214 = vmatprep.subr.bf16.mxu0 0
    %2215 = vmatpush1.bf16.xpose.msra.mxu0 0
    %2216 = vmatprep.subr.bf16.mxu0 0
    %2217 = vmatpush1.bf16.xpose.msra.mxu0 %v2200
    %2218 = vmatprep.subr.bf16.mxu0 0
    %2219 = vmatpush2.bf16.xpose.msra.mxu0 0
    %2220 = vmatprep.subr.bf16.mxu0 0
    %2221 = vmatpush2.bf16.xpose.msra.mxu0 0
    %2222 = vmatprep.subr.bf16.mxu0 0
    %2223 = vmatpush2.bf16.xpose.msra.mxu0 0
    %2224 = vmatprep.subr.bf16.mxu0 0
    %2225 = vmatpush2.bf16.xpose.msra.mxu0 0
    %2226 = vmatprep.subr.bf16.mxu0 0
    %2227 = vmatpush2.bf16.xpose.msra.mxu0 0
    %2228 = vmatprep.subr.bf16.mxu0 0
    %2229 = vmatpush2.bf16.xpose.msra.mxu0 0
    %2230 = vmatprep.subr.bf16.mxu0 0
    %2231 = vmatpush2.bf16.xpose.msra.mxu0 0
    %2232 = vmatprep.subr.bf16.mxu0 0
    %2233 = vmatpush2.bf16.xpose.msra.mxu0 0
    %2234 = vmatprep.mubr.bf16.mxu0 0
    %2235 = vmatmul.mubr.bf16.gmra.mxu0 %v2197
    %v2236 = vpop.f32.mrf.mxu0
    %v2237 = vadd.f32 %v60, %v2236
    %v2238 = vpop.f32.mrf.mxu0
    %v2239 = vpop.f32.mrf.mxu0
    %v2240 = vpop.f32.mrf.mxu0
    %2241 = vdwg.mxu0
    %v2242 = vsel %vm289, %v2187, -inf
    %2243 = vmax.xlane.f32.xlu0 %v2242
    %v2244 = vpop.xlane.xlu0 %2243
    %v2245 = vsel %vm289, %v2237, -inf
    %2246 = vmax.xlane.f32.xlu0 %v2245
    %v2247 = vpop.xlane.xlu0 %2246
    %v2248 = vsub.f32 %v2187, %v2244
    %v2249 = vsub.f32 %v2237, %v2247
    %v2250 = vmul.f32 %v2248, 1.442695
    %v2251 = vpow.pop %v2250
    %v2252 = vmul.f32 %v2249, 1.442695
    %v2253 = vpow.pop %v2252
    %v2254 = vsel %vm289, %v2251, 0.0
    %2255 = vadd.xlane.f32.xlu0 %v2254
    %v2256 = vpop.xlane.xlu0 %2255
    %v2257 = vsel %vm289, %v2253, 0.0
    %2258 = vadd.xlane.f32.xlu0 %v2257
    %v2259 = vpop.xlane.xlu0 %2258
    %v2260 = vrcp.pop %v2256
    %v2261 = vrcp.pop %v2259
    %v2262 = vmul.f32 %v2251, %v2260
    %v2263 = vmul.f32 %v2253, %v2261
    %v2264 = vpack.c.bf16 %v2262, %v2262
    %v2265 = vpack.c.bf16 %v2263, %v2263
    %2266 = vrot.lane.b32.xlu0 %v1616, 112
    %v2267 = vpop.permute.xlu0 %2266
    %v2270 = vsel %vm289, %v2264, 0
    %2272 = vmatprep.subr.bf16.mxu0 0
    %2273 = vmatpush1.bf16.msra.mxu0 0
    %2274 = vmatprep.subr.bf16.mxu0 0
    %2275 = vmatpush1.bf16.msra.mxu0 0
    %2276 = vmatprep.subr.bf16.mxu0 0
    %2277 = vmatpush1.bf16.msra.mxu0 0
    %2278 = vmatprep.subr.bf16.mxu0 0
    %2279 = vmatpush1.bf16.msra.mxu0 0
    %2280 = vmatprep.subr.bf16.mxu0 0
    %2281 = vmatpush1.bf16.msra.mxu0 0
    %2282 = vmatprep.subr.bf16.mxu0 0
    %2283 = vmatpush1.bf16.msra.mxu0 0
    %2284 = vmatprep.subr.bf16.mxu0 0
    %2285 = vmatpush1.bf16.msra.mxu0 0
    %2286 = vmatprep.subr.bf16.mxu0 0
    %2287 = vmatpush1.bf16.msra.mxu0 %v2267
    %2288 = vmatprep.subr.bf16.mxu0 0
    %2289 = vmatpush2.bf16.msra.mxu0 0
    %2290 = vmatprep.subr.bf16.mxu0 0
    %2291 = vmatpush2.bf16.msra.mxu0 0
    %2292 = vmatprep.subr.bf16.mxu0 0
    %2293 = vmatpush2.bf16.msra.mxu0 0
    %2294 = vmatprep.subr.bf16.mxu0 0
    %2295 = vmatpush2.bf16.msra.mxu0 0
    %2296 = vmatprep.subr.bf16.mxu0 0
    %2297 = vmatpush2.bf16.msra.mxu0 0
    %2298 = vmatprep.subr.bf16.mxu0 0
    %2299 = vmatpush2.bf16.msra.mxu0 0
    %2300 = vmatprep.subr.bf16.mxu0 0
    %2301 = vmatpush2.bf16.msra.mxu0 0
    %2302 = vmatprep.subr.bf16.mxu0 0
    %2303 = vmatpush2.bf16.msra.mxu0 0
    %2304 = vmatprep.mubr.bf16.mxu0 0
    %2305 = vmatmul.mubr.bf16.gmra.mxu0 %v2270
    %v2306 = vpop.f32.mrf.mxu0
    %v2307 = vadd.f32 0.0, %v2306
    %v2308 = vpop.f32.mrf.mxu0
    %v2309 = vpop.f32.mrf.mxu0
    %v2310 = vpop.f32.mrf.mxu0
    %2311 = vdwg.mxu0
    %2312 = vrot.lane.b32.xlu0 %v1617, 112
    %v2313 = vpop.permute.xlu0 %2312
    %v2316 = vsel %vm289, %v2265, 0
    %2318 = vmatprep.subr.bf16.mxu0 0
    %2319 = vmatpush1.bf16.msra.mxu0 0
    %2320 = vmatprep.subr.bf16.mxu0 0
    %2321 = vmatpush1.bf16.msra.mxu0 0
    %2322 = vmatprep.subr.bf16.mxu0 0
    %2323 = vmatpush1.bf16.msra.mxu0 0
    %2324 = vmatprep.subr.bf16.mxu0 0
    %2325 = vmatpush1.bf16.msra.mxu0 0
    %2326 = vmatprep.subr.bf16.mxu0 0
    %2327 = vmatpush1.bf16.msra.mxu0 0
    %2328 = vmatprep.subr.bf16.mxu0 0
    %2329 = vmatpush1.bf16.msra.mxu0 0
    %2330 = vmatprep.subr.bf16.mxu0 0
    %2331 = vmatpush1.bf16.msra.mxu0 0
    %2332 = vmatprep.subr.bf16.mxu0 0
    %2333 = vmatpush1.bf16.msra.mxu0 %v2313
    %2334 = vmatprep.subr.bf16.mxu0 0
    %2335 = vmatpush2.bf16.msra.mxu0 0
    %2336 = vmatprep.subr.bf16.mxu0 0
    %2337 = vmatpush2.bf16.msra.mxu0 0
    %2338 = vmatprep.subr.bf16.mxu0 0
    %2339 = vmatpush2.bf16.msra.mxu0 0
    %2340 = vmatprep.subr.bf16.mxu0 0
    %2341 = vmatpush2.bf16.msra.mxu0 0
    %2342 = vmatprep.subr.bf16.mxu0 0
    %2343 = vmatpush2.bf16.msra.mxu0 0
    %2344 = vmatprep.subr.bf16.mxu0 0
    %2345 = vmatpush2.bf16.msra.mxu0 0
    %2346 = vmatprep.subr.bf16.mxu0 0
    %2347 = vmatpush2.bf16.msra.mxu0 0
    %2348 = vmatprep.subr.bf16.mxu0 0
    %2349 = vmatpush2.bf16.msra.mxu0 0
    %2350 = vmatprep.mubr.bf16.mxu0 0
    %2351 = vmatmul.mubr.bf16.gmra.mxu0 %v2316
    %v2352 = vpop.f32.mrf.mxu0
    %v2353 = vadd.f32 0.0, %v2352
    %v2354 = vpop.f32.mrf.mxu0
    %v2355 = vpop.f32.mrf.mxu0
    %v2356 = vpop.f32.mrf.mxu0
    %2357 = vdwg.mxu0
    %v2358 = vpack.c.bf16 %v2353, %v2307
    %s2359 = scalar_lea.vmem %s8, 24
    %v2360 = vld [vmem:[%s2359] sm:$0xf]
    %v2362 = vsel %vm196, %v2358, 0
    %v2365 = vsel %vm630, %v2360, 0
    %2367 = vmatprep.subr.bf16.mxu0 0
    %2368 = vmatpush1.bf16.msra.mxu0 0
    %2369 = vmatprep.subr.bf16.mxu0 0
    %2370 = vmatpush1.bf16.msra.mxu0 0
    %2371 = vmatprep.subr.bf16.mxu0 0
    %2372 = vmatpush1.bf16.msra.mxu0 0
    %2373 = vmatprep.subr.bf16.mxu0 0
    %2374 = vmatpush1.bf16.msra.mxu0 0
    %2375 = vmatprep.subr.bf16.mxu0 0
    %2376 = vmatpush1.bf16.msra.mxu0 0
    %2377 = vmatprep.subr.bf16.mxu0 0
    %2378 = vmatpush1.bf16.msra.mxu0 0
    %2379 = vmatprep.subr.bf16.mxu0 0
    %2380 = vmatpush1.bf16.msra.mxu0 0
    %2381 = vmatprep.subr.bf16.mxu0 0
    %2382 = vmatpush1.bf16.msra.mxu0 %v2365
    %2383 = vmatprep.subr.bf16.mxu0 0
    %2384 = vmatpush2.bf16.msra.mxu0 0
    %2385 = vmatprep.subr.bf16.mxu0 0
    %2386 = vmatpush2.bf16.msra.mxu0 0
    %2387 = vmatprep.subr.bf16.mxu0 0
    %2388 = vmatpush2.bf16.msra.mxu0 0
    %2389 = vmatprep.subr.bf16.mxu0 0
    %2390 = vmatpush2.bf16.msra.mxu0 0
    %2391 = vmatprep.subr.bf16.mxu0 0
    %2392 = vmatpush2.bf16.msra.mxu0 0
    %2393 = vmatprep.subr.bf16.mxu0 0
    %2394 = vmatpush2.bf16.msra.mxu0 0
    %2395 = vmatprep.subr.bf16.mxu0 0
    %2396 = vmatpush2.bf16.msra.mxu0 0
    %2397 = vmatprep.subr.bf16.mxu0 0
    %2398 = vmatpush2.bf16.msra.mxu0 0
    %2399 = vmatprep.mubr.bf16.mxu0 0
    %2400 = vmatmul.mubr.bf16.gmra.mxu0 %v2362
    %v2401 = vpop.f32.mrf.mxu0
    %v2402 = vadd.f32 0.0, %v2401
    %v2403 = vpop.f32.mrf.mxu0
    %v2404 = vpop.f32.mrf.mxu0
    %v2405 = vadd.f32 0.0, %v2404
    %v2406 = vpop.f32.mrf.mxu0
    %2407 = vdwg.mxu0
    %v2408 = vadd.f32 %v2136, %v2402
    %v2409 = vadd.f32 %v2139, %v2405
    %2410 = vrot.lane.b32.xlu0 %v1598, 104
    %v2411 = vpop.permute.xlu0 %2410
    %2412 = vrot.lane.b32.xlu0 %v1608, 104
    %v2413 = vpop.permute.xlu0 %2412
    %v2415 = vsel %vm196, %v2411, 0
    %v2418 = vsel %vm196, %v2413, 0
    %2420 = vmatprep.subr.bf16.mxu0 0
    %2421 = vmatpush1.bf16.xpose.msra.mxu0 0
    %2422 = vmatprep.subr.bf16.mxu0 0
    %2423 = vmatpush1.bf16.xpose.msra.mxu0 0
    %2424 = vmatprep.subr.bf16.mxu0 0
    %2425 = vmatpush1.bf16.xpose.msra.mxu0 0
    %2426 = vmatprep.subr.bf16.mxu0 0
    %2427 = vmatpush1.bf16.xpose.msra.mxu0 0
    %2428 = vmatprep.subr.bf16.mxu0 0
    %2429 = vmatpush1.bf16.xpose.msra.mxu0 0
    %2430 = vmatprep.subr.bf16.mxu0 0
    %2431 = vmatpush1.bf16.xpose.msra.mxu0 0
    %2432 = vmatprep.subr.bf16.mxu0 0
    %2433 = vmatpush1.bf16.xpose.msra.mxu0 0
    %2434 = vmatprep.subr.bf16.mxu0 0
    %2435 = vmatpush1.bf16.xpose.msra.mxu0 %v2418
    %2436 = vmatprep.subr.bf16.mxu0 0
    %2437 = vmatpush2.bf16.xpose.msra.mxu0 0
    %2438 = vmatprep.subr.bf16.mxu0 0
    %2439 = vmatpush2.bf16.xpose.msra.mxu0 0
    %2440 = vmatprep.subr.bf16.mxu0 0
    %2441 = vmatpush2.bf16.xpose.msra.mxu0 0
    %2442 = vmatprep.subr.bf16.mxu0 0
    %2443 = vmatpush2.bf16.xpose.msra.mxu0 0
    %2444 = vmatprep.subr.bf16.mxu0 0
    %2445 = vmatpush2.bf16.xpose.msra.mxu0 0
    %2446 = vmatprep.subr.bf16.mxu0 0
    %2447 = vmatpush2.bf16.xpose.msra.mxu0 0
    %2448 = vmatprep.subr.bf16.mxu0 0
    %2449 = vmatpush2.bf16.xpose.msra.mxu0 0
    %2450 = vmatprep.subr.bf16.mxu0 0
    %2451 = vmatpush2.bf16.xpose.msra.mxu0 0
    %2452 = vmatprep.mubr.bf16.mxu0 0
    %2453 = vmatmul.mubr.bf16.gmra.mxu0 %v2415
    %v2454 = vpop.f32.mrf.mxu0
    %v2455 = vadd.f32 %v59, %v2454
    %v2456 = vpop.f32.mrf.mxu0
    %v2457 = vpop.f32.mrf.mxu0
    %v2458 = vpop.f32.mrf.mxu0
    %2459 = vdwg.mxu0
    %2460 = vrot.lane.b32.xlu0 %v1599, 104
    %v2461 = vpop.permute.xlu0 %2460
    %2462 = vrot.lane.b32.xlu0 %v1609, 104
    %v2463 = vpop.permute.xlu0 %2462
    %v2465 = vsel %vm196, %v2461, 0
    %v2468 = vsel %vm196, %v2463, 0
    %2470 = vmatprep.subr.bf16.mxu0 0
    %2471 = vmatpush1.bf16.xpose.msra.mxu0 0
    %2472 = vmatprep.subr.bf16.mxu0 0
    %2473 = vmatpush1.bf16.xpose.msra.mxu0 0
    %2474 = vmatprep.subr.bf16.mxu0 0
    %2475 = vmatpush1.bf16.xpose.msra.mxu0 0
    %2476 = vmatprep.subr.bf16.mxu0 0
    %2477 = vmatpush1.bf16.xpose.msra.mxu0 0
    %2478 = vmatprep.subr.bf16.mxu0 0
    %2479 = vmatpush1.bf16.xpose.msra.mxu0 0
    %2480 = vmatprep.subr.bf16.mxu0 0
    %2481 = vmatpush1.bf16.xpose.msra.mxu0 0
    %2482 = vmatprep.subr.bf16.mxu0 0
    %2483 = vmatpush1.bf16.xpose.msra.mxu0 0
    %2484 = vmatprep.subr.bf16.mxu0 0
    %2485 = vmatpush1.bf16.xpose.msra.mxu0 %v2468
    %2486 = vmatprep.subr.bf16.mxu0 0
    %2487 = vmatpush2.bf16.xpose.msra.mxu0 0
    %2488 = vmatprep.subr.bf16.mxu0 0
    %2489 = vmatpush2.bf16.xpose.msra.mxu0 0
    %2490 = vmatprep.subr.bf16.mxu0 0
    %2491 = vmatpush2.bf16.xpose.msra.mxu0 0
    %2492 = vmatprep.subr.bf16.mxu0 0
    %2493 = vmatpush2.bf16.xpose.msra.mxu0 0
    %2494 = vmatprep.subr.bf16.mxu0 0
    %2495 = vmatpush2.bf16.xpose.msra.mxu0 0
    %2496 = vmatprep.subr.bf16.mxu0 0
    %2497 = vmatpush2.bf16.xpose.msra.mxu0 0
    %2498 = vmatprep.subr.bf16.mxu0 0
    %2499 = vmatpush2.bf16.xpose.msra.mxu0 0
    %2500 = vmatprep.subr.bf16.mxu0 0
    %2501 = vmatpush2.bf16.xpose.msra.mxu0 0
    %2502 = vmatprep.mubr.bf16.mxu0 0
    %2503 = vmatmul.mubr.bf16.gmra.mxu0 %v2465
    %v2504 = vpop.f32.mrf.mxu0
    %v2505 = vadd.f32 %v60, %v2504
    %v2506 = vpop.f32.mrf.mxu0
    %v2507 = vpop.f32.mrf.mxu0
    %v2508 = vpop.f32.mrf.mxu0
    %2509 = vdwg.mxu0
    %v2510 = vsel %vm289, %v2455, -inf
    %2511 = vmax.xlane.f32.xlu0 %v2510
    %v2512 = vpop.xlane.xlu0 %2511
    %v2513 = vsel %vm289, %v2505, -inf
    %2514 = vmax.xlane.f32.xlu0 %v2513
    %v2515 = vpop.xlane.xlu0 %2514
    %v2516 = vsub.f32 %v2455, %v2512
    %v2517 = vsub.f32 %v2505, %v2515
    %v2518 = vmul.f32 %v2516, 1.442695
    %v2519 = vpow.pop %v2518
    %v2520 = vmul.f32 %v2517, 1.442695
    %v2521 = vpow.pop %v2520
    %v2522 = vsel %vm289, %v2519, 0.0
    %2523 = vadd.xlane.f32.xlu0 %v2522
    %v2524 = vpop.xlane.xlu0 %2523
    %v2525 = vsel %vm289, %v2521, 0.0
    %2526 = vadd.xlane.f32.xlu0 %v2525
    %v2527 = vpop.xlane.xlu0 %2526
    %v2528 = vrcp.pop %v2524
    %v2529 = vrcp.pop %v2527
    %v2530 = vmul.f32 %v2519, %v2528
    %v2531 = vmul.f32 %v2521, %v2529
    %v2532 = vpack.c.bf16 %v2530, %v2530
    %v2533 = vpack.c.bf16 %v2531, %v2531
    %2534 = vrot.lane.b32.xlu0 %v1616, 104
    %v2535 = vpop.permute.xlu0 %2534
    %v2538 = vsel %vm289, %v2532, 0
    %2540 = vmatprep.subr.bf16.mxu0 0
    %2541 = vmatpush1.bf16.msra.mxu0 0
    %2542 = vmatprep.subr.bf16.mxu0 0
    %2543 = vmatpush1.bf16.msra.mxu0 0
    %2544 = vmatprep.subr.bf16.mxu0 0
    %2545 = vmatpush1.bf16.msra.mxu0 0
    %2546 = vmatprep.subr.bf16.mxu0 0
    %2547 = vmatpush1.bf16.msra.mxu0 0
    %2548 = vmatprep.subr.bf16.mxu0 0
    %2549 = vmatpush1.bf16.msra.mxu0 0
    %2550 = vmatprep.subr.bf16.mxu0 0
    %2551 = vmatpush1.bf16.msra.mxu0 0
    %2552 = vmatprep.subr.bf16.mxu0 0
    %2553 = vmatpush1.bf16.msra.mxu0 0
    %2554 = vmatprep.subr.bf16.mxu0 0
    %2555 = vmatpush1.bf16.msra.mxu0 %v2535
    %2556 = vmatprep.subr.bf16.mxu0 0
    %2557 = vmatpush2.bf16.msra.mxu0 0
    %2558 = vmatprep.subr.bf16.mxu0 0
    %2559 = vmatpush2.bf16.msra.mxu0 0
    %2560 = vmatprep.subr.bf16.mxu0 0
    %2561 = vmatpush2.bf16.msra.mxu0 0
    %2562 = vmatprep.subr.bf16.mxu0 0
    %2563 = vmatpush2.bf16.msra.mxu0 0
    %2564 = vmatprep.subr.bf16.mxu0 0
    %2565 = vmatpush2.bf16.msra.mxu0 0
    %2566 = vmatprep.subr.bf16.mxu0 0
    %2567 = vmatpush2.bf16.msra.mxu0 0
    %2568 = vmatprep.subr.bf16.mxu0 0
    %2569 = vmatpush2.bf16.msra.mxu0 0
    %2570 = vmatprep.subr.bf16.mxu0 0
    %2571 = vmatpush2.bf16.msra.mxu0 0
    %2572 = vmatprep.mubr.bf16.mxu0 0
    %2573 = vmatmul.mubr.bf16.gmra.mxu0 %v2538
    %v2574 = vpop.f32.mrf.mxu0
    %v2575 = vadd.f32 0.0, %v2574
    %v2576 = vpop.f32.mrf.mxu0
    %v2577 = vpop.f32.mrf.mxu0
    %v2578 = vpop.f32.mrf.mxu0
    %2579 = vdwg.mxu0
    %2580 = vrot.lane.b32.xlu0 %v1617, 104
    %v2581 = vpop.permute.xlu0 %2580
    %v2584 = vsel %vm289, %v2533, 0
    %2586 = vmatprep.subr.bf16.mxu0 0
    %2587 = vmatpush1.bf16.msra.mxu0 0
    %2588 = vmatprep.subr.bf16.mxu0 0
    %2589 = vmatpush1.bf16.msra.mxu0 0
    %2590 = vmatprep.subr.bf16.mxu0 0
    %2591 = vmatpush1.bf16.msra.mxu0 0
    %2592 = vmatprep.subr.bf16.mxu0 0
    %2593 = vmatpush1.bf16.msra.mxu0 0
    %2594 = vmatprep.subr.bf16.mxu0 0
    %2595 = vmatpush1.bf16.msra.mxu0 0
    %2596 = vmatprep.subr.bf16.mxu0 0
    %2597 = vmatpush1.bf16.msra.mxu0 0
    %2598 = vmatprep.subr.bf16.mxu0 0
    %2599 = vmatpush1.bf16.msra.mxu0 0
    %2600 = vmatprep.subr.bf16.mxu0 0
    %2601 = vmatpush1.bf16.msra.mxu0 %v2581
    %2602 = vmatprep.subr.bf16.mxu0 0
    %2603 = vmatpush2.bf16.msra.mxu0 0
    %2604 = vmatprep.subr.bf16.mxu0 0
    %2605 = vmatpush2.bf16.msra.mxu0 0
    %2606 = vmatprep.subr.bf16.mxu0 0
    %2607 = vmatpush2.bf16.msra.mxu0 0
    %2608 = vmatprep.subr.bf16.mxu0 0
    %2609 = vmatpush2.bf16.msra.mxu0 0
    %2610 = vmatprep.subr.bf16.mxu0 0
    %2611 = vmatpush2.bf16.msra.mxu0 0
    %2612 = vmatprep.subr.bf16.mxu0 0
    %2613 = vmatpush2.bf16.msra.mxu0 0
    %2614 = vmatprep.subr.bf16.mxu0 0
    %2615 = vmatpush2.bf16.msra.mxu0 0
    %2616 = vmatprep.subr.bf16.mxu0 0
    %2617 = vmatpush2.bf16.msra.mxu0 0
    %2618 = vmatprep.mubr.bf16.mxu0 0
    %2619 = vmatmul.mubr.bf16.gmra.mxu0 %v2584
    %v2620 = vpop.f32.mrf.mxu0
    %v2621 = vadd.f32 0.0, %v2620
    %v2622 = vpop.f32.mrf.mxu0
    %v2623 = vpop.f32.mrf.mxu0
    %v2624 = vpop.f32.mrf.mxu0
    %2625 = vdwg.mxu0
    %v2626 = vpack.c.bf16 %v2621, %v2575
    %s2627 = scalar_lea.vmem %s8, 28
    %v2628 = vld [vmem:[%s2627] sm:$0xf]
    %v2630 = vsel %vm196, %v2626, 0
    %v2633 = vsel %vm630, %v2628, 0
    %2635 = vmatprep.subr.bf16.mxu0 0
    %2636 = vmatpush1.bf16.msra.mxu0 0
    %2637 = vmatprep.subr.bf16.mxu0 0
    %2638 = vmatpush1.bf16.msra.mxu0 0
    %2639 = vmatprep.subr.bf16.mxu0 0
    %2640 = vmatpush1.bf16.msra.mxu0 0
    %2641 = vmatprep.subr.bf16.mxu0 0
    %2642 = vmatpush1.bf16.msra.mxu0 0
    %2643 = vmatprep.subr.bf16.mxu0 0
    %2644 = vmatpush1.bf16.msra.mxu0 0
    %2645 = vmatprep.subr.bf16.mxu0 0
    %2646 = vmatpush1.bf16.msra.mxu0 0
    %2647 = vmatprep.subr.bf16.mxu0 0
    %2648 = vmatpush1.bf16.msra.mxu0 0
    %2649 = vmatprep.subr.bf16.mxu0 0
    %2650 = vmatpush1.bf16.msra.mxu0 %v2633
    %2651 = vmatprep.subr.bf16.mxu0 0
    %2652 = vmatpush2.bf16.msra.mxu0 0
    %2653 = vmatprep.subr.bf16.mxu0 0
    %2654 = vmatpush2.bf16.msra.mxu0 0
    %2655 = vmatprep.subr.bf16.mxu0 0
    %2656 = vmatpush2.bf16.msra.mxu0 0
    %2657 = vmatprep.subr.bf16.mxu0 0
    %2658 = vmatpush2.bf16.msra.mxu0 0
    %2659 = vmatprep.subr.bf16.mxu0 0
    %2660 = vmatpush2.bf16.msra.mxu0 0
    %2661 = vmatprep.subr.bf16.mxu0 0
    %2662 = vmatpush2.bf16.msra.mxu0 0
    %2663 = vmatprep.subr.bf16.mxu0 0
    %2664 = vmatpush2.bf16.msra.mxu0 0
    %2665 = vmatprep.subr.bf16.mxu0 0
    %2666 = vmatpush2.bf16.msra.mxu0 0
    %2667 = vmatprep.mubr.bf16.mxu0 0
    %2668 = vmatmul.mubr.bf16.gmra.mxu0 %v2630
    %v2669 = vpop.f32.mrf.mxu0
    %v2670 = vadd.f32 0.0, %v2669
    %v2671 = vpop.f32.mrf.mxu0
    %v2672 = vpop.f32.mrf.mxu0
    %v2673 = vadd.f32 0.0, %v2672
    %v2674 = vpop.f32.mrf.mxu0
    %2675 = vdwg.mxu0
    %v2676 = vadd.f32 %v2408, %v2670
    %v2677 = vadd.f32 %v2409, %v2673
    %v2678 = vadd.f32 %v1478, %v2676
    %v2679 = vadd.f32 %v1479, %v2677
    %s2680 = scalar_lea.vmem %s9, 1
    %v2681 = vld [vmem:[%s2680] sm:$0x1]
    %v2683 = vlaneseq
    %v2684 = vshrl.u32 %v2683, 7
    %v2685 = vsub.s32 0, %v2684
    %v2686 = vrot.slane %v2681, %v2685
    %v2688 = vadd.f32 %v2678, %v2686
    %v2689 = vadd.f32 %v2679, %v2686
    %v2690 = vsel %vm63, %v2688, 0.0
    %2691 = vadd.xlane.f32.xlu0 %v2690
    %v2692 = vpop.xlane.xlu0 %2691
    %v2693 = vsel %vm63, %v2689, 0.0
    %2694 = vadd.xlane.f32.xlu0 %v2693
    %v2695 = vpop.xlane.xlu0 %2694
    %v2696 = vmul.f32 %v2692, %v70
    %v2697 = vmul.f32 %v2695, %v70
    %v2698 = vsub.f32 %v2688, %v2696
    %v2699 = vsub.f32 %v2689, %v2697
    %v2700 = vmul.f32 %v2698, %v2698
    %v2701 = vmul.f32 %v2699, %v2699
    %v2702 = vsel %vm63, %v2700, 0.0
    %2703 = vadd.xlane.f32.xlu0 %v2702
    %v2704 = vpop.xlane.xlu0 %2703
    %v2705 = vsel %vm63, %v2701, 0.0
    %2706 = vadd.xlane.f32.xlu0 %v2705
    %v2707 = vpop.xlane.xlu0 %2706
    %v2708 = vmul.f32 %v2704, %v70
    %v2709 = vmul.f32 %v2707, %v70
    %v2710 = vadd.f32 %v2708, 1e-05
    %v2711 = vadd.f32 %v2709, 1e-05
    %v2712 = vrsqrt.pop %v2710
    %v2713 = vrsqrt.pop %v2711
    %v2714 = vmul.f32 %v2698, %v2712
    %v2715 = vmul.f32 %v2699, %v2713
    %v2716 = vlaneseq
    %v2717 = vshrl.u32 %v2716, 7
    %v2718 = vsub.s32 1, %v2717
    %v2719 = vrot.slane %v1481, %v2718
    %v2720 = vmul.f32 %v2714, %v2719
    %v2721 = vmul.f32 %v2715, %v2719
    %v2722 = vlaneseq
    %v2723 = vshrl.u32 %v2722, 7
    %v2724 = vsub.s32 1, %v2723
    %v2725 = vrot.slane %v1483, %v2724
    %v2726 = vadd.f32 %v2720, %v2725
    %v2727 = vadd.f32 %v2721, %v2725
    %v2728 = vpack.c.bf16 %v2727, %v2726
    %s2729 = scalar_lea.vmem %s10, 16
    %v2730 = vld [vmem:[%s2729] sm:$0xf]
    %v2731 = vld [vmem:[%s2729 + $0x4] sm:$0xf]
    %v2732 = vld [vmem:[%s2729 + $0x8] sm:$0xf]
    %v2733 = vld [vmem:[%s2729 + $0xc] sm:$0xf]
    %s2734 = scalar_lea.vmem %s11, 1
    %v2735 = vld [vmem:[%s2734] sm:$0x1]
    %v2737 = vlaneseq
    %v2738 = vshrl.u32 %v2737, 7
    %v2739 = vsub.s32 0, %v2738
    %v2740 = vrot.slane %v2735, %v2739
    %v2746 = vunpack.c.l.b16 %v2730
    %v2747 = vunpack.c.l.b16 %v2731
    %v2748 = vunpack.c.l.b16 %v2732
    %v2749 = vunpack.c.l.b16 %v2733
    %v2750 = vpack.c.b16 %v2747, %v2746
    %v2751 = vpack.c.b16 %v2749, %v2748
    %v2755 = vsel %vm63, %v2728, 0
    %2757 = vmatprep.subr.bf16.mxu0 0
    %2758 = vmatpush1.bf16.msra.mxu0 0
    %2759 = vmatprep.subr.bf16.mxu0 0
    %2760 = vmatpush1.bf16.msra.mxu0 0
    %2761 = vmatprep.subr.bf16.mxu0 0
    %2762 = vmatpush1.bf16.msra.mxu0 0
    %2763 = vmatprep.subr.bf16.mxu0 0
    %2764 = vmatpush1.bf16.msra.mxu0 0
    %2765 = vmatprep.subr.bf16.mxu0 0
    %2766 = vmatpush1.bf16.msra.mxu0 0
    %2767 = vmatprep.subr.bf16.mxu0 0
    %2768 = vmatpush1.bf16.msra.mxu0 0
    %2769 = vmatprep.subr.bf16.mxu0 0
    %2770 = vmatpush1.bf16.msra.mxu0 %v2751
    %2771 = vmatprep.subr.bf16.mxu0 0
    %2772 = vmatpush1.bf16.msra.mxu0 %v2750
    %2773 = vmatprep.subr.bf16.mxu0 0
    %2774 = vmatpush2.bf16.msra.mxu0 0
    %2775 = vmatprep.subr.bf16.mxu0 0
    %2776 = vmatpush2.bf16.msra.mxu0 0
    %2777 = vmatprep.subr.bf16.mxu0 0
    %2778 = vmatpush2.bf16.msra.mxu0 0
    %2779 = vmatprep.subr.bf16.mxu0 0
    %2780 = vmatpush2.bf16.msra.mxu0 0
    %2781 = vmatprep.subr.bf16.mxu0 0
    %2782 = vmatpush2.bf16.msra.mxu0 0
    %2783 = vmatprep.subr.bf16.mxu0 0
    %2784 = vmatpush2.bf16.msra.mxu0 0
    %2785 = vmatprep.subr.bf16.mxu0 0
    %2786 = vmatpush2.bf16.msra.mxu0 0
    %2787 = vmatprep.subr.bf16.mxu0 0
    %2788 = vmatpush2.bf16.msra.mxu0 0
    %2789 = vmatprep.mubr.bf16.mxu0 0
    %2790 = vmatmul.mubr.bf16.gmra.mxu0 %v2755
    %v2791 = vpop.f32.mrf.mxu0
    %v2792 = vadd.f32 %v2740, %v2791
    %v2793 = vpop.f32.mrf.mxu0
    %v2794 = vpop.f32.mrf.mxu0
    %v2795 = vadd.f32 %v2740, %v2794
    %v2796 = vpop.f32.mrf.mxu0
    %2797 = vdwg.mxu0
    %v2798 = vmul.f32 %v2792, %v2792
    %v2799 = vmul.f32 %v2795, %v2795
    %v2800 = vmul.f32 %v2792, %v2798
    %v2801 = vmul.f32 %v2795, %v2799
    %v2802 = vmul.f32 %v2800, 0.044715
    %v2803 = vmul.f32 %v2801, 0.044715
    %v2804 = vadd.f32 %v2792, %v2802
    %v2805 = vadd.f32 %v2795, %v2803
    %v2806 = vmul.f32 %v2804, 0.7978846
    %v2807 = vmul.f32 %v2805, 0.7978846
    %v2808 = vtanh.pop %v2806
    %v2809 = vtanh.pop %v2807
    %v2810 = vadd.f32 %v2808, 1.0
    %v2811 = vadd.f32 %v2809, 1.0
    %v2812 = vmul.f32 %v2810, 0.5
    %v2813 = vmul.f32 %v2811, 0.5
    %v2814 = vmul.f32 %v2792, %v2812
    %v2815 = vmul.f32 %v2795, %v2813
    %v2816 = vpack.c.bf16 %v2815, %v2814
    %s2817 = scalar_lea.vmem %s12, 32
    %v2818 = vld [vmem:[%s2817] sm:$0xf]
    %v2819 = vld [vmem:[%s2817 + $0x4] sm:$0xf]
    %v2820 = vld [vmem:[%s2817 + $0x8] sm:$0xf]
    %v2821 = vld [vmem:[%s2817 + $0xc] sm:$0xf]
    %v2822 = vld [vmem:[%s2817 + $0x10] sm:$0xf]
    %v2823 = vld [vmem:[%s2817 + $0x14] sm:$0xf]
    %v2824 = vld [vmem:[%s2817 + $0x18] sm:$0xf]
    %v2825 = vld [vmem:[%s2817 + $0x1c] sm:$0xf]
    %s2826 = scalar_lea.vmem %s13, 1
    %v2827 = vld [vmem:[%s2826] sm:$0x1]
    %v2829 = vlaneseq
    %v2830 = vshrl.u32 %v2829, 7
    %v2831 = vsub.s32 0, %v2830
    %v2832 = vrot.slane %v2827, %v2831
    %v2842 = vunpack.c.l.b16 %v2818
    %v2843 = vunpack.c.l.b16 %v2819
    %v2844 = vunpack.c.l.b16 %v2820
    %v2845 = vunpack.c.l.b16 %v2821
    %v2846 = vunpack.c.l.b16 %v2822
    %v2847 = vunpack.c.l.b16 %v2823
    %v2848 = vunpack.c.l.b16 %v2824
    %v2849 = vunpack.c.l.b16 %v2825
    %v2850 = vpack.c.b16 %v2843, %v2842
    %v2851 = vpack.c.b16 %v2845, %v2844
    %v2852 = vpack.c.b16 %v2847, %v2846
    %v2853 = vpack.c.b16 %v2849, %v2848
    %v2859 = vsel %vm1433, %v2816, 0
    %2861 = vmatprep.subr.bf16.mxu0 0
    %2862 = vmatpush1.bf16.msra.mxu0 0
    %2863 = vmatprep.subr.bf16.mxu0 0
    %2864 = vmatpush1.bf16.msra.mxu0 0
    %2865 = vmatprep.subr.bf16.mxu0 0
    %2866 = vmatpush1.bf16.msra.mxu0 0
    %2867 = vmatprep.subr.bf16.mxu0 0
    %2868 = vmatpush1.bf16.msra.mxu0 0
    %2869 = vmatprep.subr.bf16.mxu0 0
    %2870 = vmatpush1.bf16.msra.mxu0 %v2853
    %2871 = vmatprep.subr.bf16.mxu0 0
    %2872 = vmatpush1.bf16.msra.mxu0 %v2852
    %2873 = vmatprep.subr.bf16.mxu0 0
    %2874 = vmatpush1.bf16.msra.mxu0 %v2851
    %2875 = vmatprep.subr.bf16.mxu0 0
    %2876 = vmatpush1.bf16.msra.mxu0 %v2850
    %2877 = vmatprep.subr.bf16.mxu0 0
    %2878 = vmatpush2.bf16.msra.mxu0 0
    %2879 = vmatprep.subr.bf16.mxu0 0
    %2880 = vmatpush2.bf16.msra.mxu0 0
    %2881 = vmatprep.subr.bf16.mxu0 0
    %2882 = vmatpush2.bf16.msra.mxu0 0
    %2883 = vmatprep.subr.bf16.mxu0 0
    %2884 = vmatpush2.bf16.msra.mxu0 0
    %2885 = vmatprep.subr.bf16.mxu0 0
    %2886 = vmatpush2.bf16.msra.mxu0 0
    %2887 = vmatprep.subr.bf16.mxu0 0
    %2888 = vmatpush2.bf16.msra.mxu0 0
    %2889 = vmatprep.subr.bf16.mxu0 0
    %2890 = vmatpush2.bf16.msra.mxu0 0
    %2891 = vmatprep.subr.bf16.mxu0 0
    %2892 = vmatpush2.bf16.msra.mxu0 0
    %2893 = vmatprep.mubr.bf16.mxu0 0
    %2894 = vmatmul.mubr.bf16.gmra.mxu0 %v2859
    %v2895 = vpop.f32.mrf.mxu0
    %v2896 = vadd.f32 %v2832, %v2895
    %v2897 = vpop.f32.mrf.mxu0
    %v2898 = vpop.f32.mrf.mxu0
    %v2899 = vadd.f32 %v2832, %v2898
    %v2900 = vpop.f32.mrf.mxu0
    %2901 = vdwg.mxu0
    %v2902 = vadd.f32 %v2688, %v2896
    %v2903 = vadd.f32 %v2689, %v2899
    %v2904 = vld [vmem:[%s14] sm:$0x1]
    %v2905 = vld [vmem:[%s15] sm:$0x1]
    %v2906 = vsel %vm63, %v2902, 0.0
    %2907 = vadd.xlane.f32.xlu0 %v2906
    %v2908 = vpop.xlane.xlu0 %2907
    %v2909 = vsel %vm63, %v2903, 0.0
    %2910 = vadd.xlane.f32.xlu0 %v2909
    %v2911 = vpop.xlane.xlu0 %2910
    %v2912 = vmul.f32 %v2908, %v70
    %v2913 = vmul.f32 %v2911, %v70
    %v2914 = vsub.f32 %v2902, %v2912
    %v2915 = vsub.f32 %v2903, %v2913
    %v2916 = vmul.f32 %v2914, %v2914
    %v2917 = vmul.f32 %v2915, %v2915
    %v2918 = vsel %vm63, %v2916, 0.0
    %2919 = vadd.xlane.f32.xlu0 %v2918
    %v2920 = vpop.xlane.xlu0 %2919
    %v2921 = vsel %vm63, %v2917, 0.0
    %2922 = vadd.xlane.f32.xlu0 %v2921
    %v2923 = vpop.xlane.xlu0 %2922
    %v2924 = vmul.f32 %v2920, %v70
    %v2925 = vmul.f32 %v2923, %v70
    %v2926 = vadd.f32 %v2924, 1e-05
    %v2927 = vadd.f32 %v2925, 1e-05
    %v2928 = vrsqrt.pop %v2926
    %v2929 = vrsqrt.pop %v2927
    %v2930 = vmul.f32 %v2914, %v2928
    %v2931 = vmul.f32 %v2915, %v2929
    %v2933 = vlaneseq
    %v2934 = vshrl.u32 %v2933, 7
    %v2935 = vsub.s32 0, %v2934
    %v2936 = vrot.slane %v2904, %v2935
    %v2938 = vmul.f32 %v2930, %v2936
    %v2939 = vmul.f32 %v2931, %v2936
    %v2941 = vlaneseq
    %v2942 = vshrl.u32 %v2941, 7
    %v2943 = vsub.s32 0, %v2942
    %v2944 = vrot.slane %v2905, %v2943
    %v2946 = vadd.f32 %v2938, %v2944
    %v2947 = vadd.f32 %v2939, %v2944
    %2948 = vst.msk [vmem:[#allocation2] sm:$0xff] %vm63, %v2946
    %2949 = vst.msk [vmem:[#allocation2 + $0x8] sm:$0xff] %vm63, %v2947
    %v2950 = vld [vmem:[%s2] sm:$0xff]
    %v2951 = vld [vmem:[%s2 + $0x8] sm:$0xff]
    %2953 = vset.pattern.permute.xlu0 0
    %2954 = vperm.xlu0 %2953, %v2950
    %v2955 = vpop.permute.xlu0 %2954
    %v2957 = vmul.f32 %v2946, %v2955
    %v2958 = vsel %vm63, %v2957, 0.0
    %v2959 = vrot.slane %v2958, 4
    %v2960 = vadd.f32 %v2958, %v2959
    %v2961 = vrot.slane %v2960, 2
    %v2962 = vadd.f32 %v2960, %v2961
    %v2963 = vrot.slane %v2962, 1
    %v2964 = vadd.f32 %v2962, %v2963
    %vm2965 = vcmask 7168
    %v2966 = vsel %vm2965, %v2950, 0.0
    %v2967 = vrot.slane %v2966, 4
    %v2968 = vadd.f32 %v2966, %v2967
    %v2969 = vrot.slane %v2968, 2
    %v2970 = vadd.f32 %v2968, %v2969
    %v2971 = vrot.slane %v2970, 1
    %v2972 = vadd.f32 %v2970, %v2971
    %v2973 = vmax.f32 %v2972, 1.0
    %v2974 = vrcp.pop %v2973
    %2976 = vset.pattern.permute.xlu0 0
    %2977 = vperm.xlu0 %2976, %v2974
    %v2978 = vpop.permute.xlu0 %2977
    %v2980 = vmul.f32 %v2964, %v2978
    %2982 = vset.pattern.permute.xlu0 0
    %2983 = vperm.xlu0 %2982, %v2951
    %v2984 = vpop.permute.xlu0 %2983
    %v2986 = vmul.f32 %v2947, %v2984
    %v2987 = vsel %vm63, %v2986, 0.0
    %v2988 = vrot.slane %v2987, 4
    %v2989 = vadd.f32 %v2987, %v2988
    %v2990 = vrot.slane %v2989, 2
    %v2991 = vadd.f32 %v2989, %v2990
    %v2992 = vrot.slane %v2991, 1
    %v2993 = vadd.f32 %v2991, %v2992
    %v2994 = vsel %vm2965, %v2951, 0.0
    %v2995 = vrot.slane %v2994, 4
    %v2996 = vadd.f32 %v2994, %v2995
    %v2997 = vrot.slane %v2996, 2
    %v2998 = vadd.f32 %v2996, %v2997
    %v2999 = vrot.slane %v2998, 1
    %v3000 = vadd.f32 %v2998, %v2999
    %v3001 = vmax.f32 %v3000, 1.0
    %v3002 = vrcp.pop %v3001
    %3004 = vset.pattern.permute.xlu0 0
    %3005 = vperm.xlu0 %3004, %v3002
    %v3006 = vpop.permute.xlu0 %3005
    %v3008 = vmul.f32 %v2993, %v3006
    %3010 = vrot.lane.b32.xlu0 %v3008, 32
    %v3011 = vpop.permute.xlu0 %3010
    %v3013 = vsel %vm63, %v2980, %v3011
    %vm3014 = vcmask 516096
    %3015 = vst.msk [vmem:[%s17] sm:$0x1] %vm3014, %v3013
    // Predicated region
    $region66: #{biogpt_forward.1} parent=1 // pred_check
      _
    $region67: #{biogpt_forward.1} parent=1 // pred_check_branch
      %3017 = sbr.rel (0) target = $region69
    $region68: #{biogpt_forward.1} parent=1 // pred_region
      %s3019 = ssub.s32 256, 256
      %3020 = vsyncadd [#allocation3], %s3019
      %s3021 = sshll.u32 [#allocation2], 4
      %s3022 = int_to_ptr.vmem [resolvable:$true] %s3021
      %3027 = dma.vmem_to_hbm [thread:$0]  %s3022, 256, %s16, [#allocation3], 128, 128, 8
    $region69: #{biogpt_forward.1} parent=1 // pred_fallthru
      _
    // Predicated region
    $region70: #{biogpt_forward.1} parent=1 // pred_check
      _
    $region71: #{biogpt_forward.1} parent=1 // pred_check_branch
      %3029 = sbr.rel (0) target = $region73
    $region72: #{biogpt_forward.1} parent=1 // pred_region
      _
    $region73: #{biogpt_forward.1} parent=1 // pred_fallthru
      _
    // Predicated region
    $region74: #{biogpt_forward.1} parent=1 // pred_check
      _
    $region75: #{biogpt_forward.1} parent=1 // pred_check_branch
      %3031 = sbr.rel (0) target = $region77
    $region76: #{biogpt_forward.1} parent=1 // pred_region
      %3032 = dma.done [#allocation3], 256
    $region77: #{biogpt_forward.1} parent=1 // pred_fallthru
      _
    // Predicated region
    $region78: #{biogpt_forward.1} parent=1 // pred_check
      _
    $region79: #{biogpt_forward.1} parent=1 // pred_check_branch
      %3034 = sbr.rel (0) target = $region81
    $region80: #{biogpt_forward.1} parent=1 // pred_region
      _
    $region81: #{biogpt_forward.1} parent=1 // pred_fallthru
      _
    %3035 = vsyncpa [#allocation3], 1

</llo_original>
